<compile_context>
chip_gen: v7x
topology: tpu7x:2x2x1
jax: 0.10.0
libtpu: 0.0.40
codegen_flags: <defaults>
</compile_context>

<pallas_src>
import jax
import jax.numpy as jnp
import numpy as np
from jax.experimental import pallas as pl
from jax.experimental.pallas import tpu as pltpu


# ----------------------------------------------------------------------------
# In-kernel helper: batched 3x3 VALID conv + bias + ReLU as ONE MXU matmul
# (bf16 operands, f32 accumulation).
# ----------------------------------------------------------------------------
def _conv3x3_relu_im2col(x_bhwc, w_kc, b_1c):
    """x_bhwc: (B, H, W, C); w_kc: (9*C, Cout) bf16; b_1c: (1, Cout) f32.

    Returns (B, H-2, W-2, Cout) f32 after bias + ReLU.
    """
    bt, h, w, c = x_bhwc.shape
    ho, wo = h - 2, w - 2
    cout = w_kc.shape[-1]
    x_bf = x_bhwc.astype(jnp.bfloat16)
    # im2col: 9 shifted views concatenated along the channel (lane) axis and
    # collapsed into a (B*Ho*Wo, 9*C) slab -> one large MXU matmul.
    # Tap order (ky outer, kx inner, then C) matches the HWIO->(9C,Cout)
    # weight reshape done once in the wrapper.
    cols = [x_bf[:, ky:ky + ho, kx:kx + wo, :]
            for ky in range(3) for kx in range(3)]
    slab = jnp.concatenate(cols, axis=-1).reshape(bt * ho * wo, 9 * c)
    y = jnp.dot(slab, w_kc, preferred_element_type=jnp.float32)
    y = jnp.maximum(y + b_1c, 0.0)                      # bias + ReLU in f32
    return y.reshape(bt, ho, wo, cout)


# ----------------------------------------------------------------------------
# Fused kernel: conv1 + ReLU -> conv2 + ReLU -> 2x2/2 max-pool
# (B_TILE images per grid step)
# ----------------------------------------------------------------------------
def _contracting_block_kernel(x_ref, w1_ref, b1_ref, w2_ref, b2_ref, o_ref):
    # x_ref : (B_TILE, H, W, Cin)     bf16
    # w1_ref: (9*Cin,  Cout)          bf16   (pre-reshaped in the wrapper)
    # b1_ref: (1, Cout)               f32
    # w2_ref: (9*Cout, Cout)          bf16
    # b2_ref: (1, Cout)               f32
    # o_ref : (B_TILE, Hp, Wp*Cout)   f32    (lane-dense; unflattened outside)
    bt, hp, wpc = o_ref.shape
    cout = w1_ref.shape[-1]
    wp = wpc // cout

    a1 = _conv3x3_relu_im2col(x_ref[...], w1_ref[...], b1_ref[...])
    a2 = _conv3x3_relu_im2col(a1, w2_ref[...], b2_ref[...])

    # 2x2 / stride-2 max-pool (crop first for nn.MaxPool2d floor semantics),
    # then store as (B_TILE, Hp, Wp*Cout) so every write is lane-dense.
    a2 = a2[:, :2 * hp, :2 * wp, :]
    pooled = jnp.max(a2.reshape(bt, hp, 2, wp, 2, cout), axis=(2, 4))
    o_ref[...] = pooled.reshape(bt, hp, wp * cout).astype(o_ref.dtype)


def _pick_batch_tile(n, rows_per_image, target_rows=256):
    """Images per grid step: keep >=2 grid steps when n >= 2 (so the parallel
    batch axis can be split across v7x's two TensorCores) while giving each
    step enough im2col rows to fill the MXU M dimension when n permits."""
    if n <= 1:
        return max(n, 1)
    best = 1
    for d in range(1, n + 1):
        if n % d == 0 and n // d >= 2:
            best = d
            if d * rows_per_image >= target_rows:
                break
    return best


def contracting_block_nhwc(x_nhwc, w1_hwio, b1, w2_hwio, b2):
    n, h, w, cin = x_nhwc.shape
    cout = w1_hwio.shape[-1]
    ho, wo = h - 2, w - 2            # after conv1
    h2, w2o = h - 4, w - 4           # after conv2
    hp, wp = h2 // 2, w2o // 2       # after 2x2/2 max-pool

    # Hoisted, once-per-call layout & dtype work: bf16 MXU operands.
    x_bf = x_nhwc.astype(jnp.bfloat16)
    w1_r = w1_hwio.reshape(9 * cin, cout).astype(jnp.bfloat16)
    w2_r = w2_hwio.reshape(9 * cout, cout).astype(jnp.bfloat16)
    b1_r = b1.reshape(1, cout).astype(jnp.float32)
    b2_r = b2.reshape(1, cout).astype(jnp.float32)

    b_tile = _pick_batch_tile(n, ho * wo)
    grid = (n // b_tile,)

    flops = int(2 * n * (ho * wo * 9 * cin * cout
                         + h2 * w2o * 9 * cout * cout))
    bytes_accessed = int(2 * (x_bf.size + w1_r.size + w2_r.size)
                         + 4 * (b1_r.size + b2_r.size + n * hp * wp * cout))

    # VMEM working-set estimate (double-buffered blocks + im2col slabs + f32
    # intermediates).  Only raise the scoped limit above the conservative
    # default (16 MiB on v5e) when it is actually needed.
    slab_bytes = b_tile * (ho * wo * (9 * cin * 2 + cout * 4)
                           + h2 * w2o * (9 * cout * 2 + cout * 4))
    block_bytes = 2 * (b_tile * h * w * cin * 2
                       + b_tile * hp * wp * cout * 4
                       + (9 * cin + 9 * cout + 2) * cout * 4)
    vmem_est = 2 * slab_bytes + block_bytes + (1 << 20)
    cp_kwargs = {}
    if vmem_est > (16 << 20):
        cp_kwargs["vmem_limit_bytes"] = int(min(vmem_est, 96 << 20))

    out_flat = pl.pallas_call(
        _contracting_block_kernel,
        out_shape=jax.ShapeDtypeStruct((n, hp, wp * cout), jnp.float32),
        grid=grid,
        in_specs=[
            pl.BlockSpec((b_tile, h, w, cin), lambda i: (i, 0, 0, 0)),
            pl.BlockSpec((9 * cin, cout), lambda i: (0, 0)),
            pl.BlockSpec((1, cout), lambda i: (0, 0)),
            pl.BlockSpec((9 * cout, cout), lambda i: (0, 0)),
            pl.BlockSpec((1, cout), lambda i: (0, 0)),
        ],
        out_specs=pl.BlockSpec((b_tile, hp, wp * cout), lambda i: (i, 0, 0)),
        compiler_params=pltpu.CompilerParams(
            dimension_semantics=("parallel",), **cp_kwargs),
        cost_estimate=pl.CostEstimate(
            flops=flops, transcendentals=0, bytes_accessed=bytes_accessed),
    )(x_bf, w1_r, b1_r, w2_r, b2_r)

    return out_flat.reshape(n, hp, wp, cout)


# ----------------------------------------------------------------------------
# ContractingBlock forward (PyTorch-facing wrapper: NCHW in / NCHW out)
# ----------------------------------------------------------------------------
def init_params(key, in_channels):
    """Deterministic synthetic parameters. Weight layout: HWIO (kh, kw, Cin, Cout)."""
    out_channels = 2 * in_channels
    k1, k2, k3, k4 = jax.random.split(key, 4)
    w1 = 0.1 * jax.random.normal(k1, (3, 3, in_channels, out_channels), jnp.float32)
    b1 = 0.1 * jax.random.normal(k2, (out_channels,), jnp.float32)
    w2 = 0.1 * jax.random.normal(k3, (3, 3, out_channels, out_channels), jnp.float32)
    b2 = 0.1 * jax.random.normal(k4, (out_channels,), jnp.float32)
    return w1, b1, w2, b2


@jax.jit
def contracting_block(x_nchw, w1, b1, w2, b2):
    # Boundary-only layout conversion (in a full UNet keep everything NHWC).
    x = jnp.transpose(x_nchw, (0, 2, 3, 1))            # NCHW -> NHWC
    y = contracting_block_nhwc(x, w1, b1, w2, b2)      # fused conv/conv/pool
    return jnp.transpose(y, (0, 3, 1, 2))              # NHWC -> NCHW


# Pure-JAX reference (semantics check only).
def contracting_block_ref(x_nchw, w1, b1, w2, b2):
    x = jnp.transpose(x_nchw, (0, 2, 3, 1))

    def conv(x, w, b):
        y = jax.lax.conv_general_dilated(
            x, w, window_strides=(1, 1), padding="VALID",
            dimension_numbers=("NHWC", "HWIO", "NHWC"),
            precision=jax.lax.Precision.HIGHEST)
        return jax.nn.relu(y + b)

    x = conv(x, w1, b1)
    x = conv(x, w2, b2)
    x = jax.lax.reduce_window(x, -jnp.inf, jax.lax.max,
                              (1, 2, 2, 1), (1, 2, 2, 1), "VALID")
    return jnp.transpose(x, (0, 3, 1, 2))


if __name__ == "__main__":
    key = jax.random.PRNGKey(0)
    k_x, k_p = jax.random.split(key)

    batch, in_channels, spatial = 2, 4, 16
    x = jax.random.normal(k_x, (batch, in_channels, spatial, spatial), jnp.float32)
    w1, b1, w2, b2 = init_params(k_p, in_channels)

    out = jax.block_until_ready(contracting_block(x, w1, b1, w2, b2))

    # Shape check: (2,4,16,16) -> conv -> (2,8,14,14) -> conv -> (2,8,12,12)
    #              -> pool -> (2,8,6,6)
    assert out.shape == (batch, 2 * in_channels, 6, 6), out.shape
    assert out.dtype == jnp.float32

    ref = jax.block_until_ready(contracting_block_ref(x, w1, b1, w2, b2))
    # Tolerance covers bf16-operand MXU rounding (f32 accumulation).
    np.testing.assert_allclose(np.asarray(out), np.asarray(ref),
                               atol=2e-2, rtol=2e-2)

    print("KERNEL_OK")
</pallas_src>

<mosaic_0001>
module attributes {stable_mosaic.version = 11 : i64} {
  func.func @_contracting_block_kernel(%arg0: i32, %arg1: memref<1x16x16x4xbf16, #tpu.memory_space<vmem>>, %arg2: memref<36x8xbf16, #tpu.memory_space<vmem>>, %arg3: memref<1x8xf32, #tpu.memory_space<vmem>>, %arg4: memref<72x8xbf16, #tpu.memory_space<vmem>>, %arg5: memref<1x8xf32, #tpu.memory_space<vmem>>, %arg6: memref<1x6x48xf32, #tpu.memory_space<vmem>>) attributes {dimension_semantics = [#tpu.dimension_semantics<parallel>], iteration_bounds = array<i64: 2>, scalar_prefetch = 0 : i64, scratch_operands = 0 : i64, tpu.core_type = #tpu.core_type<tc>, window_params = [{transform_indices = @transform_0, window_bounds = array<i64: 1, 16, 16, 4>}, {pipeline_mode = #tpu.pipeline_mode<synchronous>, transform_indices = @transform_1, window_bounds = array<i64: 36, 8>}, {pipeline_mode = #tpu.pipeline_mode<synchronous>, transform_indices = @transform_2, window_bounds = array<i64: 1, 8>}, {pipeline_mode = #tpu.pipeline_mode<synchronous>, transform_indices = @transform_3, window_bounds = array<i64: 72, 8>}, {pipeline_mode = #tpu.pipeline_mode<synchronous>, transform_indices = @transform_4, window_bounds = array<i64: 1, 8>}, {transform_indices = @transform_5, window_bounds = array<i64: 1, 6, 48>}]} {
    %c0 = arith.constant 0 : index
    %c0_0 = arith.constant 0 : index
    %c0_1 = arith.constant 0 : index
    %c0_2 = arith.constant 0 : index
    %0 = vector.load %arg1[%c0, %c0_0, %c0_1, %c0_2] : memref<1x16x16x4xbf16, #tpu.memory_space<vmem>>, vector<1x16x16x4xbf16>
    %c0_3 = arith.constant 0 : index
    %c0_4 = arith.constant 0 : index
    %1 = vector.load %arg2[%c0_3, %c0_4] : memref<36x8xbf16, #tpu.memory_space<vmem>>, vector<36x8xbf16>
    %c0_5 = arith.constant 0 : index
    %c0_6 = arith.constant 0 : index
    %2 = vector.load %arg3[%c0_5, %c0_6] : memref<1x8xf32, #tpu.memory_space<vmem>>, vector<1x8xf32>
    %3 = vector.extract_strided_slice %0 {offsets = [0, 0, 0, 0], sizes = [1, 14, 14, 4], strides = [1, 1, 1, 1]} : vector<1x16x16x4xbf16> to vector<1x14x14x4xbf16>
    %4 = vector.extract_strided_slice %0 {offsets = [0, 0, 1, 0], sizes = [1, 14, 14, 4], strides = [1, 1, 1, 1]} : vector<1x16x16x4xbf16> to vector<1x14x14x4xbf16>
    %5 = vector.extract_strided_slice %0 {offsets = [0, 0, 2, 0], sizes = [1, 14, 14, 4], strides = [1, 1, 1, 1]} : vector<1x16x16x4xbf16> to vector<1x14x14x4xbf16>
    %6 = vector.extract_strided_slice %0 {offsets = [0, 1, 0, 0], sizes = [1, 14, 14, 4], strides = [1, 1, 1, 1]} : vector<1x16x16x4xbf16> to vector<1x14x14x4xbf16>
    %7 = vector.extract_strided_slice %0 {offsets = [0, 1, 1, 0], sizes = [1, 14, 14, 4], strides = [1, 1, 1, 1]} : vector<1x16x16x4xbf16> to vector<1x14x14x4xbf16>
    %8 = vector.extract_strided_slice %0 {offsets = [0, 1, 2, 0], sizes = [1, 14, 14, 4], strides = [1, 1, 1, 1]} : vector<1x16x16x4xbf16> to vector<1x14x14x4xbf16>
    %9 = vector.extract_strided_slice %0 {offsets = [0, 2, 0, 0], sizes = [1, 14, 14, 4], strides = [1, 1, 1, 1]} : vector<1x16x16x4xbf16> to vector<1x14x14x4xbf16>
    %10 = vector.extract_strided_slice %0 {offsets = [0, 2, 1, 0], sizes = [1, 14, 14, 4], strides = [1, 1, 1, 1]} : vector<1x16x16x4xbf16> to vector<1x14x14x4xbf16>
    %11 = vector.extract_strided_slice %0 {offsets = [0, 2, 2, 0], sizes = [1, 14, 14, 4], strides = [1, 1, 1, 1]} : vector<1x16x16x4xbf16> to vector<1x14x14x4xbf16>
    %12 = tpu.concatenate %3, %4, %5, %6, %7, %8, %9, %10, %11 in 3 : vector<1x14x14x4xbf16>, vector<1x14x14x4xbf16>, vector<1x14x14x4xbf16>, vector<1x14x14x4xbf16>, vector<1x14x14x4xbf16>, vector<1x14x14x4xbf16>, vector<1x14x14x4xbf16>, vector<1x14x14x4xbf16>, vector<1x14x14x4xbf16> -> vector<1x14x14x36xbf16>
    %13 = vector.shape_cast %12 : vector<1x14x14x36xbf16> to vector<196x36xbf16>
    %cst = arith.constant dense<0.000000e+00> : vector<196x8xf32>
    %14 = tpu.matmul %13, %1, %cst {dimension_numbers = #tpu.dot_dimension_numbers<[1], [0], [0], [1], [0, 0, 1, 1], [], []>} : vector<196x36xbf16>, vector<36x8xbf16>, vector<196x8xf32> -> vector<196x8xf32>
    %15 = vector.broadcast %2 : vector<1x8xf32> to vector<196x8xf32>
    %16 = arith.addf %14, %15 : vector<196x8xf32>
    %cst_7 = arith.constant 0.000000e+00 : f32
    %17 = vector.broadcast %cst_7 : f32 to vector<196x8xf32>
    %18 = arith.maximumf %16, %17 : vector<196x8xf32>
    %19 = vector.shape_cast %18 : vector<196x8xf32> to vector<1x14x14x8xf32>
    %c0_8 = arith.constant 0 : index
    %c0_9 = arith.constant 0 : index
    %20 = vector.load %arg4[%c0_8, %c0_9] : memref<72x8xbf16, #tpu.memory_space<vmem>>, vector<72x8xbf16>
    %c0_10 = arith.constant 0 : index
    %c0_11 = arith.constant 0 : index
    %21 = vector.load %arg5[%c0_10, %c0_11] : memref<1x8xf32, #tpu.memory_space<vmem>>, vector<1x8xf32>
    %22 = arith.truncf %19 : vector<1x14x14x8xf32> to vector<1x14x14x8xbf16>
    %23 = vector.extract_strided_slice %22 {offsets = [0, 0, 0, 0], sizes = [1, 12, 12, 8], strides = [1, 1, 1, 1]} : vector<1x14x14x8xbf16> to vector<1x12x12x8xbf16>
    %24 = vector.extract_strided_slice %22 {offsets = [0, 0, 1, 0], sizes = [1, 12, 12, 8], strides = [1, 1, 1, 1]} : vector<1x14x14x8xbf16> to vector<1x12x12x8xbf16>
    %25 = vector.extract_strided_slice %22 {offsets = [0, 0, 2, 0], sizes = [1, 12, 12, 8], strides = [1, 1, 1, 1]} : vector<1x14x14x8xbf16> to vector<1x12x12x8xbf16>
    %26 = vector.extract_strided_slice %22 {offsets = [0, 1, 0, 0], sizes = [1, 12, 12, 8], strides = [1, 1, 1, 1]} : vector<1x14x14x8xbf16> to vector<1x12x12x8xbf16>
    %27 = vector.extract_strided_slice %22 {offsets = [0, 1, 1, 0], sizes = [1, 12, 12, 8], strides = [1, 1, 1, 1]} : vector<1x14x14x8xbf16> to vector<1x12x12x8xbf16>
    %28 = vector.extract_strided_slice %22 {offsets = [0, 1, 2, 0], sizes = [1, 12, 12, 8], strides = [1, 1, 1, 1]} : vector<1x14x14x8xbf16> to vector<1x12x12x8xbf16>
    %29 = vector.extract_strided_slice %22 {offsets = [0, 2, 0, 0], sizes = [1, 12, 12, 8], strides = [1, 1, 1, 1]} : vector<1x14x14x8xbf16> to vector<1x12x12x8xbf16>
    %30 = vector.extract_strided_slice %22 {offsets = [0, 2, 1, 0], sizes = [1, 12, 12, 8], strides = [1, 1, 1, 1]} : vector<1x14x14x8xbf16> to vector<1x12x12x8xbf16>
    %31 = vector.extract_strided_slice %22 {offsets = [0, 2, 2, 0], sizes = [1, 12, 12, 8], strides = [1, 1, 1, 1]} : vector<1x14x14x8xbf16> to vector<1x12x12x8xbf16>
    %32 = tpu.concatenate %23, %24, %25, %26, %27, %28, %29, %30, %31 in 3 : vector<1x12x12x8xbf16>, vector<1x12x12x8xbf16>, vector<1x12x12x8xbf16>, vector<1x12x12x8xbf16>, vector<1x12x12x8xbf16>, vector<1x12x12x8xbf16>, vector<1x12x12x8xbf16>, vector<1x12x12x8xbf16>, vector<1x12x12x8xbf16> -> vector<1x12x12x72xbf16>
    %33 = vector.shape_cast %32 : vector<1x12x12x72xbf16> to vector<144x72xbf16>
    %cst_12 = arith.constant dense<0.000000e+00> : vector<144x8xf32>
    %34 = tpu.matmul %33, %20, %cst_12 {dimension_numbers = #tpu.dot_dimension_numbers<[1], [0], [0], [1], [0, 0, 1, 1], [], []>} : vector<144x72xbf16>, vector<72x8xbf16>, vector<144x8xf32> -> vector<144x8xf32>
    %35 = vector.broadcast %21 : vector<1x8xf32> to vector<144x8xf32>
    %36 = arith.addf %34, %35 : vector<144x8xf32>
    %cst_13 = arith.constant 0.000000e+00 : f32
    %37 = vector.broadcast %cst_13 : f32 to vector<144x8xf32>
    %38 = arith.maximumf %36, %37 : vector<144x8xf32>
    %39 = vector.shape_cast %38 : vector<144x8xf32> to vector<1x12x12x8xf32>
    %40 = vector.shape_cast %39 : vector<1x12x12x8xf32> to vector<1x6x2x6x2x8xf32>
    %cst_14 = arith.constant dense<0xFF800000> : vector<1x6x6x8xf32>
    %41 = vector.multi_reduction <maximumf>, %40, %cst_14 [2, 4] : vector<1x6x2x6x2x8xf32> to vector<1x6x6x8xf32>
    %42 = vector.shape_cast %41 : vector<1x6x6x8xf32> to vector<1x6x48xf32>
    %c0_15 = arith.constant 0 : index
    %c0_16 = arith.constant 0 : index
    %c0_17 = arith.constant 0 : index
    %43 = vector.load %arg6[%c0_15, %c0_16, %c0_17] : memref<1x6x48xf32, #tpu.memory_space<vmem>>, vector<1x6x48xf32>
    tpu.vector_store %arg6[%c0_15, %c0_16, %c0_17], %42 {strides = array<i32>} : memref<1x6x48xf32, #tpu.memory_space<vmem>>, vector<1x6x48xf32>,
    return
  }
  func.func @transform_0(%arg0: i32) -> (i32, i32, i32, i32) {
    %c0_i32 = arith.constant 0 : i32
    %c0_i32_0 = arith.constant 0 : i32
    %c0_i32_1 = arith.constant 0 : i32
    %c0_i32_2 = arith.constant 0 : i32
    return %arg0, %c0_i32, %c0_i32_0, %c0_i32_1 : i32, i32, i32, i32
  }
  func.func @transform_1(%arg0: i32) -> (i32, i32) {
    %c0_i32 = arith.constant 0 : i32
    %c0_i32_0 = arith.constant 0 : i32
    %c0_i32_1 = arith.constant 0 : i32
    return %c0_i32, %c0_i32_0 : i32, i32
  }
  func.func @transform_2(%arg0: i32) -> (i32, i32) {
    %c0_i32 = arith.constant 0 : i32
    %c0_i32_0 = arith.constant 0 : i32
    %c0_i32_1 = arith.constant 0 : i32
    return %c0_i32, %c0_i32_0 : i32, i32
  }
  func.func @transform_3(%arg0: i32) -> (i32, i32) {
    %c0_i32 = arith.constant 0 : i32
    %c0_i32_0 = arith.constant 0 : i32
    %c0_i32_1 = arith.constant 0 : i32
    return %c0_i32, %c0_i32_0 : i32, i32
  }
  func.func @transform_4(%arg0: i32) -> (i32, i32) {
    %c0_i32 = arith.constant 0 : i32
    %c0_i32_0 = arith.constant 0 : i32
    %c0_i32_1 = arith.constant 0 : i32
    return %c0_i32, %c0_i32_0 : i32, i32
  }
  func.func @transform_5(%arg0: i32) -> (i32, i32, i32) {
    %c0_i32 = arith.constant 0 : i32
    %c0_i32_0 = arith.constant 0 : i32
    %c0_i32_1 = arith.constant 0 : i32
    return %arg0, %c0_i32, %c0_i32_0 : i32, i32, i32
  }
}

</mosaic_0001>

<llo_original>
// kernel: contracting_block.1
$region0: #{contracting_block.1}
  #allocation0 [shape = 'u32[]', space=smem, size = 0x4, offset = 0x4, fixed_abs, tag = 'smem constant byte address 0x4 - core index']
  #allocation1 [shape = 'u32[144,128]{1,0:T(1,128)}', space=vmem, size = 0x12000, scoped, tag = 'internal scratch']
  %s0 = inlined_call_operand.vmem [shape: bf16[2,16,16,4], index: 0, kind: input, shape index: {}]
  %s1 = inlined_call_operand.vmem [shape: bf16[36,8], index: 1, kind: input, shape index: {}]
  %s2 = inlined_call_operand.vmem [shape: f32[1,8], index: 2, kind: input, shape index: {}]
  %s3 = inlined_call_operand.vmem [shape: bf16[72,8], index: 3, kind: input, shape index: {}]
  %s4 = inlined_call_operand.vmem [shape: f32[1,8], index: 4, kind: input, shape index: {}]
  %s5 = inlined_call_operand.vmem [shape: f32[2,6,48], index: 5, kind: output, shape index: {}]
  %s6 = sld [smem:[#allocation0]]
  $region53: #{contracting_block.1} parent=0
    _
  %s8 = ssub.s32 1, %s6
  %s9 = scalar_select 0, %s8, %s6
  loop: start=0, step=1, limit=4
  $region2: #{contracting_block.1} parent=0 // loop_pre_header
    _
  $region3: #{contracting_block.1} parent=0 // loop_header
    %s11 = sphi 0, %s15
    %p12 = scmp.ge.s32.totalorder %s11, 4
    %s21 = sphi 0, %s23
    %s24 = sphi 0, %s21
    %s25 = sphi 0, %s24
    %s41 = sphi 0, %s25
    %s45 = sphi 0, %s45
    %s47 = sphi 0, %s45
    %s48 = sphi 0, %s47
    %s62 = sphi 0, %s48
    %s66 = sphi 0, %s66
    %s68 = sphi 0, %s66
    %s69 = sphi 0, %s68
    %s83 = sphi 0, %s69
    %s87 = sphi 0, %s87
    %s89 = sphi 0, %s87
    %s90 = sphi 0, %s89
    %s104 = sphi 0, %s90
    %s108 = sphi 0, %s108
    %s110 = sphi 0, %s108
    %s111 = sphi 0, %s110
    %s125 = sphi 0, %s111
    %s131 = sphi 0, %s133
    %s134 = sphi 0, %s131
    %s135 = sphi 0, %s134
    %s151 = sphi 0, %s135
  $region4: #{contracting_block.1} parent=0 // loop_header_branch
    %14 = sbr.rel (%p12) target = $region8
  $region5: #{contracting_block.1} parent=0 // loop_body
    %s16 = ssub.s32 %s11, 1
    %s17 = ssub.s32 %s11, 2
    %s18 = sadd.s32 %s11, 1
    %s19 = ssub.s32 %s11, %s18
    %p20 = scmp.eq.s32.totalorder %s19, 0
    %s22 = sadd.s32 %s21, 1
    %s23 = scalar_select %p20, %s21, %s22
    %p26 = pneg %p20
    %p27 = scmp.eq.s32.totalorder %s11, 1
    %p28 = por %p26, %p27
    %p29 = scmp.ne.s32.totalorder %s21, %s24
    %p30 = scmp.eq.s32.totalorder %s11, 0
    %p31 = por %p29, %p30
    %p32 = scmp.ne.s32.totalorder %s21, %s24
    %p33 = scmp.eq.s32.totalorder %s16, 1
    %p34 = por %p32, %p33
    %p35 = scmp.ne.s32.totalorder %s24, %s25
    %p36 = scmp.eq.s32.totalorder %s16, 0
    %p37 = por %p35, %p36
    %p38 = scmp.ne.s32.totalorder %s24, %s25
    %p39 = scmp.eq.s32.totalorder %s17, 1
    %p40 = por %p38, %p39
    %p42 = scmp.ne.s32.totalorder %s25, %s41
    %p43 = scmp.eq.s32.totalorder %s17, 0
    %p44 = por %p42, %p43
    %s46 = sadd.s32 %s45, 1
    %p49 = scmp.eq.s32.totalorder %s11, 1
    %p50 = scmp.ne.s32.totalorder %s45, %s47
    %p51 = scmp.eq.s32.totalorder %s11, 0
    %p52 = por %p50, %p51
    %p53 = scmp.ne.s32.totalorder %s45, %s47
    %p54 = scmp.eq.s32.totalorder %s16, 1
    %p55 = por %p53, %p54
    %p56 = scmp.ne.s32.totalorder %s47, %s48
    %p57 = scmp.eq.s32.totalorder %s16, 0
    %p58 = por %p56, %p57
    %p59 = scmp.ne.s32.totalorder %s47, %s48
    %p60 = scmp.eq.s32.totalorder %s17, 1
    %p61 = por %p59, %p60
    %p63 = scmp.ne.s32.totalorder %s48, %s62
    %p64 = scmp.eq.s32.totalorder %s17, 0
    %p65 = por %p63, %p64
    %s67 = sadd.s32 %s66, 1
    %p70 = scmp.eq.s32.totalorder %s11, 1
    %p71 = scmp.ne.s32.totalorder %s66, %s68
    %p72 = scmp.eq.s32.totalorder %s11, 0
    %p73 = por %p71, %p72
    %p74 = scmp.ne.s32.totalorder %s66, %s68
    %p75 = scmp.eq.s32.totalorder %s16, 1
    %p76 = por %p74, %p75
    %p77 = scmp.ne.s32.totalorder %s68, %s69
    %p78 = scmp.eq.s32.totalorder %s16, 0
    %p79 = por %p77, %p78
    %p80 = scmp.ne.s32.totalorder %s68, %s69
    %p81 = scmp.eq.s32.totalorder %s17, 1
    %p82 = por %p80, %p81
    %p84 = scmp.ne.s32.totalorder %s69, %s83
    %p85 = scmp.eq.s32.totalorder %s17, 0
    %p86 = por %p84, %p85
    %s88 = sadd.s32 %s87, 1
    %p91 = scmp.eq.s32.totalorder %s11, 1
    %p92 = scmp.ne.s32.totalorder %s87, %s89
    %p93 = scmp.eq.s32.totalorder %s11, 0
    %p94 = por %p92, %p93
    %p95 = scmp.ne.s32.totalorder %s87, %s89
    %p96 = scmp.eq.s32.totalorder %s16, 1
    %p97 = por %p95, %p96
    %p98 = scmp.ne.s32.totalorder %s89, %s90
    %p99 = scmp.eq.s32.totalorder %s16, 0
    %p100 = por %p98, %p99
    %p101 = scmp.ne.s32.totalorder %s89, %s90
    %p102 = scmp.eq.s32.totalorder %s17, 1
    %p103 = por %p101, %p102
    %p105 = scmp.ne.s32.totalorder %s90, %s104
    %p106 = scmp.eq.s32.totalorder %s17, 0
    %p107 = por %p105, %p106
    %s109 = sadd.s32 %s108, 1
    %p112 = scmp.eq.s32.totalorder %s11, 1
    %p113 = scmp.ne.s32.totalorder %s108, %s110
    %p114 = scmp.eq.s32.totalorder %s11, 0
    %p115 = por %p113, %p114
    %p116 = scmp.ne.s32.totalorder %s108, %s110
    %p117 = scmp.eq.s32.totalorder %s16, 1
    %p118 = por %p116, %p117
    %p119 = scmp.ne.s32.totalorder %s110, %s111
    %p120 = scmp.eq.s32.totalorder %s16, 0
    %p121 = por %p119, %p120
    %p122 = scmp.ne.s32.totalorder %s110, %s111
    %p123 = scmp.eq.s32.totalorder %s17, 1
    %p124 = por %p122, %p123
    %p126 = scmp.ne.s32.totalorder %s111, %s125
    %p127 = scmp.eq.s32.totalorder %s17, 0
    %p128 = por %p126, %p127
    %s129 = ssub.s32 %s11, %s18
    %p130 = scmp.eq.s32.totalorder %s129, 0
    %s132 = sadd.s32 %s131, 1
    %s133 = scalar_select %p130, %s131, %s132
    %p136 = pneg %p130
    %p137 = scmp.eq.s32.totalorder %s11, 1
    %p138 = por %p136, %p137
    %p139 = scmp.ne.s32.totalorder %s131, %s134
    %p140 = scmp.eq.s32.totalorder %s11, 0
    %p141 = por %p139, %p140
    %p142 = scmp.ne.s32.totalorder %s131, %s134
    %p143 = scmp.eq.s32.totalorder %s16, 1
    %p144 = por %p142, %p143
    %p145 = scmp.ne.s32.totalorder %s134, %s135
    %p146 = scmp.eq.s32.totalorder %s16, 0
    %p147 = por %p145, %p146
    %p148 = scmp.ne.s32.totalorder %s134, %s135
    %p149 = scmp.eq.s32.totalorder %s17, 1
    %p150 = por %p148, %p149
    %p152 = scmp.ne.s32.totalorder %s135, %s151
    %p153 = scmp.eq.s32.totalorder %s17, 0
    %p154 = por %p152, %p153
    %p155 = scmp.le.s32.totalorder 1, %s11
    %p156 = scmp.lt.s32.totalorder %s11, 3
    %p157 = pnand %p155, %p156
    %p158 = pneg %p157
    // Predicated region
    $region9: #{contracting_block.1} parent=5 // pred_check
      _
    $region10: #{contracting_block.1} parent=5 // pred_check_branch
      %160 = sbr.rel (%p157) target = $region12
    $region11: #{contracting_block.1} parent=5 // pred_region
      %s161 = ssub.s32 %s11, 1
      // Predicated region
      $region13: #{contracting_block.1} parent=11 // pred_check
        %p162 = pneg %p58
      $region14: #{contracting_block.1} parent=11 // pred_check_branch
        %164 = sbr.rel (%p162) target = $region16
      $region15: #{contracting_block.1} parent=11 // pred_region
        _
      $region16: #{contracting_block.1} parent=11 // pred_fallthru
        _
      // Predicated region
      $region17: #{contracting_block.1} parent=11 // pred_check
        %p165 = pneg %p79
      $region18: #{contracting_block.1} parent=11 // pred_check_branch
        %167 = sbr.rel (%p165) target = $region20
      $region19: #{contracting_block.1} parent=11 // pred_region
        _
      $region20: #{contracting_block.1} parent=11 // pred_fallthru
        _
      // Predicated region
      $region21: #{contracting_block.1} parent=11 // pred_check
        %p168 = pneg %p100
      $region22: #{contracting_block.1} parent=11 // pred_check_branch
        %170 = sbr.rel (%p168) target = $region24
      $region23: #{contracting_block.1} parent=11 // pred_region
        _
      $region24: #{contracting_block.1} parent=11 // pred_fallthru
        _
      // Predicated region
      $region25: #{contracting_block.1} parent=11 // pred_check
        %p171 = pneg %p121
      $region26: #{contracting_block.1} parent=11 // pred_check_branch
        %173 = sbr.rel (%p171) target = $region28
      $region27: #{contracting_block.1} parent=11 // pred_region
        _
      $region28: #{contracting_block.1} parent=11 // pred_fallthru
        _
    $region12: #{contracting_block.1} parent=5 // pred_fallthru
      _
    %p174 = scmp.lt.s32.totalorder %s11, 2
    // Predicated region
    $region29: #{contracting_block.1} parent=5 // pred_check
      %p175 = pneg %p174
    $region30: #{contracting_block.1} parent=5 // pred_check_branch
      %177 = sbr.rel (%p175) target = $region32
    $region31: #{contracting_block.1} parent=5 // pred_region
      // Predicated region
      $region33: #{contracting_block.1} parent=31 // pred_check
        %p178 = pneg %p31
      $region34: #{contracting_block.1} parent=31 // pred_check_branch
        %180 = sbr.rel (%p178) target = $region36
      $region35: #{contracting_block.1} parent=31 // pred_region
        %p181 = scmp.lt.s32.totalorder %s11, 1
        %s182 = scalar_select %p181, %s11, 1
        %s183 = smul.addr %s182, 32
        %s184 = smul.addr %s183, 4
        %s185 = scalar_lea.vmem %s0, %s184
      $region36: #{contracting_block.1} parent=31 // pred_fallthru
        _
    $region32: #{contracting_block.1} parent=5 // pred_fallthru
      _
    %p186 = scmp.le.s32.totalorder 1, %s11
    %p187 = scmp.lt.s32.totalorder %s11, 3
    %p188 = pnand %p186, %p187
    %p189 = pneg %p188
    // Predicated region
    $region37: #{contracting_block.1} parent=5 // pred_check
      _
    $region38: #{contracting_block.1} parent=5 // pred_check_branch
      %191 = sbr.rel (%p188) target = $region40
    $region39: #{contracting_block.1} parent=5 // pred_region
      %s192 = ssub.s32 %s11, 1
      %p193 = scmp.lt.s32.totalorder %s16, 1
      %s194 = scalar_select %p193, %s16, 1
      %s195 = smul.addr %s194, 32
      %s196 = smul.addr %s195, 4
      %s197 = scalar_lea.vmem %s0, %s196
      %p198 = pneg %p37
      %p199 = pneg %p34
      %p200 = pneg %p58
      %p201 = pneg %p55
      %p202 = pneg %p79
      %p203 = pneg %p76
      %p204 = pneg %p100
      %p205 = pneg %p97
      %p206 = pneg %p121
      %p207 = pneg %p118
      %p208 = pneg %p147
      %p209 = pneg %p144
      %p210 = scmp.lt.s32.totalorder %s16, 1
      %s211 = scalar_select %p210, %s16, 1
      %s212 = smul.addr %s211, 8
      %s213 = scalar_lea.vmem %s5, %s212
      %p214 = scmp.lt.s32.totalorder %s16, 1
      %s215 = scalar_select %p214, %s16, 1
      %s216 = smul.addr %s215, 32
      %s217 = smul.addr %s216, 4
      %s218 = scalar_lea.vmem %s0, %s217
      %p219 = scmp.lt.s32.totalorder %s16, 1
      %s220 = scalar_select %p219, %s16, 1
      %s221 = smul.addr %s220, 8
      %s222 = scalar_lea.vmem %s5, %s221
      %v224 = vld [vmem:[%s218] sm:$0xf]
      %v225 = vld [vmem:[%s218 + $0x4] sm:$0xf]
      %v226 = vld [vmem:[%s218 + $0x8] sm:$0xf]
      %v227 = vld [vmem:[%s218 + $0xc] sm:$0xf]
      %v228 = vld [vmem:[%s218 + $0x10] sm:$0xf]
      %v229 = vld [vmem:[%s218 + $0x14] sm:$0xf]
      %v230 = vld [vmem:[%s218 + $0x18] sm:$0xf]
      %v231 = vld [vmem:[%s218 + $0x1c] sm:$0xf]
      %v232 = vld [vmem:[%s218 + $0x20] sm:$0xf]
      %v233 = vld [vmem:[%s218 + $0x24] sm:$0xf]
      %v234 = vld [vmem:[%s218 + $0x28] sm:$0xf]
      %v235 = vld [vmem:[%s218 + $0x2c] sm:$0xf]
      %v236 = vld [vmem:[%s218 + $0x30] sm:$0xf]
      %v237 = vld [vmem:[%s218 + $0x34] sm:$0xf]
      %v238 = vld [vmem:[%s218 + $0x38] sm:$0xf]
      %v239 = vld [vmem:[%s218 + $0x3c] sm:$0xf]
      %v240 = vld [vmem:[%s218 + $0x40] sm:$0xf]
      %v241 = vld [vmem:[%s218 + $0x44] sm:$0xf]
      %v242 = vld [vmem:[%s218 + $0x48] sm:$0xf]
      %v243 = vld [vmem:[%s218 + $0x4c] sm:$0xf]
      %v244 = vld [vmem:[%s218 + $0x50] sm:$0xf]
      %v245 = vld [vmem:[%s218 + $0x54] sm:$0xf]
      %v246 = vld [vmem:[%s218 + $0x58] sm:$0xf]
      %v247 = vld [vmem:[%s218 + $0x5c] sm:$0xf]
      %v248 = vld [vmem:[%s218 + $0x60] sm:$0xf]
      %v249 = vld [vmem:[%s218 + $0x64] sm:$0xf]
      %v250 = vld [vmem:[%s218 + $0x68] sm:$0xf]
      %v251 = vld [vmem:[%s218 + $0x6c] sm:$0xf]
      %v252 = vld [vmem:[%s218 + $0x70] sm:$0xf]
      %v253 = vld [vmem:[%s218 + $0x74] sm:$0xf]
      %v254 = vld [vmem:[%s218 + $0x78] sm:$0xf]
      %v255 = vld [vmem:[%s218 + $0x7c] sm:$0xf]
      %v256 = vld [vmem:[%s1] sm:$0xf]
      %v257 = vld [vmem:[%s1 + $0x4] sm:$0xf]
      %v258 = vld [vmem:[%s1 + $0x8] sm:$0xf]
      %v259 = vld [vmem:[%s1 + $0xc] sm:$0xf]
      %v260 = vld [vmem:[%s1 + $0x10] sm:$0x3]
      %v261 = vld [vmem:[%s2] sm:$0x1]
      %v290 = vunpack.c.l.b16 %v224
      %v291 = vunpack.c.l.b16 %v225
      %v292 = vunpack.c.l.b16 %v226
      %v293 = vunpack.c.l.b16 %v227
      %v294 = vunpack.c.l.b16 %v228
      %v295 = vunpack.c.l.b16 %v229
      %v296 = vunpack.c.l.b16 %v230
      %v297 = vunpack.c.l.b16 %v231
      %v298 = vunpack.c.l.b16 %v232
      %v299 = vunpack.c.l.b16 %v233
      %v300 = vunpack.c.l.b16 %v234
      %v301 = vunpack.c.l.b16 %v235
      %v302 = vunpack.c.l.b16 %v236
      %v303 = vunpack.c.l.b16 %v237
      %v304 = vunpack.c.l.b16 %v238
      %v305 = vunpack.c.l.b16 %v239
      %v306 = vunpack.c.l.b16 %v240
      %v307 = vunpack.c.l.b16 %v241
      %v308 = vunpack.c.l.b16 %v242
      %v309 = vunpack.c.l.b16 %v243
      %v310 = vunpack.c.l.b16 %v244
      %v311 = vunpack.c.l.b16 %v245
      %v312 = vunpack.c.l.b16 %v246
      %v313 = vunpack.c.l.b16 %v247
      %v314 = vunpack.c.l.b16 %v248
      %v315 = vunpack.c.l.b16 %v249
      %v316 = vunpack.c.l.b16 %v250
      %v317 = vunpack.c.l.b16 %v251
      %v318 = vpack.c.b16 %v291, %v290
      %v319 = vpack.c.b16 %v293, %v292
      %v320 = vpack.c.b16 %v295, %v294
      %v321 = vpack.c.b16 %v297, %v296
      %v322 = vpack.c.b16 %v299, %v298
      %v323 = vpack.c.b16 %v301, %v300
      %v324 = vpack.c.b16 %v303, %v302
      %v325 = vpack.c.b16 %v305, %v304
      %v326 = vpack.c.b16 %v307, %v306
      %v327 = vpack.c.b16 %v309, %v308
      %v328 = vpack.c.b16 %v311, %v310
      %v329 = vpack.c.b16 %v313, %v312
      %v330 = vpack.c.b16 %v315, %v314
      %v331 = vpack.c.b16 %v317, %v316
      %v333 = vshrl.u32 %v318, 16
      %v335 = vshll.u32 %v318, 16
      %v337 = vrot.slane %v335, 1
      %v338 = vor.u32 %v333, %v337
      %v340 = vshrl.u32 %v319, 16
      %v342 = vshll.u32 %v319, 16
      %v344 = vrot.slane %v342, 1
      %v345 = vor.u32 %v340, %v344
      %v347 = vshrl.u32 %v320, 16
      %v349 = vshll.u32 %v320, 16
      %v351 = vrot.slane %v349, 1
      %v352 = vor.u32 %v347, %v351
      %v354 = vshrl.u32 %v321, 16
      %v356 = vshll.u32 %v321, 16
      %v358 = vrot.slane %v356, 1
      %v359 = vor.u32 %v354, %v358
      %v361 = vshrl.u32 %v322, 16
      %v363 = vshll.u32 %v322, 16
      %v365 = vrot.slane %v363, 1
      %v366 = vor.u32 %v361, %v365
      %v368 = vshrl.u32 %v323, 16
      %v370 = vshll.u32 %v323, 16
      %v372 = vrot.slane %v370, 1
      %v373 = vor.u32 %v368, %v372
      %v375 = vshrl.u32 %v324, 16
      %v377 = vshll.u32 %v324, 16
      %v379 = vrot.slane %v377, 1
      %v380 = vor.u32 %v375, %v379
      %v382 = vshrl.u32 %v325, 16
      %v384 = vshll.u32 %v325, 16
      %v386 = vrot.slane %v384, 1
      %v387 = vor.u32 %v382, %v386
      %v389 = vshrl.u32 %v326, 16
      %v391 = vshll.u32 %v326, 16
      %v393 = vrot.slane %v391, 1
      %v394 = vor.u32 %v389, %v393
      %v396 = vshrl.u32 %v327, 16
      %v398 = vshll.u32 %v327, 16
      %v400 = vrot.slane %v398, 1
      %v401 = vor.u32 %v396, %v400
      %v403 = vshrl.u32 %v328, 16
      %v405 = vshll.u32 %v328, 16
      %v407 = vrot.slane %v405, 1
      %v408 = vor.u32 %v403, %v407
      %v410 = vshrl.u32 %v329, 16
      %v412 = vshll.u32 %v329, 16
      %v414 = vrot.slane %v412, 1
      %v415 = vor.u32 %v410, %v414
      %v417 = vshrl.u32 %v330, 16
      %v419 = vshll.u32 %v330, 16
      %v421 = vrot.slane %v419, 1
      %v422 = vor.u32 %v417, %v421
      %v424 = vshrl.u32 %v331, 16
      %v426 = vshll.u32 %v331, 16
      %v428 = vrot.slane %v426, 1
      %v429 = vor.u32 %v424, %v428
      %430 = vrot.lane.b32.xlu0 %v338, 4
      %v431 = vpop.permute.xlu0 %430
      %432 = vrot.lane.b32.xlu0 %v345, 4
      %v433 = vpop.permute.xlu0 %432
      %434 = vrot.lane.b32.xlu0 %v352, 4
      %v435 = vpop.permute.xlu0 %434
      %436 = vrot.lane.b32.xlu0 %v359, 4
      %v437 = vpop.permute.xlu0 %436
      %438 = vrot.lane.b32.xlu0 %v366, 4
      %v439 = vpop.permute.xlu0 %438
      %440 = vrot.lane.b32.xlu0 %v373, 4
      %v441 = vpop.permute.xlu0 %440
      %442 = vrot.lane.b32.xlu0 %v380, 4
      %v443 = vpop.permute.xlu0 %442
      %444 = vrot.lane.b32.xlu0 %v387, 4
      %v445 = vpop.permute.xlu0 %444
      %446 = vrot.lane.b32.xlu0 %v394, 4
      %v447 = vpop.permute.xlu0 %446
      %448 = vrot.lane.b32.xlu0 %v401, 4
      %v449 = vpop.permute.xlu0 %448
      %450 = vrot.lane.b32.xlu0 %v408, 4
      %v451 = vpop.permute.xlu0 %450
      %452 = vrot.lane.b32.xlu0 %v415, 4
      %v453 = vpop.permute.xlu0 %452
      %454 = vrot.lane.b32.xlu0 %v422, 4
      %v455 = vpop.permute.xlu0 %454
      %456 = vrot.lane.b32.xlu0 %v429, 4
      %v457 = vpop.permute.xlu0 %456
      %v458 = vrot.slane %v318, 1
      %v459 = vrot.slane %v319, 1
      %v460 = vrot.slane %v320, 1
      %v461 = vrot.slane %v321, 1
      %v462 = vrot.slane %v322, 1
      %v463 = vrot.slane %v323, 1
      %v464 = vrot.slane %v324, 1
      %v465 = vrot.slane %v325, 1
      %v466 = vrot.slane %v326, 1
      %v467 = vrot.slane %v327, 1
      %v468 = vrot.slane %v328, 1
      %v469 = vrot.slane %v329, 1
      %v470 = vrot.slane %v330, 1
      %v471 = vrot.slane %v331, 1
      %472 = vrot.lane.b32.xlu0 %v458, 8
      %v473 = vpop.permute.xlu0 %472
      %474 = vrot.lane.b32.xlu0 %v459, 8
      %v475 = vpop.permute.xlu0 %474
      %476 = vrot.lane.b32.xlu0 %v460, 8
      %v477 = vpop.permute.xlu0 %476
      %478 = vrot.lane.b32.xlu0 %v461, 8
      %v479 = vpop.permute.xlu0 %478
      %480 = vrot.lane.b32.xlu0 %v462, 8
      %v481 = vpop.permute.xlu0 %480
      %482 = vrot.lane.b32.xlu0 %v463, 8
      %v483 = vpop.permute.xlu0 %482
      %484 = vrot.lane.b32.xlu0 %v464, 8
      %v485 = vpop.permute.xlu0 %484
      %486 = vrot.lane.b32.xlu0 %v465, 8
      %v487 = vpop.permute.xlu0 %486
      %488 = vrot.lane.b32.xlu0 %v466, 8
      %v489 = vpop.permute.xlu0 %488
      %490 = vrot.lane.b32.xlu0 %v467, 8
      %v491 = vpop.permute.xlu0 %490
      %492 = vrot.lane.b32.xlu0 %v468, 8
      %v493 = vpop.permute.xlu0 %492
      %494 = vrot.lane.b32.xlu0 %v469, 8
      %v495 = vpop.permute.xlu0 %494
      %496 = vrot.lane.b32.xlu0 %v470, 8
      %v497 = vpop.permute.xlu0 %496
      %498 = vrot.lane.b32.xlu0 %v471, 8
      %v499 = vpop.permute.xlu0 %498
      %v502 = vunpack.c.l.b16 %v252
      %v503 = vunpack.c.l.b16 %v253
      %v504 = vpack.c.b16 %v503, %v502
      %505 = vrot.lane.b32.xlu0 %v319, 12
      %v506 = vpop.permute.xlu0 %505
      %507 = vrot.lane.b32.xlu0 %v320, 12
      %v508 = vpop.permute.xlu0 %507
      %509 = vrot.lane.b32.xlu0 %v321, 12
      %v510 = vpop.permute.xlu0 %509
      %511 = vrot.lane.b32.xlu0 %v322, 12
      %v512 = vpop.permute.xlu0 %511
      %513 = vrot.lane.b32.xlu0 %v323, 12
      %v514 = vpop.permute.xlu0 %513
      %515 = vrot.lane.b32.xlu0 %v324, 12
      %v516 = vpop.permute.xlu0 %515
      %517 = vrot.lane.b32.xlu0 %v325, 12
      %v518 = vpop.permute.xlu0 %517
      %519 = vrot.lane.b32.xlu0 %v326, 12
      %v520 = vpop.permute.xlu0 %519
      %521 = vrot.lane.b32.xlu0 %v327, 12
      %v522 = vpop.permute.xlu0 %521
      %523 = vrot.lane.b32.xlu0 %v328, 12
      %v524 = vpop.permute.xlu0 %523
      %525 = vrot.lane.b32.xlu0 %v329, 12
      %v526 = vpop.permute.xlu0 %525
      %527 = vrot.lane.b32.xlu0 %v330, 12
      %v528 = vpop.permute.xlu0 %527
      %529 = vrot.lane.b32.xlu0 %v331, 12
      %v530 = vpop.permute.xlu0 %529
      %531 = vrot.lane.b32.xlu0 %v504, 12
      %v532 = vpop.permute.xlu0 %531
      %v534 = vshrl.u32 %v504, 16
      %v536 = vshll.u32 %v504, 16
      %v538 = vrot.slane %v536, 1
      %v539 = vor.u32 %v534, %v538
      %540 = vrot.lane.b32.xlu0 %v345, 16
      %v541 = vpop.permute.xlu0 %540
      %542 = vrot.lane.b32.xlu0 %v352, 16
      %v543 = vpop.permute.xlu0 %542
      %544 = vrot.lane.b32.xlu0 %v359, 16
      %v545 = vpop.permute.xlu0 %544
      %546 = vrot.lane.b32.xlu0 %v366, 16
      %v547 = vpop.permute.xlu0 %546
      %548 = vrot.lane.b32.xlu0 %v373, 16
      %v549 = vpop.permute.xlu0 %548
      %550 = vrot.lane.b32.xlu0 %v380, 16
      %v551 = vpop.permute.xlu0 %550
      %552 = vrot.lane.b32.xlu0 %v387, 16
      %v553 = vpop.permute.xlu0 %552
      %554 = vrot.lane.b32.xlu0 %v394, 16
      %v555 = vpop.permute.xlu0 %554
      %556 = vrot.lane.b32.xlu0 %v401, 16
      %v557 = vpop.permute.xlu0 %556
      %558 = vrot.lane.b32.xlu0 %v408, 16
      %v559 = vpop.permute.xlu0 %558
      %560 = vrot.lane.b32.xlu0 %v415, 16
      %v561 = vpop.permute.xlu0 %560
      %562 = vrot.lane.b32.xlu0 %v422, 16
      %v563 = vpop.permute.xlu0 %562
      %564 = vrot.lane.b32.xlu0 %v429, 16
      %v565 = vpop.permute.xlu0 %564
      %566 = vrot.lane.b32.xlu0 %v539, 16
      %v567 = vpop.permute.xlu0 %566
      %v568 = vrot.slane %v504, 1
      %569 = vrot.lane.b32.xlu0 %v459, 20
      %v570 = vpop.permute.xlu0 %569
      %571 = vrot.lane.b32.xlu0 %v460, 20
      %v572 = vpop.permute.xlu0 %571
      %573 = vrot.lane.b32.xlu0 %v461, 20
      %v574 = vpop.permute.xlu0 %573
      %575 = vrot.lane.b32.xlu0 %v462, 20
      %v576 = vpop.permute.xlu0 %575
      %577 = vrot.lane.b32.xlu0 %v463, 20
      %v578 = vpop.permute.xlu0 %577
      %579 = vrot.lane.b32.xlu0 %v464, 20
      %v580 = vpop.permute.xlu0 %579
      %581 = vrot.lane.b32.xlu0 %v465, 20
      %v582 = vpop.permute.xlu0 %581
      %583 = vrot.lane.b32.xlu0 %v466, 20
      %v584 = vpop.permute.xlu0 %583
      %585 = vrot.lane.b32.xlu0 %v467, 20
      %v586 = vpop.permute.xlu0 %585
      %587 = vrot.lane.b32.xlu0 %v468, 20
      %v588 = vpop.permute.xlu0 %587
      %589 = vrot.lane.b32.xlu0 %v469, 20
      %v590 = vpop.permute.xlu0 %589
      %591 = vrot.lane.b32.xlu0 %v470, 20
      %v592 = vpop.permute.xlu0 %591
      %593 = vrot.lane.b32.xlu0 %v471, 20
      %v594 = vpop.permute.xlu0 %593
      %595 = vrot.lane.b32.xlu0 %v568, 20
      %v596 = vpop.permute.xlu0 %595
      %v599 = vunpack.c.l.b16 %v254
      %v600 = vunpack.c.l.b16 %v255
      %v601 = vpack.c.b16 %v600, %v599
      %602 = vrot.lane.b32.xlu0 %v320, 24
      %v603 = vpop.permute.xlu0 %602
      %604 = vrot.lane.b32.xlu0 %v321, 24
      %v605 = vpop.permute.xlu0 %604
      %606 = vrot.lane.b32.xlu0 %v322, 24
      %v607 = vpop.permute.xlu0 %606
      %608 = vrot.lane.b32.xlu0 %v323, 24
      %v609 = vpop.permute.xlu0 %608
      %610 = vrot.lane.b32.xlu0 %v324, 24
      %v611 = vpop.permute.xlu0 %610
      %612 = vrot.lane.b32.xlu0 %v325, 24
      %v613 = vpop.permute.xlu0 %612
      %614 = vrot.lane.b32.xlu0 %v326, 24
      %v615 = vpop.permute.xlu0 %614
      %616 = vrot.lane.b32.xlu0 %v327, 24
      %v617 = vpop.permute.xlu0 %616
      %618 = vrot.lane.b32.xlu0 %v328, 24
      %v619 = vpop.permute.xlu0 %618
      %620 = vrot.lane.b32.xlu0 %v329, 24
      %v621 = vpop.permute.xlu0 %620
      %622 = vrot.lane.b32.xlu0 %v330, 24
      %v623 = vpop.permute.xlu0 %622
      %624 = vrot.lane.b32.xlu0 %v331, 24
      %v625 = vpop.permute.xlu0 %624
      %626 = vrot.lane.b32.xlu0 %v504, 24
      %v627 = vpop.permute.xlu0 %626
      %628 = vrot.lane.b32.xlu0 %v601, 24
      %v629 = vpop.permute.xlu0 %628
      %v631 = vshrl.u32 %v601, 16
      %v633 = vshll.u32 %v601, 16
      %v635 = vrot.slane %v633, 1
      %v636 = vor.u32 %v631, %v635
      %637 = vrot.lane.b32.xlu0 %v352, 28
      %v638 = vpop.permute.xlu0 %637
      %639 = vrot.lane.b32.xlu0 %v359, 28
      %v640 = vpop.permute.xlu0 %639
      %641 = vrot.lane.b32.xlu0 %v366, 28
      %v642 = vpop.permute.xlu0 %641
      %643 = vrot.lane.b32.xlu0 %v373, 28
      %v644 = vpop.permute.xlu0 %643
      %645 = vrot.lane.b32.xlu0 %v380, 28
      %v646 = vpop.permute.xlu0 %645
      %647 = vrot.lane.b32.xlu0 %v387, 28
      %v648 = vpop.permute.xlu0 %647
      %649 = vrot.lane.b32.xlu0 %v394, 28
      %v650 = vpop.permute.xlu0 %649
      %651 = vrot.lane.b32.xlu0 %v401, 28
      %v652 = vpop.permute.xlu0 %651
      %653 = vrot.lane.b32.xlu0 %v408, 28
      %v654 = vpop.permute.xlu0 %653
      %655 = vrot.lane.b32.xlu0 %v415, 28
      %v656 = vpop.permute.xlu0 %655
      %657 = vrot.lane.b32.xlu0 %v422, 28
      %v658 = vpop.permute.xlu0 %657
      %659 = vrot.lane.b32.xlu0 %v429, 28
      %v660 = vpop.permute.xlu0 %659
      %661 = vrot.lane.b32.xlu0 %v539, 28
      %v662 = vpop.permute.xlu0 %661
      %663 = vrot.lane.b32.xlu0 %v636, 28
      %v664 = vpop.permute.xlu0 %663
      %v665 = vrot.slane %v601, 1
      %666 = vrot.lane.b32.xlu0 %v460, 32
      %v667 = vpop.permute.xlu0 %666
      %668 = vrot.lane.b32.xlu0 %v461, 32
      %v669 = vpop.permute.xlu0 %668
      %670 = vrot.lane.b32.xlu0 %v462, 32
      %v671 = vpop.permute.xlu0 %670
      %672 = vrot.lane.b32.xlu0 %v463, 32
      %v673 = vpop.permute.xlu0 %672
      %674 = vrot.lane.b32.xlu0 %v464, 32
      %v675 = vpop.permute.xlu0 %674
      %676 = vrot.lane.b32.xlu0 %v465, 32
      %v677 = vpop.permute.xlu0 %676
      %678 = vrot.lane.b32.xlu0 %v466, 32
      %v679 = vpop.permute.xlu0 %678
      %680 = vrot.lane.b32.xlu0 %v467, 32
      %v681 = vpop.permute.xlu0 %680
      %682 = vrot.lane.b32.xlu0 %v468, 32
      %v683 = vpop.permute.xlu0 %682
      %684 = vrot.lane.b32.xlu0 %v469, 32
      %v685 = vpop.permute.xlu0 %684
      %686 = vrot.lane.b32.xlu0 %v470, 32
      %v687 = vpop.permute.xlu0 %686
      %688 = vrot.lane.b32.xlu0 %v471, 32
      %v689 = vpop.permute.xlu0 %688
      %690 = vrot.lane.b32.xlu0 %v568, 32
      %v691 = vpop.permute.xlu0 %690
      %692 = vrot.lane.b32.xlu0 %v665, 32
      %v693 = vpop.permute.xlu0 %692
      %vm694 = vcmask 31744
      %v696 = vsel %vm694, %v318, %v431
      %v698 = vsel %vm694, %v319, %v433
      %v700 = vsel %vm694, %v320, %v435
      %v702 = vsel %vm694, %v321, %v437
      %v704 = vsel %vm694, %v322, %v439
      %v706 = vsel %vm694, %v323, %v441
      %v708 = vsel %vm694, %v324, %v443
      %v710 = vsel %vm694, %v325, %v445
      %v712 = vsel %vm694, %v326, %v447
      %v714 = vsel %vm694, %v327, %v449
      %v716 = vsel %vm694, %v328, %v451
      %v718 = vsel %vm694, %v329, %v453
      %v720 = vsel %vm694, %v330, %v455
      %v722 = vsel %vm694, %v331, %v457
      %vm723 = vcmask 64512
      %v725 = vsel %vm723, %v696, %v473
      %v727 = vsel %vm723, %v698, %v475
      %v729 = vsel %vm723, %v700, %v477
      %v731 = vsel %vm723, %v702, %v479
      %v733 = vsel %vm723, %v704, %v481
      %v735 = vsel %vm723, %v706, %v483
      %v737 = vsel %vm723, %v708, %v485
      %v739 = vsel %vm723, %v710, %v487
      %v741 = vsel %vm723, %v712, %v489
      %v743 = vsel %vm723, %v714, %v491
      %v745 = vsel %vm723, %v716, %v493
      %v747 = vsel %vm723, %v718, %v495
      %v749 = vsel %vm723, %v720, %v497
      %v751 = vsel %vm723, %v722, %v499
      %vm752 = vcmask 97280
      %v754 = vsel %vm752, %v725, %v506
      %v756 = vsel %vm752, %v727, %v508
      %v758 = vsel %vm752, %v729, %v510
      %v760 = vsel %vm752, %v731, %v512
      %v762 = vsel %vm752, %v733, %v514
      %v764 = vsel %vm752, %v735, %v516
      %v766 = vsel %vm752, %v737, %v518
      %v768 = vsel %vm752, %v739, %v520
      %v770 = vsel %vm752, %v741, %v522
      %v772 = vsel %vm752, %v743, %v524
      %v774 = vsel %vm752, %v745, %v526
      %v776 = vsel %vm752, %v747, %v528
      %v778 = vsel %vm752, %v749, %v530
      %v780 = vsel %vm752, %v751, %v532
      %vm781 = vcmask 130048
      %v783 = vsel %vm781, %v754, %v541
      %v785 = vsel %vm781, %v756, %v543
      %v787 = vsel %vm781, %v758, %v545
      %v789 = vsel %vm781, %v760, %v547
      %v791 = vsel %vm781, %v762, %v549
      %v793 = vsel %vm781, %v764, %v551
      %v795 = vsel %vm781, %v766, %v553
      %v797 = vsel %vm781, %v768, %v555
      %v799 = vsel %vm781, %v770, %v557
      %v801 = vsel %vm781, %v772, %v559
      %v803 = vsel %vm781, %v774, %v561
      %v805 = vsel %vm781, %v776, %v563
      %v807 = vsel %vm781, %v778, %v565
      %v809 = vsel %vm781, %v780, %v567
      %vm810 = vcmask 162816
      %v812 = vsel %vm810, %v783, %v570
      %v814 = vsel %vm810, %v785, %v572
      %v816 = vsel %vm810, %v787, %v574
      %v818 = vsel %vm810, %v789, %v576
      %v820 = vsel %vm810, %v791, %v578
      %v822 = vsel %vm810, %v793, %v580
      %v824 = vsel %vm810, %v795, %v582
      %v826 = vsel %vm810, %v797, %v584
      %v828 = vsel %vm810, %v799, %v586
      %v830 = vsel %vm810, %v801, %v588
      %v832 = vsel %vm810, %v803, %v590
      %v834 = vsel %vm810, %v805, %v592
      %v836 = vsel %vm810, %v807, %v594
      %v838 = vsel %vm810, %v809, %v596
      %vm839 = vcmask 195584
      %v841 = vsel %vm839, %v812, %v603
      %v843 = vsel %vm839, %v814, %v605
      %v845 = vsel %vm839, %v816, %v607
      %v847 = vsel %vm839, %v818, %v609
      %v849 = vsel %vm839, %v820, %v611
      %v851 = vsel %vm839, %v822, %v613
      %v853 = vsel %vm839, %v824, %v615
      %v855 = vsel %vm839, %v826, %v617
      %v857 = vsel %vm839, %v828, %v619
      %v859 = vsel %vm839, %v830, %v621
      %v861 = vsel %vm839, %v832, %v623
      %v863 = vsel %vm839, %v834, %v625
      %v865 = vsel %vm839, %v836, %v627
      %v867 = vsel %vm839, %v838, %v629
      %vm868 = vcmask 228352
      %v870 = vsel %vm868, %v841, %v638
      %v872 = vsel %vm868, %v843, %v640
      %v874 = vsel %vm868, %v845, %v642
      %v876 = vsel %vm868, %v847, %v644
      %v878 = vsel %vm868, %v849, %v646
      %v880 = vsel %vm868, %v851, %v648
      %v882 = vsel %vm868, %v853, %v650
      %v884 = vsel %vm868, %v855, %v652
      %v886 = vsel %vm868, %v857, %v654
      %v888 = vsel %vm868, %v859, %v656
      %v890 = vsel %vm868, %v861, %v658
      %v892 = vsel %vm868, %v863, %v660
      %v894 = vsel %vm868, %v865, %v662
      %v896 = vsel %vm868, %v867, %v664
      %vm897 = vcmask 261120
      %v899 = vsel %vm897, %v870, %v667
      %v901 = vsel %vm897, %v872, %v669
      %v903 = vsel %vm897, %v874, %v671
      %v905 = vsel %vm897, %v876, %v673
      %v907 = vsel %vm897, %v878, %v675
      %v909 = vsel %vm897, %v880, %v677
      %v911 = vsel %vm897, %v882, %v679
      %v913 = vsel %vm897, %v884, %v681
      %v915 = vsel %vm897, %v886, %v683
      %v917 = vsel %vm897, %v888, %v685
      %v919 = vsel %vm897, %v890, %v687
      %v921 = vsel %vm897, %v892, %v689
      %v923 = vsel %vm897, %v894, %v691
      %v925 = vsel %vm897, %v896, %v693
      %v940 = vcombine.high %v899, %v899
      %v942 = vunpack.c.l.s4 1966171168
      %v943 = vunpack.c.0.s8 %v942
      %v944 = vlaneseq
      %v945 = vshrl.u32 %v944, 7
      %v946 = vsub.s32 %v943, %v945
      %v947 = vrot.slane %v899, %v946
      %v949 = vunpack.c.l.s4 1966171168
      %v950 = vunpack.c.0.s8 %v949
      %v951 = vlaneseq
      %v952 = vshrl.u32 %v951, 7
      %v953 = vsub.s32 %v950, %v952
      %v954 = vrot.slane %v940, %v953
      %v955 = vcombine.high %v947, %v947
      %v956 = vcombine.high %v954, %v954
      %v958 = vunpack.c.l.s4 1966171168
      %v959 = vunpack.c.0.s8 %v958
      %v960 = vlaneseq
      %v961 = vshrl.u32 %v960, 7
      %v962 = vsub.s32 %v959, %v961
      %v963 = vrot.slane %v947, %v962
      %v965 = vunpack.c.l.s4 1966171168
      %v966 = vunpack.c.0.s8 %v965
      %v967 = vlaneseq
      %v968 = vshrl.u32 %v967, 7
      %v969 = vsub.s32 %v966, %v968
      %v970 = vrot.slane %v954, %v969
      %v972 = vunpack.c.l.s4 1966171168
      %v973 = vunpack.c.0.s8 %v972
      %v974 = vlaneseq
      %v975 = vshrl.u32 %v974, 7
      %v976 = vsub.s32 %v973, %v975
      %v977 = vrot.slane %v955, %v976
      %v979 = vunpack.c.l.s4 1966171168
      %v980 = vunpack.c.0.s8 %v979
      %v981 = vlaneseq
      %v982 = vshrl.u32 %v981, 7
      %v983 = vsub.s32 %v980, %v982
      %v984 = vrot.slane %v956, %v983
      %v985 = vcombine.high %v963, %v963
      %v986 = vcombine.high %v970, %v970
      %v987 = vcombine.high %v977, %v977
      %v988 = vcombine.high %v901, %v901
      %v990 = vunpack.c.l.s4 1966171168
      %v991 = vunpack.c.0.s8 %v990
      %v992 = vlaneseq
      %v993 = vshrl.u32 %v992, 7
      %v994 = vsub.s32 %v991, %v993
      %v995 = vrot.slane %v901, %v994
      %v997 = vunpack.c.l.s4 1966171168
      %v998 = vunpack.c.0.s8 %v997
      %v999 = vlaneseq
      %v1000 = vshrl.u32 %v999, 7
      %v1001 = vsub.s32 %v998, %v1000
      %v1002 = vrot.slane %v988, %v1001
      %v1003 = vcombine.high %v995, %v995
      %v1004 = vcombine.high %v1002, %v1002
      %v1006 = vunpack.c.l.s4 1966171168
      %v1007 = vunpack.c.0.s8 %v1006
      %v1008 = vlaneseq
      %v1009 = vshrl.u32 %v1008, 7
      %v1010 = vsub.s32 %v1007, %v1009
      %v1011 = vrot.slane %v995, %v1010
      %v1013 = vunpack.c.l.s4 1966171168
      %v1014 = vunpack.c.0.s8 %v1013
      %v1015 = vlaneseq
      %v1016 = vshrl.u32 %v1015, 7
      %v1017 = vsub.s32 %v1014, %v1016
      %v1018 = vrot.slane %v1002, %v1017
      %v1020 = vunpack.c.l.s4 1966171168
      %v1021 = vunpack.c.0.s8 %v1020
      %v1022 = vlaneseq
      %v1023 = vshrl.u32 %v1022, 7
      %v1024 = vsub.s32 %v1021, %v1023
      %v1025 = vrot.slane %v1003, %v1024
      %v1027 = vunpack.c.l.s4 1966171168
      %v1028 = vunpack.c.0.s8 %v1027
      %v1029 = vlaneseq
      %v1030 = vshrl.u32 %v1029, 7
      %v1031 = vsub.s32 %v1028, %v1030
      %v1032 = vrot.slane %v1004, %v1031
      %v1033 = vcombine.high %v1011, %v1011
      %v1034 = vcombine.high %v1018, %v1018
      %v1035 = vcombine.high %v1025, %v1025
      %v1036 = vcombine.high %v903, %v903
      %v1038 = vunpack.c.l.s4 1966171168
      %v1039 = vunpack.c.0.s8 %v1038
      %v1040 = vlaneseq
      %v1041 = vshrl.u32 %v1040, 7
      %v1042 = vsub.s32 %v1039, %v1041
      %v1043 = vrot.slane %v903, %v1042
      %v1045 = vunpack.c.l.s4 1966171168
      %v1046 = vunpack.c.0.s8 %v1045
      %v1047 = vlaneseq
      %v1048 = vshrl.u32 %v1047, 7
      %v1049 = vsub.s32 %v1046, %v1048
      %v1050 = vrot.slane %v1036, %v1049
      %v1051 = vcombine.high %v1043, %v1043
      %v1052 = vcombine.high %v1050, %v1050
      %v1054 = vunpack.c.l.s4 1966171168
      %v1055 = vunpack.c.0.s8 %v1054
      %v1056 = vlaneseq
      %v1057 = vshrl.u32 %v1056, 7
      %v1058 = vsub.s32 %v1055, %v1057
      %v1059 = vrot.slane %v1043, %v1058
      %v1061 = vunpack.c.l.s4 1966171168
      %v1062 = vunpack.c.0.s8 %v1061
      %v1063 = vlaneseq
      %v1064 = vshrl.u32 %v1063, 7
      %v1065 = vsub.s32 %v1062, %v1064
      %v1066 = vrot.slane %v1050, %v1065
      %v1068 = vunpack.c.l.s4 1966171168
      %v1069 = vunpack.c.0.s8 %v1068
      %v1070 = vlaneseq
      %v1071 = vshrl.u32 %v1070, 7
      %v1072 = vsub.s32 %v1069, %v1071
      %v1073 = vrot.slane %v1051, %v1072
      %v1075 = vunpack.c.l.s4 1966171168
      %v1076 = vunpack.c.0.s8 %v1075
      %v1077 = vlaneseq
      %v1078 = vshrl.u32 %v1077, 7
      %v1079 = vsub.s32 %v1076, %v1078
      %v1080 = vrot.slane %v1052, %v1079
      %v1081 = vcombine.high %v1059, %v1059
      %v1082 = vcombine.high %v1066, %v1066
      %v1083 = vcombine.high %v1073, %v1073
      %v1084 = vcombine.high %v905, %v905
      %v1086 = vunpack.c.l.s4 1966171168
      %v1087 = vunpack.c.0.s8 %v1086
      %v1088 = vlaneseq
      %v1089 = vshrl.u32 %v1088, 7
      %v1090 = vsub.s32 %v1087, %v1089
      %v1091 = vrot.slane %v905, %v1090
      %v1093 = vunpack.c.l.s4 1966171168
      %v1094 = vunpack.c.0.s8 %v1093
      %v1095 = vlaneseq
      %v1096 = vshrl.u32 %v1095, 7
      %v1097 = vsub.s32 %v1094, %v1096
      %v1098 = vrot.slane %v1084, %v1097
      %v1099 = vcombine.high %v1091, %v1091
      %v1100 = vcombine.high %v1098, %v1098
      %v1102 = vunpack.c.l.s4 1966171168
      %v1103 = vunpack.c.0.s8 %v1102
      %v1104 = vlaneseq
      %v1105 = vshrl.u32 %v1104, 7
      %v1106 = vsub.s32 %v1103, %v1105
      %v1107 = vrot.slane %v1091, %v1106
      %v1109 = vunpack.c.l.s4 1966171168
      %v1110 = vunpack.c.0.s8 %v1109
      %v1111 = vlaneseq
      %v1112 = vshrl.u32 %v1111, 7
      %v1113 = vsub.s32 %v1110, %v1112
      %v1114 = vrot.slane %v1098, %v1113
      %v1116 = vunpack.c.l.s4 1966171168
      %v1117 = vunpack.c.0.s8 %v1116
      %v1118 = vlaneseq
      %v1119 = vshrl.u32 %v1118, 7
      %v1120 = vsub.s32 %v1117, %v1119
      %v1121 = vrot.slane %v1099, %v1120
      %v1123 = vunpack.c.l.s4 1966171168
      %v1124 = vunpack.c.0.s8 %v1123
      %v1125 = vlaneseq
      %v1126 = vshrl.u32 %v1125, 7
      %v1127 = vsub.s32 %v1124, %v1126
      %v1128 = vrot.slane %v1100, %v1127
      %v1129 = vcombine.high %v1107, %v1107
      %v1130 = vcombine.high %v1114, %v1114
      %v1131 = vcombine.high %v1121, %v1121
      %v1132 = vcombine.high %v907, %v907
      %v1134 = vunpack.c.l.s4 1966171168
      %v1135 = vunpack.c.0.s8 %v1134
      %v1136 = vlaneseq
      %v1137 = vshrl.u32 %v1136, 7
      %v1138 = vsub.s32 %v1135, %v1137
      %v1139 = vrot.slane %v907, %v1138
      %v1141 = vunpack.c.l.s4 1966171168
      %v1142 = vunpack.c.0.s8 %v1141
      %v1143 = vlaneseq
      %v1144 = vshrl.u32 %v1143, 7
      %v1145 = vsub.s32 %v1142, %v1144
      %v1146 = vrot.slane %v1132, %v1145
      %v1147 = vcombine.high %v1139, %v1139
      %v1148 = vcombine.high %v1146, %v1146
      %v1150 = vunpack.c.l.s4 1966171168
      %v1151 = vunpack.c.0.s8 %v1150
      %v1152 = vlaneseq
      %v1153 = vshrl.u32 %v1152, 7
      %v1154 = vsub.s32 %v1151, %v1153
      %v1155 = vrot.slane %v1139, %v1154
      %v1157 = vunpack.c.l.s4 1966171168
      %v1158 = vunpack.c.0.s8 %v1157
      %v1159 = vlaneseq
      %v1160 = vshrl.u32 %v1159, 7
      %v1161 = vsub.s32 %v1158, %v1160
      %v1162 = vrot.slane %v1146, %v1161
      %v1164 = vunpack.c.l.s4 1966171168
      %v1165 = vunpack.c.0.s8 %v1164
      %v1166 = vlaneseq
      %v1167 = vshrl.u32 %v1166, 7
      %v1168 = vsub.s32 %v1165, %v1167
      %v1169 = vrot.slane %v1147, %v1168
      %v1171 = vunpack.c.l.s4 1966171168
      %v1172 = vunpack.c.0.s8 %v1171
      %v1173 = vlaneseq
      %v1174 = vshrl.u32 %v1173, 7
      %v1175 = vsub.s32 %v1172, %v1174
      %v1176 = vrot.slane %v1148, %v1175
      %v1177 = vcombine.high %v1155, %v1155
      %v1178 = vcombine.high %v1162, %v1162
      %v1179 = vcombine.high %v1169, %v1169
      %v1180 = vcombine.high %v909, %v909
      %v1182 = vunpack.c.l.s4 1966171168
      %v1183 = vunpack.c.0.s8 %v1182
      %v1184 = vlaneseq
      %v1185 = vshrl.u32 %v1184, 7
      %v1186 = vsub.s32 %v1183, %v1185
      %v1187 = vrot.slane %v909, %v1186
      %v1189 = vunpack.c.l.s4 1966171168
      %v1190 = vunpack.c.0.s8 %v1189
      %v1191 = vlaneseq
      %v1192 = vshrl.u32 %v1191, 7
      %v1193 = vsub.s32 %v1190, %v1192
      %v1194 = vrot.slane %v1180, %v1193
      %v1195 = vcombine.high %v1187, %v1187
      %v1196 = vcombine.high %v1194, %v1194
      %v1198 = vunpack.c.l.s4 1966171168
      %v1199 = vunpack.c.0.s8 %v1198
      %v1200 = vlaneseq
      %v1201 = vshrl.u32 %v1200, 7
      %v1202 = vsub.s32 %v1199, %v1201
      %v1203 = vrot.slane %v1187, %v1202
      %v1205 = vunpack.c.l.s4 1966171168
      %v1206 = vunpack.c.0.s8 %v1205
      %v1207 = vlaneseq
      %v1208 = vshrl.u32 %v1207, 7
      %v1209 = vsub.s32 %v1206, %v1208
      %v1210 = vrot.slane %v1194, %v1209
      %v1212 = vunpack.c.l.s4 1966171168
      %v1213 = vunpack.c.0.s8 %v1212
      %v1214 = vlaneseq
      %v1215 = vshrl.u32 %v1214, 7
      %v1216 = vsub.s32 %v1213, %v1215
      %v1217 = vrot.slane %v1195, %v1216
      %v1219 = vunpack.c.l.s4 1966171168
      %v1220 = vunpack.c.0.s8 %v1219
      %v1221 = vlaneseq
      %v1222 = vshrl.u32 %v1221, 7
      %v1223 = vsub.s32 %v1220, %v1222
      %v1224 = vrot.slane %v1196, %v1223
      %v1225 = vcombine.high %v1203, %v1203
      %v1226 = vcombine.high %v1210, %v1210
      %v1227 = vcombine.high %v1217, %v1217
      %v1228 = vcombine.high %v911, %v911
      %v1230 = vunpack.c.l.s4 1966171168
      %v1231 = vunpack.c.0.s8 %v1230
      %v1232 = vlaneseq
      %v1233 = vshrl.u32 %v1232, 7
      %v1234 = vsub.s32 %v1231, %v1233
      %v1235 = vrot.slane %v911, %v1234
      %v1237 = vunpack.c.l.s4 1966171168
      %v1238 = vunpack.c.0.s8 %v1237
      %v1239 = vlaneseq
      %v1240 = vshrl.u32 %v1239, 7
      %v1241 = vsub.s32 %v1238, %v1240
      %v1242 = vrot.slane %v1228, %v1241
      %v1243 = vcombine.high %v1235, %v1235
      %v1244 = vcombine.high %v1242, %v1242
      %v1246 = vunpack.c.l.s4 1966171168
      %v1247 = vunpack.c.0.s8 %v1246
      %v1248 = vlaneseq
      %v1249 = vshrl.u32 %v1248, 7
      %v1250 = vsub.s32 %v1247, %v1249
      %v1251 = vrot.slane %v1235, %v1250
      %v1253 = vunpack.c.l.s4 1966171168
      %v1254 = vunpack.c.0.s8 %v1253
      %v1255 = vlaneseq
      %v1256 = vshrl.u32 %v1255, 7
      %v1257 = vsub.s32 %v1254, %v1256
      %v1258 = vrot.slane %v1242, %v1257
      %v1260 = vunpack.c.l.s4 1966171168
      %v1261 = vunpack.c.0.s8 %v1260
      %v1262 = vlaneseq
      %v1263 = vshrl.u32 %v1262, 7
      %v1264 = vsub.s32 %v1261, %v1263
      %v1265 = vrot.slane %v1243, %v1264
      %v1267 = vunpack.c.l.s4 1966171168
      %v1268 = vunpack.c.0.s8 %v1267
      %v1269 = vlaneseq
      %v1270 = vshrl.u32 %v1269, 7
      %v1271 = vsub.s32 %v1268, %v1270
      %v1272 = vrot.slane %v1244, %v1271
      %v1273 = vcombine.high %v1251, %v1251
      %v1274 = vcombine.high %v1258, %v1258
      %v1275 = vcombine.high %v1265, %v1265
      %v1276 = vcombine.high %v913, %v913
      %v1278 = vunpack.c.l.s4 1966171168
      %v1279 = vunpack.c.0.s8 %v1278
      %v1280 = vlaneseq
      %v1281 = vshrl.u32 %v1280, 7
      %v1282 = vsub.s32 %v1279, %v1281
      %v1283 = vrot.slane %v913, %v1282
      %v1285 = vunpack.c.l.s4 1966171168
      %v1286 = vunpack.c.0.s8 %v1285
      %v1287 = vlaneseq
      %v1288 = vshrl.u32 %v1287, 7
      %v1289 = vsub.s32 %v1286, %v1288
      %v1290 = vrot.slane %v1276, %v1289
      %v1291 = vcombine.high %v1283, %v1283
      %v1292 = vcombine.high %v1290, %v1290
      %v1294 = vunpack.c.l.s4 1966171168
      %v1295 = vunpack.c.0.s8 %v1294
      %v1296 = vlaneseq
      %v1297 = vshrl.u32 %v1296, 7
      %v1298 = vsub.s32 %v1295, %v1297
      %v1299 = vrot.slane %v1283, %v1298
      %v1301 = vunpack.c.l.s4 1966171168
      %v1302 = vunpack.c.0.s8 %v1301
      %v1303 = vlaneseq
      %v1304 = vshrl.u32 %v1303, 7
      %v1305 = vsub.s32 %v1302, %v1304
      %v1306 = vrot.slane %v1290, %v1305
      %v1308 = vunpack.c.l.s4 1966171168
      %v1309 = vunpack.c.0.s8 %v1308
      %v1310 = vlaneseq
      %v1311 = vshrl.u32 %v1310, 7
      %v1312 = vsub.s32 %v1309, %v1311
      %v1313 = vrot.slane %v1291, %v1312
      %v1315 = vunpack.c.l.s4 1966171168
      %v1316 = vunpack.c.0.s8 %v1315
      %v1317 = vlaneseq
      %v1318 = vshrl.u32 %v1317, 7
      %v1319 = vsub.s32 %v1316, %v1318
      %v1320 = vrot.slane %v1292, %v1319
      %v1321 = vcombine.high %v1299, %v1299
      %v1322 = vcombine.high %v1306, %v1306
      %v1323 = vcombine.high %v1313, %v1313
      %v1324 = vcombine.high %v915, %v915
      %v1326 = vunpack.c.l.s4 1966171168
      %v1327 = vunpack.c.0.s8 %v1326
      %v1328 = vlaneseq
      %v1329 = vshrl.u32 %v1328, 7
      %v1330 = vsub.s32 %v1327, %v1329
      %v1331 = vrot.slane %v915, %v1330
      %v1333 = vunpack.c.l.s4 1966171168
      %v1334 = vunpack.c.0.s8 %v1333
      %v1335 = vlaneseq
      %v1336 = vshrl.u32 %v1335, 7
      %v1337 = vsub.s32 %v1334, %v1336
      %v1338 = vrot.slane %v1324, %v1337
      %v1339 = vcombine.high %v1331, %v1331
      %v1340 = vcombine.high %v1338, %v1338
      %v1342 = vunpack.c.l.s4 1966171168
      %v1343 = vunpack.c.0.s8 %v1342
      %v1344 = vlaneseq
      %v1345 = vshrl.u32 %v1344, 7
      %v1346 = vsub.s32 %v1343, %v1345
      %v1347 = vrot.slane %v1331, %v1346
      %v1349 = vunpack.c.l.s4 1966171168
      %v1350 = vunpack.c.0.s8 %v1349
      %v1351 = vlaneseq
      %v1352 = vshrl.u32 %v1351, 7
      %v1353 = vsub.s32 %v1350, %v1352
      %v1354 = vrot.slane %v1338, %v1353
      %v1356 = vunpack.c.l.s4 1966171168
      %v1357 = vunpack.c.0.s8 %v1356
      %v1358 = vlaneseq
      %v1359 = vshrl.u32 %v1358, 7
      %v1360 = vsub.s32 %v1357, %v1359
      %v1361 = vrot.slane %v1339, %v1360
      %v1363 = vunpack.c.l.s4 1966171168
      %v1364 = vunpack.c.0.s8 %v1363
      %v1365 = vlaneseq
      %v1366 = vshrl.u32 %v1365, 7
      %v1367 = vsub.s32 %v1364, %v1366
      %v1368 = vrot.slane %v1340, %v1367
      %v1369 = vcombine.high %v1347, %v1347
      %v1370 = vcombine.high %v1354, %v1354
      %v1371 = vcombine.high %v1361, %v1361
      %v1372 = vcombine.high %v917, %v917
      %v1374 = vunpack.c.l.s4 1966171168
      %v1375 = vunpack.c.0.s8 %v1374
      %v1376 = vlaneseq
      %v1377 = vshrl.u32 %v1376, 7
      %v1378 = vsub.s32 %v1375, %v1377
      %v1379 = vrot.slane %v917, %v1378
      %v1381 = vunpack.c.l.s4 1966171168
      %v1382 = vunpack.c.0.s8 %v1381
      %v1383 = vlaneseq
      %v1384 = vshrl.u32 %v1383, 7
      %v1385 = vsub.s32 %v1382, %v1384
      %v1386 = vrot.slane %v1372, %v1385
      %v1387 = vcombine.high %v1379, %v1379
      %v1388 = vcombine.high %v1386, %v1386
      %v1390 = vunpack.c.l.s4 1966171168
      %v1391 = vunpack.c.0.s8 %v1390
      %v1392 = vlaneseq
      %v1393 = vshrl.u32 %v1392, 7
      %v1394 = vsub.s32 %v1391, %v1393
      %v1395 = vrot.slane %v1379, %v1394
      %v1397 = vunpack.c.l.s4 1966171168
      %v1398 = vunpack.c.0.s8 %v1397
      %v1399 = vlaneseq
      %v1400 = vshrl.u32 %v1399, 7
      %v1401 = vsub.s32 %v1398, %v1400
      %v1402 = vrot.slane %v1386, %v1401
      %v1404 = vunpack.c.l.s4 1966171168
      %v1405 = vunpack.c.0.s8 %v1404
      %v1406 = vlaneseq
      %v1407 = vshrl.u32 %v1406, 7
      %v1408 = vsub.s32 %v1405, %v1407
      %v1409 = vrot.slane %v1387, %v1408
      %v1411 = vunpack.c.l.s4 1966171168
      %v1412 = vunpack.c.0.s8 %v1411
      %v1413 = vlaneseq
      %v1414 = vshrl.u32 %v1413, 7
      %v1415 = vsub.s32 %v1412, %v1414
      %v1416 = vrot.slane %v1388, %v1415
      %v1417 = vcombine.high %v1395, %v1395
      %v1418 = vcombine.high %v1402, %v1402
      %v1419 = vcombine.high %v1409, %v1409
      %v1420 = vcombine.high %v919, %v919
      %v1422 = vunpack.c.l.s4 1966171168
      %v1423 = vunpack.c.0.s8 %v1422
      %v1424 = vlaneseq
      %v1425 = vshrl.u32 %v1424, 7
      %v1426 = vsub.s32 %v1423, %v1425
      %v1427 = vrot.slane %v919, %v1426
      %v1429 = vunpack.c.l.s4 1966171168
      %v1430 = vunpack.c.0.s8 %v1429
      %v1431 = vlaneseq
      %v1432 = vshrl.u32 %v1431, 7
      %v1433 = vsub.s32 %v1430, %v1432
      %v1434 = vrot.slane %v1420, %v1433
      %v1435 = vcombine.high %v1427, %v1427
      %v1436 = vcombine.high %v1434, %v1434
      %v1438 = vunpack.c.l.s4 1966171168
      %v1439 = vunpack.c.0.s8 %v1438
      %v1440 = vlaneseq
      %v1441 = vshrl.u32 %v1440, 7
      %v1442 = vsub.s32 %v1439, %v1441
      %v1443 = vrot.slane %v1427, %v1442
      %v1445 = vunpack.c.l.s4 1966171168
      %v1446 = vunpack.c.0.s8 %v1445
      %v1447 = vlaneseq
      %v1448 = vshrl.u32 %v1447, 7
      %v1449 = vsub.s32 %v1446, %v1448
      %v1450 = vrot.slane %v1434, %v1449
      %v1452 = vunpack.c.l.s4 1966171168
      %v1453 = vunpack.c.0.s8 %v1452
      %v1454 = vlaneseq
      %v1455 = vshrl.u32 %v1454, 7
      %v1456 = vsub.s32 %v1453, %v1455
      %v1457 = vrot.slane %v1435, %v1456
      %v1459 = vunpack.c.l.s4 1966171168
      %v1460 = vunpack.c.0.s8 %v1459
      %v1461 = vlaneseq
      %v1462 = vshrl.u32 %v1461, 7
      %v1463 = vsub.s32 %v1460, %v1462
      %v1464 = vrot.slane %v1436, %v1463
      %v1465 = vcombine.high %v1443, %v1443
      %v1466 = vcombine.high %v1450, %v1450
      %v1467 = vcombine.high %v1457, %v1457
      %v1468 = vcombine.high %v921, %v921
      %v1470 = vunpack.c.l.s4 1966171168
      %v1471 = vunpack.c.0.s8 %v1470
      %v1472 = vlaneseq
      %v1473 = vshrl.u32 %v1472, 7
      %v1474 = vsub.s32 %v1471, %v1473
      %v1475 = vrot.slane %v921, %v1474
      %v1477 = vunpack.c.l.s4 1966171168
      %v1478 = vunpack.c.0.s8 %v1477
      %v1479 = vlaneseq
      %v1480 = vshrl.u32 %v1479, 7
      %v1481 = vsub.s32 %v1478, %v1480
      %v1482 = vrot.slane %v1468, %v1481
      %v1483 = vcombine.high %v1475, %v1475
      %v1484 = vcombine.high %v1482, %v1482
      %v1486 = vunpack.c.l.s4 1966171168
      %v1487 = vunpack.c.0.s8 %v1486
      %v1488 = vlaneseq
      %v1489 = vshrl.u32 %v1488, 7
      %v1490 = vsub.s32 %v1487, %v1489
      %v1491 = vrot.slane %v1475, %v1490
      %v1493 = vunpack.c.l.s4 1966171168
      %v1494 = vunpack.c.0.s8 %v1493
      %v1495 = vlaneseq
      %v1496 = vshrl.u32 %v1495, 7
      %v1497 = vsub.s32 %v1494, %v1496
      %v1498 = vrot.slane %v1482, %v1497
      %v1500 = vunpack.c.l.s4 1966171168
      %v1501 = vunpack.c.0.s8 %v1500
      %v1502 = vlaneseq
      %v1503 = vshrl.u32 %v1502, 7
      %v1504 = vsub.s32 %v1501, %v1503
      %v1505 = vrot.slane %v1483, %v1504
      %v1507 = vunpack.c.l.s4 1966171168
      %v1508 = vunpack.c.0.s8 %v1507
      %v1509 = vlaneseq
      %v1510 = vshrl.u32 %v1509, 7
      %v1511 = vsub.s32 %v1508, %v1510
      %v1512 = vrot.slane %v1484, %v1511
      %v1513 = vcombine.high %v1491, %v1491
      %v1514 = vcombine.high %v1498, %v1498
      %v1515 = vcombine.high %v1505, %v1505
      %v1516 = vcombine.high %v923, %v923
      %v1518 = vunpack.c.l.s4 1966171168
      %v1519 = vunpack.c.0.s8 %v1518
      %v1520 = vlaneseq
      %v1521 = vshrl.u32 %v1520, 7
      %v1522 = vsub.s32 %v1519, %v1521
      %v1523 = vrot.slane %v923, %v1522
      %v1525 = vunpack.c.l.s4 1966171168
      %v1526 = vunpack.c.0.s8 %v1525
      %v1527 = vlaneseq
      %v1528 = vshrl.u32 %v1527, 7
      %v1529 = vsub.s32 %v1526, %v1528
      %v1530 = vrot.slane %v1516, %v1529
      %v1531 = vcombine.high %v1523, %v1523
      %v1532 = vcombine.high %v1530, %v1530
      %v1534 = vunpack.c.l.s4 1966171168
      %v1535 = vunpack.c.0.s8 %v1534
      %v1536 = vlaneseq
      %v1537 = vshrl.u32 %v1536, 7
      %v1538 = vsub.s32 %v1535, %v1537
      %v1539 = vrot.slane %v1523, %v1538
      %v1541 = vunpack.c.l.s4 1966171168
      %v1542 = vunpack.c.0.s8 %v1541
      %v1543 = vlaneseq
      %v1544 = vshrl.u32 %v1543, 7
      %v1545 = vsub.s32 %v1542, %v1544
      %v1546 = vrot.slane %v1530, %v1545
      %v1548 = vunpack.c.l.s4 1966171168
      %v1549 = vunpack.c.0.s8 %v1548
      %v1550 = vlaneseq
      %v1551 = vshrl.u32 %v1550, 7
      %v1552 = vsub.s32 %v1549, %v1551
      %v1553 = vrot.slane %v1531, %v1552
      %v1555 = vunpack.c.l.s4 1966171168
      %v1556 = vunpack.c.0.s8 %v1555
      %v1557 = vlaneseq
      %v1558 = vshrl.u32 %v1557, 7
      %v1559 = vsub.s32 %v1556, %v1558
      %v1560 = vrot.slane %v1532, %v1559
      %v1561 = vcombine.high %v1539, %v1539
      %v1562 = vcombine.high %v1546, %v1546
      %v1563 = vcombine.high %v1553, %v1553
      %v1564 = vcombine.high %v925, %v925
      %v1566 = vunpack.c.l.s4 1966171168
      %v1567 = vunpack.c.0.s8 %v1566
      %v1568 = vlaneseq
      %v1569 = vshrl.u32 %v1568, 7
      %v1570 = vsub.s32 %v1567, %v1569
      %v1571 = vrot.slane %v925, %v1570
      %v1573 = vunpack.c.l.s4 1966171168
      %v1574 = vunpack.c.0.s8 %v1573
      %v1575 = vlaneseq
      %v1576 = vshrl.u32 %v1575, 7
      %v1577 = vsub.s32 %v1574, %v1576
      %v1578 = vrot.slane %v1564, %v1577
      %v1579 = vcombine.high %v1571, %v1571
      %v1580 = vcombine.high %v1578, %v1578
      %v1582 = vunpack.c.l.s4 1966171168
      %v1583 = vunpack.c.0.s8 %v1582
      %v1584 = vlaneseq
      %v1585 = vshrl.u32 %v1584, 7
      %v1586 = vsub.s32 %v1583, %v1585
      %v1587 = vrot.slane %v1571, %v1586
      %v1589 = vunpack.c.l.s4 1966171168
      %v1590 = vunpack.c.0.s8 %v1589
      %v1591 = vlaneseq
      %v1592 = vshrl.u32 %v1591, 7
      %v1593 = vsub.s32 %v1590, %v1592
      %v1594 = vrot.slane %v1578, %v1593
      %v1596 = vunpack.c.l.s4 1966171168
      %v1597 = vunpack.c.0.s8 %v1596
      %v1598 = vlaneseq
      %v1599 = vshrl.u32 %v1598, 7
      %v1600 = vsub.s32 %v1597, %v1599
      %v1601 = vrot.slane %v1579, %v1600
      %v1603 = vunpack.c.l.s4 1966171168
      %v1604 = vunpack.c.0.s8 %v1603
      %v1605 = vlaneseq
      %v1606 = vshrl.u32 %v1605, 7
      %v1607 = vsub.s32 %v1604, %v1606
      %v1608 = vrot.slane %v1580, %v1607
      %v1609 = vcombine.high %v1587, %v1587
      %v1610 = vcombine.high %v1594, %v1594
      %v1611 = vcombine.high %v1601, %v1601
      %v1613 = vlaneseq
      %v1614 = vshrl.u32 %v1613, 7
      %v1615 = vsub.s32 0, %v1614
      %v1616 = vrot.slane %v261, %v1615
      %v1618 = vcombine.low %v963, %v977
      %v1619 = vcombine.low %v985, %v987
      %v1620 = vcombine.low %v970, %v984
      %v1621 = vcombine.low %v986, %v1011
      %v1623 = vunpack.c.l.s4 1966171168
      %v1624 = vunpack.c.0.s8 %v1623
      %v1625 = vlaneseq
      %v1626 = vshrl.u32 %v1625, 7
      %v1627 = vsub.s32 %v1624, %v1626
      %v1628 = vrot.slane %v1618, %v1627
      %v1630 = vunpack.c.l.s4 1966171168
      %v1631 = vunpack.c.0.s8 %v1630
      %v1632 = vlaneseq
      %v1633 = vshrl.u32 %v1632, 7
      %v1634 = vsub.s32 %v1631, %v1633
      %v1635 = vrot.slane %v1619, %v1634
      %v1637 = vunpack.c.l.s4 1966171168
      %v1638 = vunpack.c.0.s8 %v1637
      %v1639 = vlaneseq
      %v1640 = vshrl.u32 %v1639, 7
      %v1641 = vsub.s32 %v1638, %v1640
      %v1642 = vrot.slane %v1620, %v1641
      %v1644 = vunpack.c.l.s4 1966171168
      %v1645 = vunpack.c.0.s8 %v1644
      %v1646 = vlaneseq
      %v1647 = vshrl.u32 %v1646, 7
      %v1648 = vsub.s32 %v1645, %v1647
      %v1649 = vrot.slane %v1621, %v1648
      %v1650 = vcombine.low %v1628, %v1635
      %v1651 = vcombine.low %v1642, %v1649
      %v1653 = vunpack.c.l.s4 1966171168
      %v1654 = vunpack.c.0.s8 %v1653
      %v1655 = vlaneseq
      %v1656 = vshrl.u32 %v1655, 7
      %v1657 = vsub.s32 %v1654, %v1656
      %v1658 = vrot.slane %v1650, %v1657
      %v1660 = vunpack.c.l.s4 1966171168
      %v1661 = vunpack.c.0.s8 %v1660
      %v1662 = vlaneseq
      %v1663 = vshrl.u32 %v1662, 7
      %v1664 = vsub.s32 %v1661, %v1663
      %v1665 = vrot.slane %v1651, %v1664
      %v1666 = vcombine.low %v1658, %v1665
      %v1667 = vcombine.low %v1025, %v1033
      %v1668 = vcombine.low %v1035, %v1018
      %v1669 = vcombine.low %v1032, %v1034
      %v1670 = vcombine.low %v1059, %v1073
      %v1672 = vunpack.c.l.s4 1966171168
      %v1673 = vunpack.c.0.s8 %v1672
      %v1674 = vlaneseq
      %v1675 = vshrl.u32 %v1674, 7
      %v1676 = vsub.s32 %v1673, %v1675
      %v1677 = vrot.slane %v1667, %v1676
      %v1679 = vunpack.c.l.s4 1966171168
      %v1680 = vunpack.c.0.s8 %v1679
      %v1681 = vlaneseq
      %v1682 = vshrl.u32 %v1681, 7
      %v1683 = vsub.s32 %v1680, %v1682
      %v1684 = vrot.slane %v1668, %v1683
      %v1686 = vunpack.c.l.s4 1966171168
      %v1687 = vunpack.c.0.s8 %v1686
      %v1688 = vlaneseq
      %v1689 = vshrl.u32 %v1688, 7
      %v1690 = vsub.s32 %v1687, %v1689
      %v1691 = vrot.slane %v1669, %v1690
      %v1693 = vunpack.c.l.s4 1966171168
      %v1694 = vunpack.c.0.s8 %v1693
      %v1695 = vlaneseq
      %v1696 = vshrl.u32 %v1695, 7
      %v1697 = vsub.s32 %v1694, %v1696
      %v1698 = vrot.slane %v1670, %v1697
      %v1699 = vcombine.low %v1677, %v1684
      %v1700 = vcombine.low %v1691, %v1698
      %v1702 = vunpack.c.l.s4 1966171168
      %v1703 = vunpack.c.0.s8 %v1702
      %v1704 = vlaneseq
      %v1705 = vshrl.u32 %v1704, 7
      %v1706 = vsub.s32 %v1703, %v1705
      %v1707 = vrot.slane %v1699, %v1706
      %v1709 = vunpack.c.l.s4 1966171168
      %v1710 = vunpack.c.0.s8 %v1709
      %v1711 = vlaneseq
      %v1712 = vshrl.u32 %v1711, 7
      %v1713 = vsub.s32 %v1710, %v1712
      %v1714 = vrot.slane %v1700, %v1713
      %v1715 = vcombine.low %v1707, %v1714
      %v1716 = vcombine.low %v1081, %v1083
      %v1717 = vcombine.low %v1066, %v1080
      %v1718 = vcombine.low %v1082, %v1107
      %v1719 = vcombine.low %v1121, %v1129
      %v1721 = vunpack.c.l.s4 1966171168
      %v1722 = vunpack.c.0.s8 %v1721
      %v1723 = vlaneseq
      %v1724 = vshrl.u32 %v1723, 7
      %v1725 = vsub.s32 %v1722, %v1724
      %v1726 = vrot.slane %v1716, %v1725
      %v1728 = vunpack.c.l.s4 1966171168
      %v1729 = vunpack.c.0.s8 %v1728
      %v1730 = vlaneseq
      %v1731 = vshrl.u32 %v1730, 7
      %v1732 = vsub.s32 %v1729, %v1731
      %v1733 = vrot.slane %v1717, %v1732
      %v1735 = vunpack.c.l.s4 1966171168
      %v1736 = vunpack.c.0.s8 %v1735
      %v1737 = vlaneseq
      %v1738 = vshrl.u32 %v1737, 7
      %v1739 = vsub.s32 %v1736, %v1738
      %v1740 = vrot.slane %v1718, %v1739
      %v1742 = vunpack.c.l.s4 1966171168
      %v1743 = vunpack.c.0.s8 %v1742
      %v1744 = vlaneseq
      %v1745 = vshrl.u32 %v1744, 7
      %v1746 = vsub.s32 %v1743, %v1745
      %v1747 = vrot.slane %v1719, %v1746
      %v1748 = vcombine.low %v1726, %v1733
      %v1749 = vcombine.low %v1740, %v1747
      %v1751 = vunpack.c.l.s4 1966171168
      %v1752 = vunpack.c.0.s8 %v1751
      %v1753 = vlaneseq
      %v1754 = vshrl.u32 %v1753, 7
      %v1755 = vsub.s32 %v1752, %v1754
      %v1756 = vrot.slane %v1748, %v1755
      %v1758 = vunpack.c.l.s4 1966171168
      %v1759 = vunpack.c.0.s8 %v1758
      %v1760 = vlaneseq
      %v1761 = vshrl.u32 %v1760, 7
      %v1762 = vsub.s32 %v1759, %v1761
      %v1763 = vrot.slane %v1749, %v1762
      %v1764 = vcombine.low %v1756, %v1763
      %v1765 = vcombine.low %v1131, %v1114
      %v1766 = vcombine.low %v1128, %v1130
      %v1767 = vcombine.low %v1155, %v1169
      %v1768 = vcombine.low %v1177, %v1179
      %v1770 = vunpack.c.l.s4 1966171168
      %v1771 = vunpack.c.0.s8 %v1770
      %v1772 = vlaneseq
      %v1773 = vshrl.u32 %v1772, 7
      %v1774 = vsub.s32 %v1771, %v1773
      %v1775 = vrot.slane %v1765, %v1774
      %v1777 = vunpack.c.l.s4 1966171168
      %v1778 = vunpack.c.0.s8 %v1777
      %v1779 = vlaneseq
      %v1780 = vshrl.u32 %v1779, 7
      %v1781 = vsub.s32 %v1778, %v1780
      %v1782 = vrot.slane %v1766, %v1781
      %v1784 = vunpack.c.l.s4 1966171168
      %v1785 = vunpack.c.0.s8 %v1784
      %v1786 = vlaneseq
      %v1787 = vshrl.u32 %v1786, 7
      %v1788 = vsub.s32 %v1785, %v1787
      %v1789 = vrot.slane %v1767, %v1788
      %v1791 = vunpack.c.l.s4 1966171168
      %v1792 = vunpack.c.0.s8 %v1791
      %v1793 = vlaneseq
      %v1794 = vshrl.u32 %v1793, 7
      %v1795 = vsub.s32 %v1792, %v1794
      %v1796 = vrot.slane %v1768, %v1795
      %v1797 = vcombine.low %v1775, %v1782
      %v1798 = vcombine.low %v1789, %v1796
      %v1800 = vunpack.c.l.s4 1966171168
      %v1801 = vunpack.c.0.s8 %v1800
      %v1802 = vlaneseq
      %v1803 = vshrl.u32 %v1802, 7
      %v1804 = vsub.s32 %v1801, %v1803
      %v1805 = vrot.slane %v1797, %v1804
      %v1807 = vunpack.c.l.s4 1966171168
      %v1808 = vunpack.c.0.s8 %v1807
      %v1809 = vlaneseq
      %v1810 = vshrl.u32 %v1809, 7
      %v1811 = vsub.s32 %v1808, %v1810
      %v1812 = vrot.slane %v1798, %v1811
      %v1813 = vcombine.low %v1805, %v1812
      %v1814 = vcombine.low %v1162, %v1176
      %v1815 = vcombine.low %v1178, %v1203
      %v1816 = vcombine.low %v1217, %v1225
      %v1817 = vcombine.low %v1227, %v1210
      %v1819 = vunpack.c.l.s4 1966171168
      %v1820 = vunpack.c.0.s8 %v1819
      %v1821 = vlaneseq
      %v1822 = vshrl.u32 %v1821, 7
      %v1823 = vsub.s32 %v1820, %v1822
      %v1824 = vrot.slane %v1814, %v1823
      %v1826 = vunpack.c.l.s4 1966171168
      %v1827 = vunpack.c.0.s8 %v1826
      %v1828 = vlaneseq
      %v1829 = vshrl.u32 %v1828, 7
      %v1830 = vsub.s32 %v1827, %v1829
      %v1831 = vrot.slane %v1815, %v1830
      %v1833 = vunpack.c.l.s4 1966171168
      %v1834 = vunpack.c.0.s8 %v1833
      %v1835 = vlaneseq
      %v1836 = vshrl.u32 %v1835, 7
      %v1837 = vsub.s32 %v1834, %v1836
      %v1838 = vrot.slane %v1816, %v1837
      %v1840 = vunpack.c.l.s4 1966171168
      %v1841 = vunpack.c.0.s8 %v1840
      %v1842 = vlaneseq
      %v1843 = vshrl.u32 %v1842, 7
      %v1844 = vsub.s32 %v1841, %v1843
      %v1845 = vrot.slane %v1817, %v1844
      %v1846 = vcombine.low %v1824, %v1831
      %v1847 = vcombine.low %v1838, %v1845
      %v1849 = vunpack.c.l.s4 1966171168
      %v1850 = vunpack.c.0.s8 %v1849
      %v1851 = vlaneseq
      %v1852 = vshrl.u32 %v1851, 7
      %v1853 = vsub.s32 %v1850, %v1852
      %v1854 = vrot.slane %v1846, %v1853
      %v1856 = vunpack.c.l.s4 1966171168
      %v1857 = vunpack.c.0.s8 %v1856
      %v1858 = vlaneseq
      %v1859 = vshrl.u32 %v1858, 7
      %v1860 = vsub.s32 %v1857, %v1859
      %v1861 = vrot.slane %v1847, %v1860
      %v1862 = vcombine.low %v1854, %v1861
      %v1863 = vcombine.low %v1224, %v1226
      %v1864 = vcombine.low %v1251, %v1265
      %v1865 = vcombine.low %v1273, %v1275
      %v1866 = vcombine.low %v1258, %v1272
      %v1868 = vunpack.c.l.s4 1966171168
      %v1869 = vunpack.c.0.s8 %v1868
      %v1870 = vlaneseq
      %v1871 = vshrl.u32 %v1870, 7
      %v1872 = vsub.s32 %v1869, %v1871
      %v1873 = vrot.slane %v1863, %v1872
      %v1875 = vunpack.c.l.s4 1966171168
      %v1876 = vunpack.c.0.s8 %v1875
      %v1877 = vlaneseq
      %v1878 = vshrl.u32 %v1877, 7
      %v1879 = vsub.s32 %v1876, %v1878
      %v1880 = vrot.slane %v1864, %v1879
      %v1882 = vunpack.c.l.s4 1966171168
      %v1883 = vunpack.c.0.s8 %v1882
      %v1884 = vlaneseq
      %v1885 = vshrl.u32 %v1884, 7
      %v1886 = vsub.s32 %v1883, %v1885
      %v1887 = vrot.slane %v1865, %v1886
      %v1889 = vunpack.c.l.s4 1966171168
      %v1890 = vunpack.c.0.s8 %v1889
      %v1891 = vlaneseq
      %v1892 = vshrl.u32 %v1891, 7
      %v1893 = vsub.s32 %v1890, %v1892
      %v1894 = vrot.slane %v1866, %v1893
      %v1895 = vcombine.low %v1873, %v1880
      %v1896 = vcombine.low %v1887, %v1894
      %v1898 = vunpack.c.l.s4 1966171168
      %v1899 = vunpack.c.0.s8 %v1898
      %v1900 = vlaneseq
      %v1901 = vshrl.u32 %v1900, 7
      %v1902 = vsub.s32 %v1899, %v1901
      %v1903 = vrot.slane %v1895, %v1902
      %v1905 = vunpack.c.l.s4 1966171168
      %v1906 = vunpack.c.0.s8 %v1905
      %v1907 = vlaneseq
      %v1908 = vshrl.u32 %v1907, 7
      %v1909 = vsub.s32 %v1906, %v1908
      %v1910 = vrot.slane %v1896, %v1909
      %v1911 = vcombine.low %v1903, %v1910
      %v1912 = vcombine.low %v1274, %v1299
      %v1913 = vcombine.low %v1313, %v1321
      %v1914 = vcombine.low %v1323, %v1306
      %v1915 = vcombine.low %v1320, %v1322
      %v1917 = vunpack.c.l.s4 1966171168
      %v1918 = vunpack.c.0.s8 %v1917
      %v1919 = vlaneseq
      %v1920 = vshrl.u32 %v1919, 7
      %v1921 = vsub.s32 %v1918, %v1920
      %v1922 = vrot.slane %v1912, %v1921
      %v1924 = vunpack.c.l.s4 1966171168
      %v1925 = vunpack.c.0.s8 %v1924
      %v1926 = vlaneseq
      %v1927 = vshrl.u32 %v1926, 7
      %v1928 = vsub.s32 %v1925, %v1927
      %v1929 = vrot.slane %v1913, %v1928
      %v1931 = vunpack.c.l.s4 1966171168
      %v1932 = vunpack.c.0.s8 %v1931
      %v1933 = vlaneseq
      %v1934 = vshrl.u32 %v1933, 7
      %v1935 = vsub.s32 %v1932, %v1934
      %v1936 = vrot.slane %v1914, %v1935
      %v1938 = vunpack.c.l.s4 1966171168
      %v1939 = vunpack.c.0.s8 %v1938
      %v1940 = vlaneseq
      %v1941 = vshrl.u32 %v1940, 7
      %v1942 = vsub.s32 %v1939, %v1941
      %v1943 = vrot.slane %v1915, %v1942
      %v1944 = vcombine.low %v1922, %v1929
      %v1945 = vcombine.low %v1936, %v1943
      %v1947 = vunpack.c.l.s4 1966171168
      %v1948 = vunpack.c.0.s8 %v1947
      %v1949 = vlaneseq
      %v1950 = vshrl.u32 %v1949, 7
      %v1951 = vsub.s32 %v1948, %v1950
      %v1952 = vrot.slane %v1944, %v1951
      %v1954 = vunpack.c.l.s4 1966171168
      %v1955 = vunpack.c.0.s8 %v1954
      %v1956 = vlaneseq
      %v1957 = vshrl.u32 %v1956, 7
      %v1958 = vsub.s32 %v1955, %v1957
      %v1959 = vrot.slane %v1945, %v1958
      %v1960 = vcombine.low %v1952, %v1959
      %v1961 = vcombine.low %v1347, %v1361
      %v1962 = vcombine.low %v1369, %v1371
      %v1963 = vcombine.low %v1354, %v1368
      %v1964 = vcombine.low %v1370, %v1395
      %v1966 = vunpack.c.l.s4 1966171168
      %v1967 = vunpack.c.0.s8 %v1966
      %v1968 = vlaneseq
      %v1969 = vshrl.u32 %v1968, 7
      %v1970 = vsub.s32 %v1967, %v1969
      %v1971 = vrot.slane %v1961, %v1970
      %v1973 = vunpack.c.l.s4 1966171168
      %v1974 = vunpack.c.0.s8 %v1973
      %v1975 = vlaneseq
      %v1976 = vshrl.u32 %v1975, 7
      %v1977 = vsub.s32 %v1974, %v1976
      %v1978 = vrot.slane %v1962, %v1977
      %v1980 = vunpack.c.l.s4 1966171168
      %v1981 = vunpack.c.0.s8 %v1980
      %v1982 = vlaneseq
      %v1983 = vshrl.u32 %v1982, 7
      %v1984 = vsub.s32 %v1981, %v1983
      %v1985 = vrot.slane %v1963, %v1984
      %v1987 = vunpack.c.l.s4 1966171168
      %v1988 = vunpack.c.0.s8 %v1987
      %v1989 = vlaneseq
      %v1990 = vshrl.u32 %v1989, 7
      %v1991 = vsub.s32 %v1988, %v1990
      %v1992 = vrot.slane %v1964, %v1991
      %v1993 = vcombine.low %v1971, %v1978
      %v1994 = vcombine.low %v1985, %v1992
      %v1996 = vunpack.c.l.s4 1966171168
      %v1997 = vunpack.c.0.s8 %v1996
      %v1998 = vlaneseq
      %v1999 = vshrl.u32 %v1998, 7
      %v2000 = vsub.s32 %v1997, %v1999
      %v2001 = vrot.slane %v1993, %v2000
      %v2003 = vunpack.c.l.s4 1966171168
      %v2004 = vunpack.c.0.s8 %v2003
      %v2005 = vlaneseq
      %v2006 = vshrl.u32 %v2005, 7
      %v2007 = vsub.s32 %v2004, %v2006
      %v2008 = vrot.slane %v1994, %v2007
      %v2009 = vcombine.low %v2001, %v2008
      %v2010 = vcombine.low %v1409, %v1417
      %v2011 = vcombine.low %v1419, %v1402
      %v2012 = vcombine.low %v1416, %v1418
      %v2013 = vcombine.low %v1443, %v1457
      %v2015 = vunpack.c.l.s4 1966171168
      %v2016 = vunpack.c.0.s8 %v2015
      %v2017 = vlaneseq
      %v2018 = vshrl.u32 %v2017, 7
      %v2019 = vsub.s32 %v2016, %v2018
      %v2020 = vrot.slane %v2010, %v2019
      %v2022 = vunpack.c.l.s4 1966171168
      %v2023 = vunpack.c.0.s8 %v2022
      %v2024 = vlaneseq
      %v2025 = vshrl.u32 %v2024, 7
      %v2026 = vsub.s32 %v2023, %v2025
      %v2027 = vrot.slane %v2011, %v2026
      %v2029 = vunpack.c.l.s4 1966171168
      %v2030 = vunpack.c.0.s8 %v2029
      %v2031 = vlaneseq
      %v2032 = vshrl.u32 %v2031, 7
      %v2033 = vsub.s32 %v2030, %v2032
      %v2034 = vrot.slane %v2012, %v2033
      %v2036 = vunpack.c.l.s4 1966171168
      %v2037 = vunpack.c.0.s8 %v2036
      %v2038 = vlaneseq
      %v2039 = vshrl.u32 %v2038, 7
      %v2040 = vsub.s32 %v2037, %v2039
      %v2041 = vrot.slane %v2013, %v2040
      %v2042 = vcombine.low %v2020, %v2027
      %v2043 = vcombine.low %v2034, %v2041
      %v2045 = vunpack.c.l.s4 1966171168
      %v2046 = vunpack.c.0.s8 %v2045
      %v2047 = vlaneseq
      %v2048 = vshrl.u32 %v2047, 7
      %v2049 = vsub.s32 %v2046, %v2048
      %v2050 = vrot.slane %v2042, %v2049
      %v2052 = vunpack.c.l.s4 1966171168
      %v2053 = vunpack.c.0.s8 %v2052
      %v2054 = vlaneseq
      %v2055 = vshrl.u32 %v2054, 7
      %v2056 = vsub.s32 %v2053, %v2055
      %v2057 = vrot.slane %v2043, %v2056
      %v2058 = vcombine.low %v2050, %v2057
      %v2059 = vcombine.low %v1465, %v1467
      %v2060 = vcombine.low %v1450, %v1464
      %v2061 = vcombine.low %v1466, %v1491
      %v2062 = vcombine.low %v1505, %v1513
      %v2064 = vunpack.c.l.s4 1966171168
      %v2065 = vunpack.c.0.s8 %v2064
      %v2066 = vlaneseq
      %v2067 = vshrl.u32 %v2066, 7
      %v2068 = vsub.s32 %v2065, %v2067
      %v2069 = vrot.slane %v2059, %v2068
      %v2071 = vunpack.c.l.s4 1966171168
      %v2072 = vunpack.c.0.s8 %v2071
      %v2073 = vlaneseq
      %v2074 = vshrl.u32 %v2073, 7
      %v2075 = vsub.s32 %v2072, %v2074
      %v2076 = vrot.slane %v2060, %v2075
      %v2078 = vunpack.c.l.s4 1966171168
      %v2079 = vunpack.c.0.s8 %v2078
      %v2080 = vlaneseq
      %v2081 = vshrl.u32 %v2080, 7
      %v2082 = vsub.s32 %v2079, %v2081
      %v2083 = vrot.slane %v2061, %v2082
      %v2085 = vunpack.c.l.s4 1966171168
      %v2086 = vunpack.c.0.s8 %v2085
      %v2087 = vlaneseq
      %v2088 = vshrl.u32 %v2087, 7
      %v2089 = vsub.s32 %v2086, %v2088
      %v2090 = vrot.slane %v2062, %v2089
      %v2091 = vcombine.low %v2069, %v2076
      %v2092 = vcombine.low %v2083, %v2090
      %v2094 = vunpack.c.l.s4 1966171168
      %v2095 = vunpack.c.0.s8 %v2094
      %v2096 = vlaneseq
      %v2097 = vshrl.u32 %v2096, 7
      %v2098 = vsub.s32 %v2095, %v2097
      %v2099 = vrot.slane %v2091, %v2098
      %v2101 = vunpack.c.l.s4 1966171168
      %v2102 = vunpack.c.0.s8 %v2101
      %v2103 = vlaneseq
      %v2104 = vshrl.u32 %v2103, 7
      %v2105 = vsub.s32 %v2102, %v2104
      %v2106 = vrot.slane %v2092, %v2105
      %v2107 = vcombine.low %v2099, %v2106
      %v2108 = vcombine.low %v1515, %v1498
      %v2109 = vcombine.low %v1512, %v1514
      %v2110 = vcombine.low %v1539, %v1553
      %v2111 = vcombine.low %v1561, %v1563
      %v2113 = vunpack.c.l.s4 1966171168
      %v2114 = vunpack.c.0.s8 %v2113
      %v2115 = vlaneseq
      %v2116 = vshrl.u32 %v2115, 7
      %v2117 = vsub.s32 %v2114, %v2116
      %v2118 = vrot.slane %v2108, %v2117
      %v2120 = vunpack.c.l.s4 1966171168
      %v2121 = vunpack.c.0.s8 %v2120
      %v2122 = vlaneseq
      %v2123 = vshrl.u32 %v2122, 7
      %v2124 = vsub.s32 %v2121, %v2123
      %v2125 = vrot.slane %v2109, %v2124
      %v2127 = vunpack.c.l.s4 1966171168
      %v2128 = vunpack.c.0.s8 %v2127
      %v2129 = vlaneseq
      %v2130 = vshrl.u32 %v2129, 7
      %v2131 = vsub.s32 %v2128, %v2130
      %v2132 = vrot.slane %v2110, %v2131
      %v2134 = vunpack.c.l.s4 1966171168
      %v2135 = vunpack.c.0.s8 %v2134
      %v2136 = vlaneseq
      %v2137 = vshrl.u32 %v2136, 7
      %v2138 = vsub.s32 %v2135, %v2137
      %v2139 = vrot.slane %v2111, %v2138
      %v2140 = vcombine.low %v2118, %v2125
      %v2141 = vcombine.low %v2132, %v2139
      %v2143 = vunpack.c.l.s4 1966171168
      %v2144 = vunpack.c.0.s8 %v2143
      %v2145 = vlaneseq
      %v2146 = vshrl.u32 %v2145, 7
      %v2147 = vsub.s32 %v2144, %v2146
      %v2148 = vrot.slane %v2140, %v2147
      %v2150 = vunpack.c.l.s4 1966171168
      %v2151 = vunpack.c.0.s8 %v2150
      %v2152 = vlaneseq
      %v2153 = vshrl.u32 %v2152, 7
      %v2154 = vsub.s32 %v2151, %v2153
      %v2155 = vrot.slane %v2141, %v2154
      %v2156 = vcombine.low %v2148, %v2155
      %v2157 = vcombine.low %v1546, %v1560
      %v2158 = vcombine.low %v1562, %v1587
      %v2159 = vcombine.low %v1601, %v1609
      %v2160 = vcombine.low %v1611, %v1594
      %v2162 = vunpack.c.l.s4 1966171168
      %v2163 = vunpack.c.0.s8 %v2162
      %v2164 = vlaneseq
      %v2165 = vshrl.u32 %v2164, 7
      %v2166 = vsub.s32 %v2163, %v2165
      %v2167 = vrot.slane %v2157, %v2166
      %v2169 = vunpack.c.l.s4 1966171168
      %v2170 = vunpack.c.0.s8 %v2169
      %v2171 = vlaneseq
      %v2172 = vshrl.u32 %v2171, 7
      %v2173 = vsub.s32 %v2170, %v2172
      %v2174 = vrot.slane %v2158, %v2173
      %v2176 = vunpack.c.l.s4 1966171168
      %v2177 = vunpack.c.0.s8 %v2176
      %v2178 = vlaneseq
      %v2179 = vshrl.u32 %v2178, 7
      %v2180 = vsub.s32 %v2177, %v2179
      %v2181 = vrot.slane %v2159, %v2180
      %v2183 = vunpack.c.l.s4 1966171168
      %v2184 = vunpack.c.0.s8 %v2183
      %v2185 = vlaneseq
      %v2186 = vshrl.u32 %v2185, 7
      %v2187 = vsub.s32 %v2184, %v2186
      %v2188 = vrot.slane %v2160, %v2187
      %v2189 = vcombine.low %v2167, %v2174
      %v2190 = vcombine.low %v2181, %v2188
      %v2192 = vunpack.c.l.s4 1966171168
      %v2193 = vunpack.c.0.s8 %v2192
      %v2194 = vlaneseq
      %v2195 = vshrl.u32 %v2194, 7
      %v2196 = vsub.s32 %v2193, %v2195
      %v2197 = vrot.slane %v2189, %v2196
      %v2199 = vunpack.c.l.s4 1966171168
      %v2200 = vunpack.c.0.s8 %v2199
      %v2201 = vlaneseq
      %v2202 = vshrl.u32 %v2201, 7
      %v2203 = vsub.s32 %v2200, %v2202
      %v2204 = vrot.slane %v2190, %v2203
      %v2205 = vcombine.low %v2197, %v2204
      %v2206 = vcombine.low %v1608, %v1610
      %v2208 = vunpack.c.l.s4 1966171168
      %v2209 = vunpack.c.0.s8 %v2208
      %v2210 = vlaneseq
      %v2211 = vshrl.u32 %v2210, 7
      %v2212 = vsub.s32 %v2209, %v2211
      %v2213 = vrot.slane %v2206, %v2212
      %v2215 = vunpack.c.l.s4 1966171168
      %v2216 = vunpack.c.0.s8 %v2215
      %v2217 = vlaneseq
      %v2218 = vshrl.u32 %v2217, 7
      %v2219 = vsub.s32 %v2216, %v2218
      %v2220 = vrot.slane %v2213, %v2219
      %v2226 = vunpack.c.l.b16 %v256
      %v2227 = vunpack.c.l.b16 %v257
      %v2228 = vunpack.c.l.b16 %v258
      %v2229 = vunpack.c.l.b16 %v259
      %v2230 = vunpack.c.l.b16 %v260
      %v2231 = vpack.c.b16 %v2227, %v2226
      %v2232 = vpack.c.b16 %v2229, %v2228
      %v2233 = vpack.c.b16 %v2230, %v2230
      %vm2236 = vcmask 293888
      %v2238 = vsel %vm2236, %v1666, 0
      %v2241 = vsel %vm2236, %v1715, 0
      %v2244 = vsel %vm2236, %v1764, 0
      %v2247 = vsel %vm2236, %v1813, 0
      %v2250 = vsel %vm2236, %v1862, 0
      %v2253 = vsel %vm2236, %v1911, 0
      %v2256 = vsel %vm2236, %v1960, 0
      %v2259 = vsel %vm2236, %v2009, 0
      %v2262 = vsel %vm2236, %v2058, 0
      %v2265 = vsel %vm2236, %v2107, 0
      %v2268 = vsel %vm2236, %v2156, 0
      %v2271 = vsel %vm2236, %v2205, 0
      %v2274 = vsel %vm2236, %v2220, 0
      %vm2276 = vcmask 1041408
      %v2278 = vsel %vm2276, %v2233, 0
      %2280 = vmatprep.subr.bf16.mxu0 0
      %2281 = vmatpush1.bf16.msra.mxu0 %v2231
      %2282 = vmatprep.subr.bf16.mxu0 0
      %2283 = vmatpush1.bf16.msra.mxu0 %v2232
      %2284 = vmatprep.subr.bf16.mxu0 0
      %2285 = vmatpush1.bf16.msra.mxu0 %v2278
      %2286 = vmatprep.subr.bf16.mxu0 0
      %2287 = vmatpush1.bf16.msra.mxu0 0
      %2288 = vmatprep.subr.bf16.mxu0 0
      %2289 = vmatpush1.bf16.msra.mxu0 0
      %2290 = vmatprep.subr.bf16.mxu0 0
      %2291 = vmatpush1.bf16.msra.mxu0 0
      %2292 = vmatprep.subr.bf16.mxu0 0
      %2293 = vmatpush1.bf16.msra.mxu0 0
      %2294 = vmatprep.subr.bf16.mxu0 0
      %2295 = vmatpush1.bf16.msra.mxu0 0
      %2296 = vmatprep.subr.bf16.mxu0 0
      %2297 = vmatpush1.bf16.msra.mxu0 0
      %2298 = vmatprep.subr.bf16.mxu0 0
      %2299 = vmatpush1.bf16.msra.mxu0 0
      %2300 = vmatprep.subr.bf16.mxu0 0
      %2301 = vmatpush1.bf16.msra.mxu0 0
      %2302 = vmatprep.subr.bf16.mxu0 0
      %2303 = vmatpush1.bf16.msra.mxu0 0
      %2304 = vmatprep.subr.bf16.mxu0 0
      %2305 = vmatpush1.bf16.msra.mxu0 0
      %2306 = vmatprep.subr.bf16.mxu0 0
      %2307 = vmatpush1.bf16.msra.mxu0 0
      %2308 = vmatprep.subr.bf16.mxu0 0
      %2309 = vmatpush1.bf16.msra.mxu0 0
      %2310 = vmatprep.subr.bf16.mxu0 0
      %2311 = vmatpush1.bf16.msra.mxu0 0
      %2312 = vmatprep.mubr.bf16.mxu0 0
      %2313 = vmatmul.mubr.bf16.gmra.mrb[0].mxu0 %v2238
      %v2314 = vpop.f32.mrb[0].mxu0
      %v2315 = vadd.f32 %v1616, %v2314
      %v2316 = vpop.f32.mrb[0].mxu0
      %v2317 = vpop.f32.mrb[0].mxu0
      %v2318 = vadd.f32 %v1616, %v2317
      %v2319 = vpop.f32.mrb[0].mxu0
      %2320 = vmatprep.mubr.bf16.mxu0 0
      %2321 = vmatmul.mubr.bf16.gmra.mrb[0].mxu0 %v2241
      %v2322 = vpop.f32.mrb[0].mxu0
      %v2323 = vadd.f32 %v1616, %v2322
      %v2324 = vpop.f32.mrb[0].mxu0
      %v2325 = vpop.f32.mrb[0].mxu0
      %v2326 = vadd.f32 %v1616, %v2325
      %v2327 = vpop.f32.mrb[0].mxu0
      %2328 = vmatprep.mubr.bf16.mxu0 0
      %2329 = vmatmul.mubr.bf16.gmra.mrb[0].mxu0 %v2244
      %v2330 = vpop.f32.mrb[0].mxu0
      %v2331 = vadd.f32 %v1616, %v2330
      %v2332 = vpop.f32.mrb[0].mxu0
      %v2333 = vpop.f32.mrb[0].mxu0
      %v2334 = vadd.f32 %v1616, %v2333
      %v2335 = vpop.f32.mrb[0].mxu0
      %2336 = vmatprep.mubr.bf16.mxu0 0
      %2337 = vmatmul.mubr.bf16.gmra.mrb[0].mxu0 %v2247
      %v2338 = vpop.f32.mrb[0].mxu0
      %v2339 = vadd.f32 %v1616, %v2338
      %v2340 = vpop.f32.mrb[0].mxu0
      %v2341 = vpop.f32.mrb[0].mxu0
      %v2342 = vadd.f32 %v1616, %v2341
      %v2343 = vpop.f32.mrb[0].mxu0
      %2344 = vmatprep.mubr.bf16.mxu0 0
      %2345 = vmatmul.mubr.bf16.gmra.mrb[0].mxu0 %v2250
      %v2346 = vpop.f32.mrb[0].mxu0
      %v2347 = vadd.f32 %v1616, %v2346
      %v2348 = vpop.f32.mrb[0].mxu0
      %v2349 = vpop.f32.mrb[0].mxu0
      %v2350 = vadd.f32 %v1616, %v2349
      %v2351 = vpop.f32.mrb[0].mxu0
      %2352 = vmatprep.mubr.bf16.mxu0 0
      %2353 = vmatmul.mubr.bf16.gmra.mrb[0].mxu0 %v2253
      %v2354 = vpop.f32.mrb[0].mxu0
      %v2355 = vadd.f32 %v1616, %v2354
      %v2356 = vpop.f32.mrb[0].mxu0
      %v2357 = vpop.f32.mrb[0].mxu0
      %v2358 = vadd.f32 %v1616, %v2357
      %v2359 = vpop.f32.mrb[0].mxu0
      %2360 = vmatprep.mubr.bf16.mxu0 0
      %2361 = vmatmul.mubr.bf16.gmra.mrb[0].mxu0 %v2256
      %v2362 = vpop.f32.mrb[0].mxu0
      %v2363 = vadd.f32 %v1616, %v2362
      %v2364 = vpop.f32.mrb[0].mxu0
      %v2365 = vpop.f32.mrb[0].mxu0
      %v2366 = vadd.f32 %v1616, %v2365
      %v2367 = vpop.f32.mrb[0].mxu0
      %2368 = vmatprep.mubr.bf16.mxu0 0
      %2369 = vmatmul.mubr.bf16.gmra.mrb[0].mxu0 %v2259
      %v2370 = vpop.f32.mrb[0].mxu0
      %v2371 = vadd.f32 %v1616, %v2370
      %v2372 = vpop.f32.mrb[0].mxu0
      %v2373 = vpop.f32.mrb[0].mxu0
      %v2374 = vadd.f32 %v1616, %v2373
      %v2375 = vpop.f32.mrb[0].mxu0
      %2376 = vmatprep.mubr.bf16.mxu0 0
      %2377 = vmatmul.mubr.bf16.gmra.mrb[0].mxu0 %v2262
      %v2378 = vpop.f32.mrb[0].mxu0
      %v2379 = vadd.f32 %v1616, %v2378
      %v2380 = vpop.f32.mrb[0].mxu0
      %v2381 = vpop.f32.mrb[0].mxu0
      %v2382 = vadd.f32 %v1616, %v2381
      %v2383 = vpop.f32.mrb[0].mxu0
      %2384 = vmatprep.mubr.bf16.mxu0 0
      %2385 = vmatmul.mubr.bf16.gmra.mrb[0].mxu0 %v2265
      %v2386 = vpop.f32.mrb[0].mxu0
      %v2387 = vadd.f32 %v1616, %v2386
      %v2388 = vpop.f32.mrb[0].mxu0
      %v2389 = vpop.f32.mrb[0].mxu0
      %v2390 = vadd.f32 %v1616, %v2389
      %v2391 = vpop.f32.mrb[0].mxu0
      %2392 = vmatprep.mubr.bf16.mxu0 0
      %2393 = vmatmul.mubr.bf16.gmra.mrb[0].mxu0 %v2268
      %v2394 = vpop.f32.mrb[0].mxu0
      %v2395 = vadd.f32 %v1616, %v2394
      %v2396 = vpop.f32.mrb[0].mxu0
      %v2397 = vpop.f32.mrb[0].mxu0
      %v2398 = vadd.f32 %v1616, %v2397
      %v2399 = vpop.f32.mrb[0].mxu0
      %2400 = vmatprep.mubr.bf16.mxu0 0
      %2401 = vmatmul.mubr.bf16.gmra.mrb[0].mxu0 %v2271
      %v2402 = vpop.f32.mrb[0].mxu0
      %v2403 = vadd.f32 %v1616, %v2402
      %v2404 = vpop.f32.mrb[0].mxu0
      %v2405 = vpop.f32.mrb[0].mxu0
      %v2406 = vadd.f32 %v1616, %v2405
      %v2407 = vpop.f32.mrb[0].mxu0
      %2408 = vmatprep.mubr.bf16.mxu0 0
      %2409 = vmatmul.mubr.bf16.gmra.mrb[0].mxu0 %v2274
      %v2410 = vpop.f32.mrb[0].mxu0
      %v2411 = vadd.f32 %v1616, %v2410
      %v2412 = vpop.f32.mrb[0].mxu0
      %v2413 = vpop.f32.mrb[0].mxu0
      %v2414 = vpop.f32.mrb[0].mxu0
      %2415 = vdwg.mxu0
      %v2416 = vmax.f32 %v2315, 0.0
      %v2417 = vmax.f32 %v2318, 0.0
      %v2418 = vmax.f32 %v2323, 0.0
      %v2419 = vmax.f32 %v2326, 0.0
      %v2420 = vmax.f32 %v2331, 0.0
      %v2421 = vmax.f32 %v2334, 0.0
      %v2422 = vmax.f32 %v2339, 0.0
      %v2423 = vmax.f32 %v2342, 0.0
      %v2424 = vmax.f32 %v2347, 0.0
      %v2425 = vmax.f32 %v2350, 0.0
      %v2426 = vmax.f32 %v2355, 0.0
      %v2427 = vmax.f32 %v2358, 0.0
      %v2428 = vmax.f32 %v2363, 0.0
      %v2429 = vmax.f32 %v2366, 0.0
      %v2430 = vmax.f32 %v2371, 0.0
      %v2431 = vmax.f32 %v2374, 0.0
      %v2432 = vmax.f32 %v2379, 0.0
      %v2433 = vmax.f32 %v2382, 0.0
      %v2434 = vmax.f32 %v2387, 0.0
      %v2435 = vmax.f32 %v2390, 0.0
      %v2436 = vmax.f32 %v2395, 0.0
      %v2437 = vmax.f32 %v2398, 0.0
      %v2438 = vmax.f32 %v2403, 0.0
      %v2439 = vmax.f32 %v2406, 0.0
      %v2440 = vmax.f32 %v2411, 0.0
      %v2466 = vcombine.high %v2416, %v2416
      %v2468 = vunpack.c.l.s4 1983009808
      %v2469 = vunpack.c.0.s8 %v2468
      %v2470 = vlaneseq
      %v2471 = vshrl.u32 %v2470, 7
      %v2472 = vsub.s32 %v2469, %v2471
      %v2473 = vrot.slane %v2416, %v2472
      %v2475 = vunpack.c.l.s4 1983009808
      %v2476 = vunpack.c.0.s8 %v2475
      %v2477 = vlaneseq
      %v2478 = vshrl.u32 %v2477, 7
      %v2479 = vsub.s32 %v2476, %v2478
      %v2480 = vrot.slane %v2466, %v2479
      %v2481 = vcombine.high %v2473, %v2473
      %v2482 = vcombine.high %v2480, %v2480
      %v2483 = vcombine.high %v2417, %v2417
      %v2485 = vunpack.c.l.s4 1983009808
      %v2486 = vunpack.c.0.s8 %v2485
      %v2487 = vlaneseq
      %v2488 = vshrl.u32 %v2487, 7
      %v2489 = vsub.s32 %v2486, %v2488
      %v2490 = vrot.slane %v2417, %v2489
      %v2492 = vunpack.c.l.s4 1983009808
      %v2493 = vunpack.c.0.s8 %v2492
      %v2494 = vlaneseq
      %v2495 = vshrl.u32 %v2494, 7
      %v2496 = vsub.s32 %v2493, %v2495
      %v2497 = vrot.slane %v2483, %v2496
      %v2498 = vcombine.high %v2490, %v2490
      %v2499 = vcombine.high %v2497, %v2497
      %v2500 = vcombine.high %v2418, %v2418
      %v2502 = vunpack.c.l.s4 1983009808
      %v2503 = vunpack.c.0.s8 %v2502
      %v2504 = vlaneseq
      %v2505 = vshrl.u32 %v2504, 7
      %v2506 = vsub.s32 %v2503, %v2505
      %v2507 = vrot.slane %v2418, %v2506
      %v2509 = vunpack.c.l.s4 1983009808
      %v2510 = vunpack.c.0.s8 %v2509
      %v2511 = vlaneseq
      %v2512 = vshrl.u32 %v2511, 7
      %v2513 = vsub.s32 %v2510, %v2512
      %v2514 = vrot.slane %v2500, %v2513
      %v2515 = vcombine.high %v2507, %v2507
      %v2516 = vcombine.high %v2514, %v2514
      %v2517 = vcombine.high %v2419, %v2419
      %v2519 = vunpack.c.l.s4 1983009808
      %v2520 = vunpack.c.0.s8 %v2519
      %v2521 = vlaneseq
      %v2522 = vshrl.u32 %v2521, 7
      %v2523 = vsub.s32 %v2520, %v2522
      %v2524 = vrot.slane %v2419, %v2523
      %v2526 = vunpack.c.l.s4 1983009808
      %v2527 = vunpack.c.0.s8 %v2526
      %v2528 = vlaneseq
      %v2529 = vshrl.u32 %v2528, 7
      %v2530 = vsub.s32 %v2527, %v2529
      %v2531 = vrot.slane %v2517, %v2530
      %v2532 = vcombine.high %v2524, %v2524
      %v2533 = vcombine.high %v2531, %v2531
      %v2534 = vcombine.high %v2420, %v2420
      %v2536 = vunpack.c.l.s4 1983009808
      %v2537 = vunpack.c.0.s8 %v2536
      %v2538 = vlaneseq
      %v2539 = vshrl.u32 %v2538, 7
      %v2540 = vsub.s32 %v2537, %v2539
      %v2541 = vrot.slane %v2420, %v2540
      %v2543 = vunpack.c.l.s4 1983009808
      %v2544 = vunpack.c.0.s8 %v2543
      %v2545 = vlaneseq
      %v2546 = vshrl.u32 %v2545, 7
      %v2547 = vsub.s32 %v2544, %v2546
      %v2548 = vrot.slane %v2534, %v2547
      %v2549 = vcombine.high %v2541, %v2541
      %v2550 = vcombine.high %v2548, %v2548
      %v2551 = vcombine.high %v2421, %v2421
      %v2553 = vunpack.c.l.s4 1983009808
      %v2554 = vunpack.c.0.s8 %v2553
      %v2555 = vlaneseq
      %v2556 = vshrl.u32 %v2555, 7
      %v2557 = vsub.s32 %v2554, %v2556
      %v2558 = vrot.slane %v2421, %v2557
      %v2560 = vunpack.c.l.s4 1983009808
      %v2561 = vunpack.c.0.s8 %v2560
      %v2562 = vlaneseq
      %v2563 = vshrl.u32 %v2562, 7
      %v2564 = vsub.s32 %v2561, %v2563
      %v2565 = vrot.slane %v2551, %v2564
      %v2566 = vcombine.high %v2558, %v2558
      %v2567 = vcombine.high %v2565, %v2565
      %v2568 = vcombine.high %v2422, %v2422
      %v2570 = vunpack.c.l.s4 1983009808
      %v2571 = vunpack.c.0.s8 %v2570
      %v2572 = vlaneseq
      %v2573 = vshrl.u32 %v2572, 7
      %v2574 = vsub.s32 %v2571, %v2573
      %v2575 = vrot.slane %v2422, %v2574
      %v2577 = vunpack.c.l.s4 1983009808
      %v2578 = vunpack.c.0.s8 %v2577
      %v2579 = vlaneseq
      %v2580 = vshrl.u32 %v2579, 7
      %v2581 = vsub.s32 %v2578, %v2580
      %v2582 = vrot.slane %v2568, %v2581
      %v2583 = vcombine.high %v2575, %v2575
      %v2584 = vcombine.high %v2582, %v2582
      %v2585 = vcombine.high %v2423, %v2423
      %v2587 = vunpack.c.l.s4 1983009808
      %v2588 = vunpack.c.0.s8 %v2587
      %v2589 = vlaneseq
      %v2590 = vshrl.u32 %v2589, 7
      %v2591 = vsub.s32 %v2588, %v2590
      %v2592 = vrot.slane %v2423, %v2591
      %v2594 = vunpack.c.l.s4 1983009808
      %v2595 = vunpack.c.0.s8 %v2594
      %v2596 = vlaneseq
      %v2597 = vshrl.u32 %v2596, 7
      %v2598 = vsub.s32 %v2595, %v2597
      %v2599 = vrot.slane %v2585, %v2598
      %v2600 = vcombine.high %v2592, %v2592
      %v2601 = vcombine.high %v2599, %v2599
      %v2602 = vcombine.high %v2424, %v2424
      %v2604 = vunpack.c.l.s4 1983009808
      %v2605 = vunpack.c.0.s8 %v2604
      %v2606 = vlaneseq
      %v2607 = vshrl.u32 %v2606, 7
      %v2608 = vsub.s32 %v2605, %v2607
      %v2609 = vrot.slane %v2424, %v2608
      %v2611 = vunpack.c.l.s4 1983009808
      %v2612 = vunpack.c.0.s8 %v2611
      %v2613 = vlaneseq
      %v2614 = vshrl.u32 %v2613, 7
      %v2615 = vsub.s32 %v2612, %v2614
      %v2616 = vrot.slane %v2602, %v2615
      %v2617 = vcombine.high %v2609, %v2609
      %v2618 = vcombine.high %v2616, %v2616
      %v2619 = vcombine.high %v2425, %v2425
      %v2621 = vunpack.c.l.s4 1983009808
      %v2622 = vunpack.c.0.s8 %v2621
      %v2623 = vlaneseq
      %v2624 = vshrl.u32 %v2623, 7
      %v2625 = vsub.s32 %v2622, %v2624
      %v2626 = vrot.slane %v2425, %v2625
      %v2628 = vunpack.c.l.s4 1983009808
      %v2629 = vunpack.c.0.s8 %v2628
      %v2630 = vlaneseq
      %v2631 = vshrl.u32 %v2630, 7
      %v2632 = vsub.s32 %v2629, %v2631
      %v2633 = vrot.slane %v2619, %v2632
      %v2634 = vcombine.high %v2626, %v2626
      %v2635 = vcombine.high %v2633, %v2633
      %v2636 = vcombine.high %v2426, %v2426
      %v2638 = vunpack.c.l.s4 1983009808
      %v2639 = vunpack.c.0.s8 %v2638
      %v2640 = vlaneseq
      %v2641 = vshrl.u32 %v2640, 7
      %v2642 = vsub.s32 %v2639, %v2641
      %v2643 = vrot.slane %v2426, %v2642
      %v2645 = vunpack.c.l.s4 1983009808
      %v2646 = vunpack.c.0.s8 %v2645
      %v2647 = vlaneseq
      %v2648 = vshrl.u32 %v2647, 7
      %v2649 = vsub.s32 %v2646, %v2648
      %v2650 = vrot.slane %v2636, %v2649
      %v2651 = vcombine.high %v2643, %v2643
      %v2652 = vcombine.high %v2650, %v2650
      %v2653 = vcombine.high %v2427, %v2427
      %v2655 = vunpack.c.l.s4 1983009808
      %v2656 = vunpack.c.0.s8 %v2655
      %v2657 = vlaneseq
      %v2658 = vshrl.u32 %v2657, 7
      %v2659 = vsub.s32 %v2656, %v2658
      %v2660 = vrot.slane %v2427, %v2659
      %v2662 = vunpack.c.l.s4 1983009808
      %v2663 = vunpack.c.0.s8 %v2662
      %v2664 = vlaneseq
      %v2665 = vshrl.u32 %v2664, 7
      %v2666 = vsub.s32 %v2663, %v2665
      %v2667 = vrot.slane %v2653, %v2666
      %v2668 = vcombine.high %v2660, %v2660
      %v2669 = vcombine.high %v2667, %v2667
      %v2670 = vcombine.high %v2428, %v2428
      %v2672 = vunpack.c.l.s4 1983009808
      %v2673 = vunpack.c.0.s8 %v2672
      %v2674 = vlaneseq
      %v2675 = vshrl.u32 %v2674, 7
      %v2676 = vsub.s32 %v2673, %v2675
      %v2677 = vrot.slane %v2428, %v2676
      %v2679 = vunpack.c.l.s4 1983009808
      %v2680 = vunpack.c.0.s8 %v2679
      %v2681 = vlaneseq
      %v2682 = vshrl.u32 %v2681, 7
      %v2683 = vsub.s32 %v2680, %v2682
      %v2684 = vrot.slane %v2670, %v2683
      %v2685 = vcombine.high %v2677, %v2677
      %v2686 = vcombine.high %v2684, %v2684
      %v2687 = vcombine.high %v2429, %v2429
      %v2689 = vunpack.c.l.s4 1983009808
      %v2690 = vunpack.c.0.s8 %v2689
      %v2691 = vlaneseq
      %v2692 = vshrl.u32 %v2691, 7
      %v2693 = vsub.s32 %v2690, %v2692
      %v2694 = vrot.slane %v2429, %v2693
      %v2696 = vunpack.c.l.s4 1983009808
      %v2697 = vunpack.c.0.s8 %v2696
      %v2698 = vlaneseq
      %v2699 = vshrl.u32 %v2698, 7
      %v2700 = vsub.s32 %v2697, %v2699
      %v2701 = vrot.slane %v2687, %v2700
      %v2702 = vcombine.high %v2694, %v2694
      %v2703 = vcombine.high %v2701, %v2701
      %v2704 = vcombine.high %v2430, %v2430
      %v2706 = vunpack.c.l.s4 1983009808
      %v2707 = vunpack.c.0.s8 %v2706
      %v2708 = vlaneseq
      %v2709 = vshrl.u32 %v2708, 7
      %v2710 = vsub.s32 %v2707, %v2709
      %v2711 = vrot.slane %v2430, %v2710
      %v2713 = vunpack.c.l.s4 1983009808
      %v2714 = vunpack.c.0.s8 %v2713
      %v2715 = vlaneseq
      %v2716 = vshrl.u32 %v2715, 7
      %v2717 = vsub.s32 %v2714, %v2716
      %v2718 = vrot.slane %v2704, %v2717
      %v2719 = vcombine.high %v2711, %v2711
      %v2720 = vcombine.high %v2718, %v2718
      %v2721 = vcombine.high %v2431, %v2431
      %v2723 = vunpack.c.l.s4 1983009808
      %v2724 = vunpack.c.0.s8 %v2723
      %v2725 = vlaneseq
      %v2726 = vshrl.u32 %v2725, 7
      %v2727 = vsub.s32 %v2724, %v2726
      %v2728 = vrot.slane %v2431, %v2727
      %v2730 = vunpack.c.l.s4 1983009808
      %v2731 = vunpack.c.0.s8 %v2730
      %v2732 = vlaneseq
      %v2733 = vshrl.u32 %v2732, 7
      %v2734 = vsub.s32 %v2731, %v2733
      %v2735 = vrot.slane %v2721, %v2734
      %v2736 = vcombine.high %v2728, %v2728
      %v2737 = vcombine.high %v2735, %v2735
      %v2738 = vcombine.high %v2432, %v2432
      %v2740 = vunpack.c.l.s4 1983009808
      %v2741 = vunpack.c.0.s8 %v2740
      %v2742 = vlaneseq
      %v2743 = vshrl.u32 %v2742, 7
      %v2744 = vsub.s32 %v2741, %v2743
      %v2745 = vrot.slane %v2432, %v2744
      %v2747 = vunpack.c.l.s4 1983009808
      %v2748 = vunpack.c.0.s8 %v2747
      %v2749 = vlaneseq
      %v2750 = vshrl.u32 %v2749, 7
      %v2751 = vsub.s32 %v2748, %v2750
      %v2752 = vrot.slane %v2738, %v2751
      %v2753 = vcombine.high %v2745, %v2745
      %v2754 = vcombine.high %v2752, %v2752
      %v2755 = vcombine.high %v2433, %v2433
      %v2757 = vunpack.c.l.s4 1983009808
      %v2758 = vunpack.c.0.s8 %v2757
      %v2759 = vlaneseq
      %v2760 = vshrl.u32 %v2759, 7
      %v2761 = vsub.s32 %v2758, %v2760
      %v2762 = vrot.slane %v2433, %v2761
      %v2764 = vunpack.c.l.s4 1983009808
      %v2765 = vunpack.c.0.s8 %v2764
      %v2766 = vlaneseq
      %v2767 = vshrl.u32 %v2766, 7
      %v2768 = vsub.s32 %v2765, %v2767
      %v2769 = vrot.slane %v2755, %v2768
      %v2770 = vcombine.high %v2762, %v2762
      %v2771 = vcombine.high %v2769, %v2769
      %v2772 = vcombine.high %v2434, %v2434
      %v2774 = vunpack.c.l.s4 1983009808
      %v2775 = vunpack.c.0.s8 %v2774
      %v2776 = vlaneseq
      %v2777 = vshrl.u32 %v2776, 7
      %v2778 = vsub.s32 %v2775, %v2777
      %v2779 = vrot.slane %v2434, %v2778
      %v2781 = vunpack.c.l.s4 1983009808
      %v2782 = vunpack.c.0.s8 %v2781
      %v2783 = vlaneseq
      %v2784 = vshrl.u32 %v2783, 7
      %v2785 = vsub.s32 %v2782, %v2784
      %v2786 = vrot.slane %v2772, %v2785
      %v2787 = vcombine.high %v2779, %v2779
      %v2788 = vcombine.high %v2786, %v2786
      %v2789 = vcombine.high %v2435, %v2435
      %v2791 = vunpack.c.l.s4 1983009808
      %v2792 = vunpack.c.0.s8 %v2791
      %v2793 = vlaneseq
      %v2794 = vshrl.u32 %v2793, 7
      %v2795 = vsub.s32 %v2792, %v2794
      %v2796 = vrot.slane %v2435, %v2795
      %v2798 = vunpack.c.l.s4 1983009808
      %v2799 = vunpack.c.0.s8 %v2798
      %v2800 = vlaneseq
      %v2801 = vshrl.u32 %v2800, 7
      %v2802 = vsub.s32 %v2799, %v2801
      %v2803 = vrot.slane %v2789, %v2802
      %v2804 = vcombine.high %v2796, %v2796
      %v2805 = vcombine.high %v2803, %v2803
      %v2806 = vcombine.high %v2436, %v2436
      %v2808 = vunpack.c.l.s4 1983009808
      %v2809 = vunpack.c.0.s8 %v2808
      %v2810 = vlaneseq
      %v2811 = vshrl.u32 %v2810, 7
      %v2812 = vsub.s32 %v2809, %v2811
      %v2813 = vrot.slane %v2436, %v2812
      %v2815 = vunpack.c.l.s4 1983009808
      %v2816 = vunpack.c.0.s8 %v2815
      %v2817 = vlaneseq
      %v2818 = vshrl.u32 %v2817, 7
      %v2819 = vsub.s32 %v2816, %v2818
      %v2820 = vrot.slane %v2806, %v2819
      %v2821 = vcombine.high %v2813, %v2813
      %v2822 = vcombine.high %v2820, %v2820
      %v2823 = vcombine.high %v2437, %v2437
      %v2825 = vunpack.c.l.s4 1983009808
      %v2826 = vunpack.c.0.s8 %v2825
      %v2827 = vlaneseq
      %v2828 = vshrl.u32 %v2827, 7
      %v2829 = vsub.s32 %v2826, %v2828
      %v2830 = vrot.slane %v2437, %v2829
      %v2832 = vunpack.c.l.s4 1983009808
      %v2833 = vunpack.c.0.s8 %v2832
      %v2834 = vlaneseq
      %v2835 = vshrl.u32 %v2834, 7
      %v2836 = vsub.s32 %v2833, %v2835
      %v2837 = vrot.slane %v2823, %v2836
      %v2838 = vcombine.high %v2830, %v2830
      %v2839 = vcombine.high %v2837, %v2837
      %v2840 = vcombine.high %v2438, %v2438
      %v2842 = vunpack.c.l.s4 1983009808
      %v2843 = vunpack.c.0.s8 %v2842
      %v2844 = vlaneseq
      %v2845 = vshrl.u32 %v2844, 7
      %v2846 = vsub.s32 %v2843, %v2845
      %v2847 = vrot.slane %v2438, %v2846
      %v2849 = vunpack.c.l.s4 1983009808
      %v2850 = vunpack.c.0.s8 %v2849
      %v2851 = vlaneseq
      %v2852 = vshrl.u32 %v2851, 7
      %v2853 = vsub.s32 %v2850, %v2852
      %v2854 = vrot.slane %v2840, %v2853
      %v2855 = vcombine.high %v2847, %v2847
      %v2856 = vcombine.high %v2854, %v2854
      %v2857 = vcombine.high %v2439, %v2439
      %v2859 = vunpack.c.l.s4 1983009808
      %v2860 = vunpack.c.0.s8 %v2859
      %v2861 = vlaneseq
      %v2862 = vshrl.u32 %v2861, 7
      %v2863 = vsub.s32 %v2860, %v2862
      %v2864 = vrot.slane %v2439, %v2863
      %v2866 = vunpack.c.l.s4 1983009808
      %v2867 = vunpack.c.0.s8 %v2866
      %v2868 = vlaneseq
      %v2869 = vshrl.u32 %v2868, 7
      %v2870 = vsub.s32 %v2867, %v2869
      %v2871 = vrot.slane %v2857, %v2870
      %v2872 = vcombine.high %v2864, %v2864
      %v2873 = vcombine.high %v2871, %v2871
      %v2875 = vunpack.c.l.s4 1983009808
      %v2876 = vunpack.c.0.s8 %v2875
      %v2877 = vlaneseq
      %v2878 = vshrl.u32 %v2877, 7
      %v2879 = vsub.s32 %v2876, %v2878
      %v2880 = vrot.slane %v2440, %v2879
      %v2881 = vcombine.high %v2880, %v2880
      %v2882 = vld [vmem:[%s3] sm:$0xf]
      %v2883 = vld [vmem:[%s3 + $0x4] sm:$0xf]
      %v2884 = vld [vmem:[%s3 + $0x8] sm:$0xf]
      %v2885 = vld [vmem:[%s3 + $0xc] sm:$0xf]
      %v2886 = vld [vmem:[%s3 + $0x10] sm:$0xf]
      %v2887 = vld [vmem:[%s3 + $0x14] sm:$0xf]
      %v2888 = vld [vmem:[%s3 + $0x18] sm:$0xf]
      %v2889 = vld [vmem:[%s3 + $0x1c] sm:$0xf]
      %v2890 = vld [vmem:[%s3 + $0x20] sm:$0xf]
      %v2891 = vld [vmem:[%s4] sm:$0x1]
      %v2892 = vcombine.low %v2473, %v2481
      %v2893 = vcombine.low %v2480, %v2482
      %v2895 = vunpack.c.l.s4 1983009808
      %v2896 = vunpack.c.0.s8 %v2895
      %v2897 = vlaneseq
      %v2898 = vshrl.u32 %v2897, 7
      %v2899 = vsub.s32 %v2896, %v2898
      %v2900 = vrot.slane %v2892, %v2899
      %v2902 = vunpack.c.l.s4 1983009808
      %v2903 = vunpack.c.0.s8 %v2902
      %v2904 = vlaneseq
      %v2905 = vshrl.u32 %v2904, 7
      %v2906 = vsub.s32 %v2903, %v2905
      %v2907 = vrot.slane %v2893, %v2906
      %v2908 = vcombine.low %v2900, %v2907
      %v2909 = vcombine.low %v2490, %v2498
      %v2911 = vunpack.c.l.s4 1983009808
      %v2912 = vunpack.c.0.s8 %v2911
      %v2913 = vlaneseq
      %v2914 = vshrl.u32 %v2913, 7
      %v2915 = vsub.s32 %v2912, %v2914
      %v2916 = vrot.slane %v2909, %v2915
      %v2918 = vunpack.c.l.s4 1983009808
      %v2919 = vunpack.c.0.s8 %v2918
      %v2920 = vlaneseq
      %v2921 = vshrl.u32 %v2920, 7
      %v2922 = vsub.s32 %v2919, %v2921
      %v2923 = vrot.slane %v2497, %v2922
      %v2924 = vcombine.low %v2916, %v2923
      %v2925 = vcombine.low %v2499, %v2507
      %v2926 = vcombine.low %v2515, %v2514
      %v2928 = vunpack.c.l.s4 1983009808
      %v2929 = vunpack.c.0.s8 %v2928
      %v2930 = vlaneseq
      %v2931 = vshrl.u32 %v2930, 7
      %v2932 = vsub.s32 %v2929, %v2931
      %v2933 = vrot.slane %v2925, %v2932
      %v2935 = vunpack.c.l.s4 1983009808
      %v2936 = vunpack.c.0.s8 %v2935
      %v2937 = vlaneseq
      %v2938 = vshrl.u32 %v2937, 7
      %v2939 = vsub.s32 %v2936, %v2938
      %v2940 = vrot.slane %v2926, %v2939
      %v2941 = vcombine.low %v2933, %v2940
      %v2942 = vcombine.low %v2516, %v2524
      %v2944 = vunpack.c.l.s4 1983009808
      %v2945 = vunpack.c.0.s8 %v2944
      %v2946 = vlaneseq
      %v2947 = vshrl.u32 %v2946, 7
      %v2948 = vsub.s32 %v2945, %v2947
      %v2949 = vrot.slane %v2942, %v2948
      %v2951 = vunpack.c.l.s4 1983009808
      %v2952 = vunpack.c.0.s8 %v2951
      %v2953 = vlaneseq
      %v2954 = vshrl.u32 %v2953, 7
      %v2955 = vsub.s32 %v2952, %v2954
      %v2956 = vrot.slane %v2532, %v2955
      %v2957 = vcombine.low %v2949, %v2956
      %v2958 = vcombine.low %v2531, %v2533
      %v2959 = vcombine.low %v2541, %v2549
      %v2961 = vunpack.c.l.s4 1983009808
      %v2962 = vunpack.c.0.s8 %v2961
      %v2963 = vlaneseq
      %v2964 = vshrl.u32 %v2963, 7
      %v2965 = vsub.s32 %v2962, %v2964
      %v2966 = vrot.slane %v2958, %v2965
      %v2968 = vunpack.c.l.s4 1983009808
      %v2969 = vunpack.c.0.s8 %v2968
      %v2970 = vlaneseq
      %v2971 = vshrl.u32 %v2970, 7
      %v2972 = vsub.s32 %v2969, %v2971
      %v2973 = vrot.slane %v2959, %v2972
      %v2974 = vcombine.low %v2966, %v2973
      %v2975 = vcombine.low %v2548, %v2550
      %v2977 = vunpack.c.l.s4 1983009808
      %v2978 = vunpack.c.0.s8 %v2977
      %v2979 = vlaneseq
      %v2980 = vshrl.u32 %v2979, 7
      %v2981 = vsub.s32 %v2978, %v2980
      %v2982 = vrot.slane %v2975, %v2981
      %v2984 = vunpack.c.l.s4 1983009808
      %v2985 = vunpack.c.0.s8 %v2984
      %v2986 = vlaneseq
      %v2987 = vshrl.u32 %v2986, 7
      %v2988 = vsub.s32 %v2985, %v2987
      %v2989 = vrot.slane %v2558, %v2988
      %v2990 = vcombine.low %v2982, %v2989
      %v2991 = vcombine.low %v2566, %v2565
      %v2992 = vcombine.low %v2567, %v2575
      %v2994 = vunpack.c.l.s4 1983009808
      %v2995 = vunpack.c.0.s8 %v2994
      %v2996 = vlaneseq
      %v2997 = vshrl.u32 %v2996, 7
      %v2998 = vsub.s32 %v2995, %v2997
      %v2999 = vrot.slane %v2991, %v2998
      %v3001 = vunpack.c.l.s4 1983009808
      %v3002 = vunpack.c.0.s8 %v3001
      %v3003 = vlaneseq
      %v3004 = vshrl.u32 %v3003, 7
      %v3005 = vsub.s32 %v3002, %v3004
      %v3006 = vrot.slane %v2992, %v3005
      %v3007 = vcombine.low %v2999, %v3006
      %v3008 = vcombine.low %v2583, %v2582
      %v3010 = vunpack.c.l.s4 1983009808
      %v3011 = vunpack.c.0.s8 %v3010
      %v3012 = vlaneseq
      %v3013 = vshrl.u32 %v3012, 7
      %v3014 = vsub.s32 %v3011, %v3013
      %v3015 = vrot.slane %v3008, %v3014
      %v3017 = vunpack.c.l.s4 1983009808
      %v3018 = vunpack.c.0.s8 %v3017
      %v3019 = vlaneseq
      %v3020 = vshrl.u32 %v3019, 7
      %v3021 = vsub.s32 %v3018, %v3020
      %v3022 = vrot.slane %v2584, %v3021
      %v3023 = vcombine.low %v3015, %v3022
      %v3024 = vcombine.low %v2592, %v2600
      %v3025 = vcombine.low %v2599, %v2601
      %v3027 = vunpack.c.l.s4 1983009808
      %v3028 = vunpack.c.0.s8 %v3027
      %v3029 = vlaneseq
      %v3030 = vshrl.u32 %v3029, 7
      %v3031 = vsub.s32 %v3028, %v3030
      %v3032 = vrot.slane %v3024, %v3031
      %v3034 = vunpack.c.l.s4 1983009808
      %v3035 = vunpack.c.0.s8 %v3034
      %v3036 = vlaneseq
      %v3037 = vshrl.u32 %v3036, 7
      %v3038 = vsub.s32 %v3035, %v3037
      %v3039 = vrot.slane %v3025, %v3038
      %v3040 = vcombine.low %v3032, %v3039
      %v3041 = vcombine.low %v2609, %v2617
      %v3043 = vunpack.c.l.s4 1983009808
      %v3044 = vunpack.c.0.s8 %v3043
      %v3045 = vlaneseq
      %v3046 = vshrl.u32 %v3045, 7
      %v3047 = vsub.s32 %v3044, %v3046
      %v3048 = vrot.slane %v3041, %v3047
      %v3050 = vunpack.c.l.s4 1983009808
      %v3051 = vunpack.c.0.s8 %v3050
      %v3052 = vlaneseq
      %v3053 = vshrl.u32 %v3052, 7
      %v3054 = vsub.s32 %v3051, %v3053
      %v3055 = vrot.slane %v2616, %v3054
      %v3056 = vcombine.low %v3048, %v3055
      %v3057 = vcombine.low %v2618, %v2626
      %v3058 = vcombine.low %v2634, %v2633
      %v3060 = vunpack.c.l.s4 1983009808
      %v3061 = vunpack.c.0.s8 %v3060
      %v3062 = vlaneseq
      %v3063 = vshrl.u32 %v3062, 7
      %v3064 = vsub.s32 %v3061, %v3063
      %v3065 = vrot.slane %v3057, %v3064
      %v3067 = vunpack.c.l.s4 1983009808
      %v3068 = vunpack.c.0.s8 %v3067
      %v3069 = vlaneseq
      %v3070 = vshrl.u32 %v3069, 7
      %v3071 = vsub.s32 %v3068, %v3070
      %v3072 = vrot.slane %v3058, %v3071
      %v3073 = vcombine.low %v3065, %v3072
      %v3074 = vcombine.low %v2635, %v2643
      %v3076 = vunpack.c.l.s4 1983009808
      %v3077 = vunpack.c.0.s8 %v3076
      %v3078 = vlaneseq
      %v3079 = vshrl.u32 %v3078, 7
      %v3080 = vsub.s32 %v3077, %v3079
      %v3081 = vrot.slane %v3074, %v3080
      %v3083 = vunpack.c.l.s4 1983009808
      %v3084 = vunpack.c.0.s8 %v3083
      %v3085 = vlaneseq
      %v3086 = vshrl.u32 %v3085, 7
      %v3087 = vsub.s32 %v3084, %v3086
      %v3088 = vrot.slane %v2651, %v3087
      %v3089 = vcombine.low %v3081, %v3088
      %v3090 = vcombine.low %v2650, %v2652
      %v3091 = vcombine.low %v2660, %v2668
      %v3093 = vunpack.c.l.s4 1983009808
      %v3094 = vunpack.c.0.s8 %v3093
      %v3095 = vlaneseq
      %v3096 = vshrl.u32 %v3095, 7
      %v3097 = vsub.s32 %v3094, %v3096
      %v3098 = vrot.slane %v3090, %v3097
      %v3100 = vunpack.c.l.s4 1983009808
      %v3101 = vunpack.c.0.s8 %v3100
      %v3102 = vlaneseq
      %v3103 = vshrl.u32 %v3102, 7
      %v3104 = vsub.s32 %v3101, %v3103
      %v3105 = vrot.slane %v3091, %v3104
      %v3106 = vcombine.low %v3098, %v3105
      %v3107 = vcombine.low %v2667, %v2669
      %v3109 = vunpack.c.l.s4 1983009808
      %v3110 = vunpack.c.0.s8 %v3109
      %v3111 = vlaneseq
      %v3112 = vshrl.u32 %v3111, 7
      %v3113 = vsub.s32 %v3110, %v3112
      %v3114 = vrot.slane %v3107, %v3113
      %v3116 = vunpack.c.l.s4 1983009808
      %v3117 = vunpack.c.0.s8 %v3116
      %v3118 = vlaneseq
      %v3119 = vshrl.u32 %v3118, 7
      %v3120 = vsub.s32 %v3117, %v3119
      %v3121 = vrot.slane %v2677, %v3120
      %v3122 = vcombine.low %v3114, %v3121
      %v3123 = vcombine.low %v2685, %v2684
      %v3124 = vcombine.low %v2686, %v2694
      %v3126 = vunpack.c.l.s4 1983009808
      %v3127 = vunpack.c.0.s8 %v3126
      %v3128 = vlaneseq
      %v3129 = vshrl.u32 %v3128, 7
      %v3130 = vsub.s32 %v3127, %v3129
      %v3131 = vrot.slane %v3123, %v3130
      %v3133 = vunpack.c.l.s4 1983009808
      %v3134 = vunpack.c.0.s8 %v3133
      %v3135 = vlaneseq
      %v3136 = vshrl.u32 %v3135, 7
      %v3137 = vsub.s32 %v3134, %v3136
      %v3138 = vrot.slane %v3124, %v3137
      %v3139 = vcombine.low %v3131, %v3138
      %v3140 = vcombine.low %v2702, %v2701
      %v3142 = vunpack.c.l.s4 1983009808
      %v3143 = vunpack.c.0.s8 %v3142
      %v3144 = vlaneseq
      %v3145 = vshrl.u32 %v3144, 7
      %v3146 = vsub.s32 %v3143, %v3145
      %v3147 = vrot.slane %v3140, %v3146
      %v3149 = vunpack.c.l.s4 1983009808
      %v3150 = vunpack.c.0.s8 %v3149
      %v3151 = vlaneseq
      %v3152 = vshrl.u32 %v3151, 7
      %v3153 = vsub.s32 %v3150, %v3152
      %v3154 = vrot.slane %v2703, %v3153
      %v3155 = vcombine.low %v3147, %v3154
      %v3156 = vcombine.low %v2711, %v2719
      %v3157 = vcombine.low %v2718, %v2720
      %v3159 = vunpack.c.l.s4 1983009808
      %v3160 = vunpack.c.0.s8 %v3159
      %v3161 = vlaneseq
      %v3162 = vshrl.u32 %v3161, 7
      %v3163 = vsub.s32 %v3160, %v3162
      %v3164 = vrot.slane %v3156, %v3163
      %v3166 = vunpack.c.l.s4 1983009808
      %v3167 = vunpack.c.0.s8 %v3166
      %v3168 = vlaneseq
      %v3169 = vshrl.u32 %v3168, 7
      %v3170 = vsub.s32 %v3167, %v3169
      %v3171 = vrot.slane %v3157, %v3170
      %v3172 = vcombine.low %v3164, %v3171
      %v3173 = vcombine.low %v2728, %v2736
      %v3175 = vunpack.c.l.s4 1983009808
      %v3176 = vunpack.c.0.s8 %v3175
      %v3177 = vlaneseq
      %v3178 = vshrl.u32 %v3177, 7
      %v3179 = vsub.s32 %v3176, %v3178
      %v3180 = vrot.slane %v3173, %v3179
      %v3182 = vunpack.c.l.s4 1983009808
      %v3183 = vunpack.c.0.s8 %v3182
      %v3184 = vlaneseq
      %v3185 = vshrl.u32 %v3184, 7
      %v3186 = vsub.s32 %v3183, %v3185
      %v3187 = vrot.slane %v2735, %v3186
      %v3188 = vcombine.low %v3180, %v3187
      %v3189 = vcombine.low %v2737, %v2745
      %v3190 = vcombine.low %v2753, %v2752
      %v3192 = vunpack.c.l.s4 1983009808
      %v3193 = vunpack.c.0.s8 %v3192
      %v3194 = vlaneseq
      %v3195 = vshrl.u32 %v3194, 7
      %v3196 = vsub.s32 %v3193, %v3195
      %v3197 = vrot.slane %v3189, %v3196
      %v3199 = vunpack.c.l.s4 1983009808
      %v3200 = vunpack.c.0.s8 %v3199
      %v3201 = vlaneseq
      %v3202 = vshrl.u32 %v3201, 7
      %v3203 = vsub.s32 %v3200, %v3202
      %v3204 = vrot.slane %v3190, %v3203
      %v3205 = vcombine.low %v3197, %v3204
      %v3206 = vcombine.low %v2754, %v2762
      %v3208 = vunpack.c.l.s4 1983009808
      %v3209 = vunpack.c.0.s8 %v3208
      %v3210 = vlaneseq
      %v3211 = vshrl.u32 %v3210, 7
      %v3212 = vsub.s32 %v3209, %v3211
      %v3213 = vrot.slane %v3206, %v3212
      %v3215 = vunpack.c.l.s4 1983009808
      %v3216 = vunpack.c.0.s8 %v3215
      %v3217 = vlaneseq
      %v3218 = vshrl.u32 %v3217, 7
      %v3219 = vsub.s32 %v3216, %v3218
      %v3220 = vrot.slane %v2770, %v3219
      %v3221 = vcombine.low %v3213, %v3220
      %v3222 = vcombine.low %v2769, %v2771
      %v3223 = vcombine.low %v2779, %v2787
      %v3225 = vunpack.c.l.s4 1983009808
      %v3226 = vunpack.c.0.s8 %v3225
      %v3227 = vlaneseq
      %v3228 = vshrl.u32 %v3227, 7
      %v3229 = vsub.s32 %v3226, %v3228
      %v3230 = vrot.slane %v3222, %v3229
      %v3232 = vunpack.c.l.s4 1983009808
      %v3233 = vunpack.c.0.s8 %v3232
      %v3234 = vlaneseq
      %v3235 = vshrl.u32 %v3234, 7
      %v3236 = vsub.s32 %v3233, %v3235
      %v3237 = vrot.slane %v3223, %v3236
      %v3238 = vcombine.low %v3230, %v3237
      %v3239 = vcombine.low %v2786, %v2788
      %v3241 = vunpack.c.l.s4 1983009808
      %v3242 = vunpack.c.0.s8 %v3241
      %v3243 = vlaneseq
      %v3244 = vshrl.u32 %v3243, 7
      %v3245 = vsub.s32 %v3242, %v3244
      %v3246 = vrot.slane %v3239, %v3245
      %v3248 = vunpack.c.l.s4 1983009808
      %v3249 = vunpack.c.0.s8 %v3248
      %v3250 = vlaneseq
      %v3251 = vshrl.u32 %v3250, 7
      %v3252 = vsub.s32 %v3249, %v3251
      %v3253 = vrot.slane %v2796, %v3252
      %v3254 = vcombine.low %v3246, %v3253
      %v3255 = vcombine.low %v2804, %v2803
      %v3256 = vcombine.low %v2805, %v2813
      %v3258 = vunpack.c.l.s4 1983009808
      %v3259 = vunpack.c.0.s8 %v3258
      %v3260 = vlaneseq
      %v3261 = vshrl.u32 %v3260, 7
      %v3262 = vsub.s32 %v3259, %v3261
      %v3263 = vrot.slane %v3255, %v3262
      %v3265 = vunpack.c.l.s4 1983009808
      %v3266 = vunpack.c.0.s8 %v3265
      %v3267 = vlaneseq
      %v3268 = vshrl.u32 %v3267, 7
      %v3269 = vsub.s32 %v3266, %v3268
      %v3270 = vrot.slane %v3256, %v3269
      %v3271 = vcombine.low %v3263, %v3270
      %v3272 = vcombine.low %v2821, %v2820
      %v3274 = vunpack.c.l.s4 1983009808
      %v3275 = vunpack.c.0.s8 %v3274
      %v3276 = vlaneseq
      %v3277 = vshrl.u32 %v3276, 7
      %v3278 = vsub.s32 %v3275, %v3277
      %v3279 = vrot.slane %v3272, %v3278
      %v3281 = vunpack.c.l.s4 1983009808
      %v3282 = vunpack.c.0.s8 %v3281
      %v3283 = vlaneseq
      %v3284 = vshrl.u32 %v3283, 7
      %v3285 = vsub.s32 %v3282, %v3284
      %v3286 = vrot.slane %v2822, %v3285
      %v3287 = vcombine.low %v3279, %v3286
      %v3288 = vcombine.low %v2830, %v2838
      %v3289 = vcombine.low %v2837, %v2839
      %v3291 = vunpack.c.l.s4 1983009808
      %v3292 = vunpack.c.0.s8 %v3291
      %v3293 = vlaneseq
      %v3294 = vshrl.u32 %v3293, 7
      %v3295 = vsub.s32 %v3292, %v3294
      %v3296 = vrot.slane %v3288, %v3295
      %v3298 = vunpack.c.l.s4 1983009808
      %v3299 = vunpack.c.0.s8 %v3298
      %v3300 = vlaneseq
      %v3301 = vshrl.u32 %v3300, 7
      %v3302 = vsub.s32 %v3299, %v3301
      %v3303 = vrot.slane %v3289, %v3302
      %v3304 = vcombine.low %v3296, %v3303
      %v3305 = vcombine.low %v2847, %v2855
      %v3307 = vunpack.c.l.s4 1983009808
      %v3308 = vunpack.c.0.s8 %v3307
      %v3309 = vlaneseq
      %v3310 = vshrl.u32 %v3309, 7
      %v3311 = vsub.s32 %v3308, %v3310
      %v3312 = vrot.slane %v3305, %v3311
      %v3314 = vunpack.c.l.s4 1983009808
      %v3315 = vunpack.c.0.s8 %v3314
      %v3316 = vlaneseq
      %v3317 = vshrl.u32 %v3316, 7
      %v3318 = vsub.s32 %v3315, %v3317
      %v3319 = vrot.slane %v2854, %v3318
      %v3320 = vcombine.low %v3312, %v3319
      %v3321 = vcombine.low %v2856, %v2864
      %v3322 = vcombine.low %v2872, %v2871
      %v3324 = vunpack.c.l.s4 1983009808
      %v3325 = vunpack.c.0.s8 %v3324
      %v3326 = vlaneseq
      %v3327 = vshrl.u32 %v3326, 7
      %v3328 = vsub.s32 %v3325, %v3327
      %v3329 = vrot.slane %v3321, %v3328
      %v3331 = vunpack.c.l.s4 1983009808
      %v3332 = vunpack.c.0.s8 %v3331
      %v3333 = vlaneseq
      %v3334 = vshrl.u32 %v3333, 7
      %v3335 = vsub.s32 %v3332, %v3334
      %v3336 = vrot.slane %v3322, %v3335
      %v3337 = vcombine.low %v3329, %v3336
      %v3338 = vcombine.low %v2873, %v2880
      %v3340 = vunpack.c.l.s4 1983009808
      %v3341 = vunpack.c.0.s8 %v3340
      %v3342 = vlaneseq
      %v3343 = vshrl.u32 %v3342, 7
      %v3344 = vsub.s32 %v3341, %v3343
      %v3345 = vrot.slane %v3338, %v3344
      %v3347 = vunpack.c.l.s4 1983009808
      %v3348 = vunpack.c.0.s8 %v3347
      %v3349 = vlaneseq
      %v3350 = vshrl.u32 %v3349, 7
      %v3351 = vsub.s32 %v3348, %v3350
      %v3352 = vrot.slane %v2881, %v3351
      %v3353 = vcombine.low %v3345, %v3352
      %v3382 = vpack.c.bf16 %v2924, %v2908
      %v3383 = vpack.c.bf16 %v2957, %v2941
      %v3384 = vpack.c.bf16 %v2990, %v2974
      %v3385 = vpack.c.bf16 %v3023, %v3007
      %v3386 = vpack.c.bf16 %v3056, %v3040
      %v3387 = vpack.c.bf16 %v3089, %v3073
      %v3388 = vpack.c.bf16 %v3122, %v3106
      %v3389 = vpack.c.bf16 %v3155, %v3139
      %v3390 = vpack.c.bf16 %v3188, %v3172
      %v3391 = vpack.c.bf16 %v3221, %v3205
      %v3392 = vpack.c.bf16 %v3254, %v3238
      %v3393 = vpack.c.bf16 %v3287, %v3271
      %v3394 = vpack.c.bf16 %v3320, %v3304
      %v3395 = vpack.c.bf16 %v3353, %v3337
      %v3397 = vshrl.u32 %v3382, 16
      %v3399 = vshll.u32 %v3382, 16
      %v3401 = vrot.slane %v3399, 1
      %v3402 = vor.u32 %v3397, %v3401
      %v3404 = vshrl.u32 %v3383, 16
      %v3406 = vshll.u32 %v3383, 16
      %v3408 = vrot.slane %v3406, 1
      %v3409 = vor.u32 %v3404, %v3408
      %v3411 = vshrl.u32 %v3384, 16
      %v3413 = vshll.u32 %v3384, 16
      %v3415 = vrot.slane %v3413, 1
      %v3416 = vor.u32 %v3411, %v3415
      %v3418 = vshrl.u32 %v3385, 16
      %v3420 = vshll.u32 %v3385, 16
      %v3422 = vrot.slane %v3420, 1
      %v3423 = vor.u32 %v3418, %v3422
      %v3425 = vshrl.u32 %v3386, 16
      %v3427 = vshll.u32 %v3386, 16
      %v3429 = vrot.slane %v3427, 1
      %v3430 = vor.u32 %v3425, %v3429
      %v3432 = vshrl.u32 %v3387, 16
      %v3434 = vshll.u32 %v3387, 16
      %v3436 = vrot.slane %v3434, 1
      %v3437 = vor.u32 %v3432, %v3436
      %v3439 = vshrl.u32 %v3388, 16
      %v3441 = vshll.u32 %v3388, 16
      %v3443 = vrot.slane %v3441, 1
      %v3444 = vor.u32 %v3439, %v3443
      %v3446 = vshrl.u32 %v3389, 16
      %v3448 = vshll.u32 %v3389, 16
      %v3450 = vrot.slane %v3448, 1
      %v3451 = vor.u32 %v3446, %v3450
      %v3453 = vshrl.u32 %v3390, 16
      %v3455 = vshll.u32 %v3390, 16
      %v3457 = vrot.slane %v3455, 1
      %v3458 = vor.u32 %v3453, %v3457
      %v3460 = vshrl.u32 %v3391, 16
      %v3462 = vshll.u32 %v3391, 16
      %v3464 = vrot.slane %v3462, 1
      %v3465 = vor.u32 %v3460, %v3464
      %v3467 = vshrl.u32 %v3392, 16
      %v3469 = vshll.u32 %v3392, 16
      %v3471 = vrot.slane %v3469, 1
      %v3472 = vor.u32 %v3467, %v3471
      %v3474 = vshrl.u32 %v3393, 16
      %v3476 = vshll.u32 %v3393, 16
      %v3478 = vrot.slane %v3476, 1
      %v3479 = vor.u32 %v3474, %v3478
      %3480 = vrot.lane.b32.xlu0 %v3402, 8
      %v3481 = vpop.permute.xlu0 %3480
      %3482 = vrot.lane.b32.xlu0 %v3409, 8
      %v3483 = vpop.permute.xlu0 %3482
      %3484 = vrot.lane.b32.xlu0 %v3416, 8
      %v3485 = vpop.permute.xlu0 %3484
      %3486 = vrot.lane.b32.xlu0 %v3423, 8
      %v3487 = vpop.permute.xlu0 %3486
      %3488 = vrot.lane.b32.xlu0 %v3430, 8
      %v3489 = vpop.permute.xlu0 %3488
      %3490 = vrot.lane.b32.xlu0 %v3437, 8
      %v3491 = vpop.permute.xlu0 %3490
      %3492 = vrot.lane.b32.xlu0 %v3444, 8
      %v3493 = vpop.permute.xlu0 %3492
      %3494 = vrot.lane.b32.xlu0 %v3451, 8
      %v3495 = vpop.permute.xlu0 %3494
      %3496 = vrot.lane.b32.xlu0 %v3458, 8
      %v3497 = vpop.permute.xlu0 %3496
      %3498 = vrot.lane.b32.xlu0 %v3465, 8
      %v3499 = vpop.permute.xlu0 %3498
      %3500 = vrot.lane.b32.xlu0 %v3472, 8
      %v3501 = vpop.permute.xlu0 %3500
      %3502 = vrot.lane.b32.xlu0 %v3479, 8
      %v3503 = vpop.permute.xlu0 %3502
      %v3516 = vrot.slane %v3382, 1
      %v3517 = vrot.slane %v3383, 1
      %v3518 = vrot.slane %v3384, 1
      %v3519 = vrot.slane %v3385, 1
      %v3520 = vrot.slane %v3386, 1
      %v3521 = vrot.slane %v3387, 1
      %v3522 = vrot.slane %v3388, 1
      %v3523 = vrot.slane %v3389, 1
      %v3524 = vrot.slane %v3390, 1
      %v3525 = vrot.slane %v3391, 1
      %v3526 = vrot.slane %v3392, 1
      %v3527 = vrot.slane %v3393, 1
      %3528 = vrot.lane.b32.xlu0 %v3516, 16
      %v3529 = vpop.permute.xlu0 %3528
      %3530 = vrot.lane.b32.xlu0 %v3517, 16
      %v3531 = vpop.permute.xlu0 %3530
      %3532 = vrot.lane.b32.xlu0 %v3518, 16
      %v3533 = vpop.permute.xlu0 %3532
      %3534 = vrot.lane.b32.xlu0 %v3519, 16
      %v3535 = vpop.permute.xlu0 %3534
      %3536 = vrot.lane.b32.xlu0 %v3520, 16
      %v3537 = vpop.permute.xlu0 %3536
      %3538 = vrot.lane.b32.xlu0 %v3521, 16
      %v3539 = vpop.permute.xlu0 %3538
      %3540 = vrot.lane.b32.xlu0 %v3522, 16
      %v3541 = vpop.permute.xlu0 %3540
      %3542 = vrot.lane.b32.xlu0 %v3523, 16
      %v3543 = vpop.permute.xlu0 %3542
      %3544 = vrot.lane.b32.xlu0 %v3524, 16
      %v3545 = vpop.permute.xlu0 %3544
      %3546 = vrot.lane.b32.xlu0 %v3525, 16
      %v3547 = vpop.permute.xlu0 %3546
      %3548 = vrot.lane.b32.xlu0 %v3526, 16
      %v3549 = vpop.permute.xlu0 %3548
      %3550 = vrot.lane.b32.xlu0 %v3527, 16
      %v3551 = vpop.permute.xlu0 %3550
      %3553 = vrot.lane.b32.xlu0 %v3383, 24
      %v3554 = vpop.permute.xlu0 %3553
      %3555 = vrot.lane.b32.xlu0 %v3384, 24
      %v3556 = vpop.permute.xlu0 %3555
      %3557 = vrot.lane.b32.xlu0 %v3385, 24
      %v3558 = vpop.permute.xlu0 %3557
      %3559 = vrot.lane.b32.xlu0 %v3386, 24
      %v3560 = vpop.permute.xlu0 %3559
      %3561 = vrot.lane.b32.xlu0 %v3387, 24
      %v3562 = vpop.permute.xlu0 %3561
      %3563 = vrot.lane.b32.xlu0 %v3388, 24
      %v3564 = vpop.permute.xlu0 %3563
      %3565 = vrot.lane.b32.xlu0 %v3389, 24
      %v3566 = vpop.permute.xlu0 %3565
      %3567 = vrot.lane.b32.xlu0 %v3390, 24
      %v3568 = vpop.permute.xlu0 %3567
      %3569 = vrot.lane.b32.xlu0 %v3391, 24
      %v3570 = vpop.permute.xlu0 %3569
      %3571 = vrot.lane.b32.xlu0 %v3392, 24
      %v3572 = vpop.permute.xlu0 %3571
      %3573 = vrot.lane.b32.xlu0 %v3393, 24
      %v3574 = vpop.permute.xlu0 %3573
      %3575 = vrot.lane.b32.xlu0 %v3394, 24
      %v3576 = vpop.permute.xlu0 %3575
      %v3578 = vshrl.u32 %v3394, 16
      %v3580 = vshll.u32 %v3394, 16
      %v3582 = vrot.slane %v3580, 1
      %v3583 = vor.u32 %v3578, %v3582
      %3584 = vrot.lane.b32.xlu0 %v3409, 32
      %v3585 = vpop.permute.xlu0 %3584
      %3586 = vrot.lane.b32.xlu0 %v3416, 32
      %v3587 = vpop.permute.xlu0 %3586
      %3588 = vrot.lane.b32.xlu0 %v3423, 32
      %v3589 = vpop.permute.xlu0 %3588
      %3590 = vrot.lane.b32.xlu0 %v3430, 32
      %v3591 = vpop.permute.xlu0 %3590
      %3592 = vrot.lane.b32.xlu0 %v3437, 32
      %v3593 = vpop.permute.xlu0 %3592
      %3594 = vrot.lane.b32.xlu0 %v3444, 32
      %v3595 = vpop.permute.xlu0 %3594
      %3596 = vrot.lane.b32.xlu0 %v3451, 32
      %v3597 = vpop.permute.xlu0 %3596
      %3598 = vrot.lane.b32.xlu0 %v3458, 32
      %v3599 = vpop.permute.xlu0 %3598
      %3600 = vrot.lane.b32.xlu0 %v3465, 32
      %v3601 = vpop.permute.xlu0 %3600
      %3602 = vrot.lane.b32.xlu0 %v3472, 32
      %v3603 = vpop.permute.xlu0 %3602
      %3604 = vrot.lane.b32.xlu0 %v3479, 32
      %v3605 = vpop.permute.xlu0 %3604
      %3606 = vrot.lane.b32.xlu0 %v3583, 32
      %v3607 = vpop.permute.xlu0 %3606
      %v3608 = vrot.slane %v3394, 1
      %3609 = vrot.lane.b32.xlu0 %v3517, 40
      %v3610 = vpop.permute.xlu0 %3609
      %3611 = vrot.lane.b32.xlu0 %v3518, 40
      %v3612 = vpop.permute.xlu0 %3611
      %3613 = vrot.lane.b32.xlu0 %v3519, 40
      %v3614 = vpop.permute.xlu0 %3613
      %3615 = vrot.lane.b32.xlu0 %v3520, 40
      %v3616 = vpop.permute.xlu0 %3615
      %3617 = vrot.lane.b32.xlu0 %v3521, 40
      %v3618 = vpop.permute.xlu0 %3617
      %3619 = vrot.lane.b32.xlu0 %v3522, 40
      %v3620 = vpop.permute.xlu0 %3619
      %3621 = vrot.lane.b32.xlu0 %v3523, 40
      %v3622 = vpop.permute.xlu0 %3621
      %3623 = vrot.lane.b32.xlu0 %v3524, 40
      %v3624 = vpop.permute.xlu0 %3623
      %3625 = vrot.lane.b32.xlu0 %v3525, 40
      %v3626 = vpop.permute.xlu0 %3625
      %3627 = vrot.lane.b32.xlu0 %v3526, 40
      %v3628 = vpop.permute.xlu0 %3627
      %3629 = vrot.lane.b32.xlu0 %v3527, 40
      %v3630 = vpop.permute.xlu0 %3629
      %3631 = vrot.lane.b32.xlu0 %v3608, 40
      %v3632 = vpop.permute.xlu0 %3631
      %3634 = vrot.lane.b32.xlu0 %v3384, 48
      %v3635 = vpop.permute.xlu0 %3634
      %3636 = vrot.lane.b32.xlu0 %v3385, 48
      %v3637 = vpop.permute.xlu0 %3636
      %3638 = vrot.lane.b32.xlu0 %v3386, 48
      %v3639 = vpop.permute.xlu0 %3638
      %3640 = vrot.lane.b32.xlu0 %v3387, 48
      %v3641 = vpop.permute.xlu0 %3640
      %3642 = vrot.lane.b32.xlu0 %v3388, 48
      %v3643 = vpop.permute.xlu0 %3642
      %3644 = vrot.lane.b32.xlu0 %v3389, 48
      %v3645 = vpop.permute.xlu0 %3644
      %3646 = vrot.lane.b32.xlu0 %v3390, 48
      %v3647 = vpop.permute.xlu0 %3646
      %3648 = vrot.lane.b32.xlu0 %v3391, 48
      %v3649 = vpop.permute.xlu0 %3648
      %3650 = vrot.lane.b32.xlu0 %v3392, 48
      %v3651 = vpop.permute.xlu0 %3650
      %3652 = vrot.lane.b32.xlu0 %v3393, 48
      %v3653 = vpop.permute.xlu0 %3652
      %3654 = vrot.lane.b32.xlu0 %v3394, 48
      %v3655 = vpop.permute.xlu0 %3654
      %3656 = vrot.lane.b32.xlu0 %v3395, 48
      %v3657 = vpop.permute.xlu0 %3656
      %v3659 = vshrl.u32 %v3395, 16
      %v3661 = vshll.u32 %v3395, 16
      %v3663 = vrot.slane %v3661, 1
      %v3664 = vor.u32 %v3659, %v3663
      %3665 = vrot.lane.b32.xlu0 %v3416, 56
      %v3666 = vpop.permute.xlu0 %3665
      %3667 = vrot.lane.b32.xlu0 %v3423, 56
      %v3668 = vpop.permute.xlu0 %3667
      %3669 = vrot.lane.b32.xlu0 %v3430, 56
      %v3670 = vpop.permute.xlu0 %3669
      %3671 = vrot.lane.b32.xlu0 %v3437, 56
      %v3672 = vpop.permute.xlu0 %3671
      %3673 = vrot.lane.b32.xlu0 %v3444, 56
      %v3674 = vpop.permute.xlu0 %3673
      %3675 = vrot.lane.b32.xlu0 %v3451, 56
      %v3676 = vpop.permute.xlu0 %3675
      %3677 = vrot.lane.b32.xlu0 %v3458, 56
      %v3678 = vpop.permute.xlu0 %3677
      %3679 = vrot.lane.b32.xlu0 %v3465, 56
      %v3680 = vpop.permute.xlu0 %3679
      %3681 = vrot.lane.b32.xlu0 %v3472, 56
      %v3682 = vpop.permute.xlu0 %3681
      %3683 = vrot.lane.b32.xlu0 %v3479, 56
      %v3684 = vpop.permute.xlu0 %3683
      %3685 = vrot.lane.b32.xlu0 %v3583, 56
      %v3686 = vpop.permute.xlu0 %3685
      %3687 = vrot.lane.b32.xlu0 %v3664, 56
      %v3688 = vpop.permute.xlu0 %3687
      %v3689 = vrot.slane %v3395, 1
      %3690 = vrot.lane.b32.xlu0 %v3518, 64
      %v3691 = vpop.permute.xlu0 %3690
      %3692 = vrot.lane.b32.xlu0 %v3519, 64
      %v3693 = vpop.permute.xlu0 %3692
      %3694 = vrot.lane.b32.xlu0 %v3520, 64
      %v3695 = vpop.permute.xlu0 %3694
      %3696 = vrot.lane.b32.xlu0 %v3521, 64
      %v3697 = vpop.permute.xlu0 %3696
      %3698 = vrot.lane.b32.xlu0 %v3522, 64
      %v3699 = vpop.permute.xlu0 %3698
      %3700 = vrot.lane.b32.xlu0 %v3523, 64
      %v3701 = vpop.permute.xlu0 %3700
      %3702 = vrot.lane.b32.xlu0 %v3524, 64
      %v3703 = vpop.permute.xlu0 %3702
      %3704 = vrot.lane.b32.xlu0 %v3525, 64
      %v3705 = vpop.permute.xlu0 %3704
      %3706 = vrot.lane.b32.xlu0 %v3526, 64
      %v3707 = vpop.permute.xlu0 %3706
      %3708 = vrot.lane.b32.xlu0 %v3527, 64
      %v3709 = vpop.permute.xlu0 %3708
      %3710 = vrot.lane.b32.xlu0 %v3608, 64
      %v3711 = vpop.permute.xlu0 %3710
      %3712 = vrot.lane.b32.xlu0 %v3689, 64
      %v3713 = vpop.permute.xlu0 %3712
      %v3715 = vsel %vm723, %v3382, %v3481
      %v3717 = vsel %vm723, %v3383, %v3483
      %v3719 = vsel %vm723, %v3384, %v3485
      %v3721 = vsel %vm723, %v3385, %v3487
      %v3723 = vsel %vm723, %v3386, %v3489
      %v3725 = vsel %vm723, %v3387, %v3491
      %v3727 = vsel %vm723, %v3388, %v3493
      %v3729 = vsel %vm723, %v3389, %v3495
      %v3731 = vsel %vm723, %v3390, %v3497
      %v3733 = vsel %vm723, %v3391, %v3499
      %v3735 = vsel %vm723, %v3392, %v3501
      %v3737 = vsel %vm723, %v3393, %v3503
      %v3739 = vsel %vm781, %v3715, %v3529
      %v3741 = vsel %vm781, %v3717, %v3531
      %v3743 = vsel %vm781, %v3719, %v3533
      %v3745 = vsel %vm781, %v3721, %v3535
      %v3747 = vsel %vm781, %v3723, %v3537
      %v3749 = vsel %vm781, %v3725, %v3539
      %v3751 = vsel %vm781, %v3727, %v3541
      %v3753 = vsel %vm781, %v3729, %v3543
      %v3755 = vsel %vm781, %v3731, %v3545
      %v3757 = vsel %vm781, %v3733, %v3547
      %v3759 = vsel %vm781, %v3735, %v3549
      %v3761 = vsel %vm781, %v3737, %v3551
      %v3763 = vsel %vm839, %v3739, %v3554
      %v3765 = vsel %vm839, %v3741, %v3556
      %v3767 = vsel %vm839, %v3743, %v3558
      %v3769 = vsel %vm839, %v3745, %v3560
      %v3771 = vsel %vm839, %v3747, %v3562
      %v3773 = vsel %vm839, %v3749, %v3564
      %v3775 = vsel %vm839, %v3751, %v3566
      %v3777 = vsel %vm839, %v3753, %v3568
      %v3779 = vsel %vm839, %v3755, %v3570
      %v3781 = vsel %vm839, %v3757, %v3572
      %v3783 = vsel %vm839, %v3759, %v3574
      %v3785 = vsel %vm839, %v3761, %v3576
      %v3787 = vsel %vm897, %v3763, %v3585
      %v3789 = vsel %vm897, %v3765, %v3587
      %v3791 = vsel %vm897, %v3767, %v3589
      %v3793 = vsel %vm897, %v3769, %v3591
      %v3795 = vsel %vm897, %v3771, %v3593
      %v3797 = vsel %vm897, %v3773, %v3595
      %v3799 = vsel %vm897, %v3775, %v3597
      %v3801 = vsel %vm897, %v3777, %v3599
      %v3803 = vsel %vm897, %v3779, %v3601
      %v3805 = vsel %vm897, %v3781, %v3603
      %v3807 = vsel %vm897, %v3783, %v3605
      %v3809 = vsel %vm897, %v3785, %v3607
      %vm3810 = vcmask 326656
      %v3812 = vsel %vm3810, %v3787, %v3610
      %v3814 = vsel %vm3810, %v3789, %v3612
      %v3816 = vsel %vm3810, %v3791, %v3614
      %v3818 = vsel %vm3810, %v3793, %v3616
      %v3820 = vsel %vm3810, %v3795, %v3618
      %v3822 = vsel %vm3810, %v3797, %v3620
      %v3824 = vsel %vm3810, %v3799, %v3622
      %v3826 = vsel %vm3810, %v3801, %v3624
      %v3828 = vsel %vm3810, %v3803, %v3626
      %v3830 = vsel %vm3810, %v3805, %v3628
      %v3832 = vsel %vm3810, %v3807, %v3630
      %v3834 = vsel %vm3810, %v3809, %v3632
      %vm3835 = vcmask 392192
      %v3837 = vsel %vm3835, %v3812, %v3635
      %v3839 = vsel %vm3835, %v3814, %v3637
      %v3841 = vsel %vm3835, %v3816, %v3639
      %v3843 = vsel %vm3835, %v3818, %v3641
      %v3845 = vsel %vm3835, %v3820, %v3643
      %v3847 = vsel %vm3835, %v3822, %v3645
      %v3849 = vsel %vm3835, %v3824, %v3647
      %v3851 = vsel %vm3835, %v3826, %v3649
      %v3853 = vsel %vm3835, %v3828, %v3651
      %v3855 = vsel %vm3835, %v3830, %v3653
      %v3857 = vsel %vm3835, %v3832, %v3655
      %v3859 = vsel %vm3835, %v3834, %v3657
      %vm3860 = vcmask 457728
      %v3862 = vsel %vm3860, %v3837, %v3666
      %v3864 = vsel %vm3860, %v3839, %v3668
      %v3866 = vsel %vm3860, %v3841, %v3670
      %v3868 = vsel %vm3860, %v3843, %v3672
      %v3870 = vsel %vm3860, %v3845, %v3674
      %v3872 = vsel %vm3860, %v3847, %v3676
      %v3874 = vsel %vm3860, %v3849, %v3678
      %v3876 = vsel %vm3860, %v3851, %v3680
      %v3878 = vsel %vm3860, %v3853, %v3682
      %v3880 = vsel %vm3860, %v3855, %v3684
      %v3882 = vsel %vm3860, %v3857, %v3686
      %v3884 = vsel %vm3860, %v3859, %v3688
      %vm3885 = vcmask 523264
      %v3887 = vsel %vm3885, %v3862, %v3691
      %v3889 = vsel %vm3885, %v3864, %v3693
      %v3891 = vsel %vm3885, %v3866, %v3695
      %v3893 = vsel %vm3885, %v3868, %v3697
      %v3895 = vsel %vm3885, %v3870, %v3699
      %v3897 = vsel %vm3885, %v3872, %v3701
      %v3899 = vsel %vm3885, %v3874, %v3703
      %v3901 = vsel %vm3885, %v3876, %v3705
      %v3903 = vsel %vm3885, %v3878, %v3707
      %v3905 = vsel %vm3885, %v3880, %v3709
      %v3907 = vsel %vm3885, %v3882, %v3711
      %v3909 = vsel %vm3885, %v3884, %v3713
      %v3922 = vcombine.high %v3887, %v3887
      %v3924 = vunpack.c.l.s4 1983009808
      %v3925 = vunpack.c.0.s8 %v3924
      %v3926 = vlaneseq
      %v3927 = vshrl.u32 %v3926, 7
      %v3928 = vsub.s32 %v3925, %v3927
      %v3929 = vrot.slane %v3887, %v3928
      %v3931 = vunpack.c.l.s4 1983009808
      %v3932 = vunpack.c.0.s8 %v3931
      %v3933 = vlaneseq
      %v3934 = vshrl.u32 %v3933, 7
      %v3935 = vsub.s32 %v3932, %v3934
      %v3936 = vrot.slane %v3922, %v3935
      %v3937 = vcombine.high %v3929, %v3929
      %v3938 = vcombine.high %v3889, %v3889
      %v3940 = vunpack.c.l.s4 1983009808
      %v3941 = vunpack.c.0.s8 %v3940
      %v3942 = vlaneseq
      %v3943 = vshrl.u32 %v3942, 7
      %v3944 = vsub.s32 %v3941, %v3943
      %v3945 = vrot.slane %v3889, %v3944
      %v3947 = vunpack.c.l.s4 1983009808
      %v3948 = vunpack.c.0.s8 %v3947
      %v3949 = vlaneseq
      %v3950 = vshrl.u32 %v3949, 7
      %v3951 = vsub.s32 %v3948, %v3950
      %v3952 = vrot.slane %v3938, %v3951
      %v3953 = vcombine.high %v3945, %v3945
      %v3954 = vcombine.high %v3891, %v3891
      %v3956 = vunpack.c.l.s4 1983009808
      %v3957 = vunpack.c.0.s8 %v3956
      %v3958 = vlaneseq
      %v3959 = vshrl.u32 %v3958, 7
      %v3960 = vsub.s32 %v3957, %v3959
      %v3961 = vrot.slane %v3891, %v3960
      %v3963 = vunpack.c.l.s4 1983009808
      %v3964 = vunpack.c.0.s8 %v3963
      %v3965 = vlaneseq
      %v3966 = vshrl.u32 %v3965, 7
      %v3967 = vsub.s32 %v3964, %v3966
      %v3968 = vrot.slane %v3954, %v3967
      %v3969 = vcombine.high %v3961, %v3961
      %v3970 = vcombine.high %v3893, %v3893
      %v3972 = vunpack.c.l.s4 1983009808
      %v3973 = vunpack.c.0.s8 %v3972
      %v3974 = vlaneseq
      %v3975 = vshrl.u32 %v3974, 7
      %v3976 = vsub.s32 %v3973, %v3975
      %v3977 = vrot.slane %v3893, %v3976
      %v3979 = vunpack.c.l.s4 1983009808
      %v3980 = vunpack.c.0.s8 %v3979
      %v3981 = vlaneseq
      %v3982 = vshrl.u32 %v3981, 7
      %v3983 = vsub.s32 %v3980, %v3982
      %v3984 = vrot.slane %v3970, %v3983
      %v3985 = vcombine.high %v3977, %v3977
      %v3986 = vcombine.high %v3895, %v3895
      %v3988 = vunpack.c.l.s4 1983009808
      %v3989 = vunpack.c.0.s8 %v3988
      %v3990 = vlaneseq
      %v3991 = vshrl.u32 %v3990, 7
      %v3992 = vsub.s32 %v3989, %v3991
      %v3993 = vrot.slane %v3895, %v3992
      %v3995 = vunpack.c.l.s4 1983009808
      %v3996 = vunpack.c.0.s8 %v3995
      %v3997 = vlaneseq
      %v3998 = vshrl.u32 %v3997, 7
      %v3999 = vsub.s32 %v3996, %v3998
      %v4000 = vrot.slane %v3986, %v3999
      %v4001 = vcombine.high %v3993, %v3993
      %v4002 = vcombine.high %v3897, %v3897
      %v4004 = vunpack.c.l.s4 1983009808
      %v4005 = vunpack.c.0.s8 %v4004
      %v4006 = vlaneseq
      %v4007 = vshrl.u32 %v4006, 7
      %v4008 = vsub.s32 %v4005, %v4007
      %v4009 = vrot.slane %v3897, %v4008
      %v4011 = vunpack.c.l.s4 1983009808
      %v4012 = vunpack.c.0.s8 %v4011
      %v4013 = vlaneseq
      %v4014 = vshrl.u32 %v4013, 7
      %v4015 = vsub.s32 %v4012, %v4014
      %v4016 = vrot.slane %v4002, %v4015
      %v4017 = vcombine.high %v4009, %v4009
      %v4018 = vcombine.high %v3899, %v3899
      %v4020 = vunpack.c.l.s4 1983009808
      %v4021 = vunpack.c.0.s8 %v4020
      %v4022 = vlaneseq
      %v4023 = vshrl.u32 %v4022, 7
      %v4024 = vsub.s32 %v4021, %v4023
      %v4025 = vrot.slane %v3899, %v4024
      %v4027 = vunpack.c.l.s4 1983009808
      %v4028 = vunpack.c.0.s8 %v4027
      %v4029 = vlaneseq
      %v4030 = vshrl.u32 %v4029, 7
      %v4031 = vsub.s32 %v4028, %v4030
      %v4032 = vrot.slane %v4018, %v4031
      %v4033 = vcombine.high %v4025, %v4025
      %v4034 = vcombine.high %v3901, %v3901
      %v4036 = vunpack.c.l.s4 1983009808
      %v4037 = vunpack.c.0.s8 %v4036
      %v4038 = vlaneseq
      %v4039 = vshrl.u32 %v4038, 7
      %v4040 = vsub.s32 %v4037, %v4039
      %v4041 = vrot.slane %v3901, %v4040
      %v4043 = vunpack.c.l.s4 1983009808
      %v4044 = vunpack.c.0.s8 %v4043
      %v4045 = vlaneseq
      %v4046 = vshrl.u32 %v4045, 7
      %v4047 = vsub.s32 %v4044, %v4046
      %v4048 = vrot.slane %v4034, %v4047
      %v4049 = vcombine.high %v4041, %v4041
      %v4050 = vcombine.high %v3903, %v3903
      %v4052 = vunpack.c.l.s4 1983009808
      %v4053 = vunpack.c.0.s8 %v4052
      %v4054 = vlaneseq
      %v4055 = vshrl.u32 %v4054, 7
      %v4056 = vsub.s32 %v4053, %v4055
      %v4057 = vrot.slane %v3903, %v4056
      %v4059 = vunpack.c.l.s4 1983009808
      %v4060 = vunpack.c.0.s8 %v4059
      %v4061 = vlaneseq
      %v4062 = vshrl.u32 %v4061, 7
      %v4063 = vsub.s32 %v4060, %v4062
      %v4064 = vrot.slane %v4050, %v4063
      %v4065 = vcombine.high %v4057, %v4057
      %v4066 = vcombine.high %v3905, %v3905
      %v4068 = vunpack.c.l.s4 1983009808
      %v4069 = vunpack.c.0.s8 %v4068
      %v4070 = vlaneseq
      %v4071 = vshrl.u32 %v4070, 7
      %v4072 = vsub.s32 %v4069, %v4071
      %v4073 = vrot.slane %v3905, %v4072
      %v4075 = vunpack.c.l.s4 1983009808
      %v4076 = vunpack.c.0.s8 %v4075
      %v4077 = vlaneseq
      %v4078 = vshrl.u32 %v4077, 7
      %v4079 = vsub.s32 %v4076, %v4078
      %v4080 = vrot.slane %v4066, %v4079
      %v4081 = vcombine.high %v4073, %v4073
      %v4082 = vcombine.high %v3907, %v3907
      %v4084 = vunpack.c.l.s4 1983009808
      %v4085 = vunpack.c.0.s8 %v4084
      %v4086 = vlaneseq
      %v4087 = vshrl.u32 %v4086, 7
      %v4088 = vsub.s32 %v4085, %v4087
      %v4089 = vrot.slane %v3907, %v4088
      %v4091 = vunpack.c.l.s4 1983009808
      %v4092 = vunpack.c.0.s8 %v4091
      %v4093 = vlaneseq
      %v4094 = vshrl.u32 %v4093, 7
      %v4095 = vsub.s32 %v4092, %v4094
      %v4096 = vrot.slane %v4082, %v4095
      %v4097 = vcombine.high %v4089, %v4089
      %v4098 = vcombine.high %v3909, %v3909
      %v4100 = vunpack.c.l.s4 1983009808
      %v4101 = vunpack.c.0.s8 %v4100
      %v4102 = vlaneseq
      %v4103 = vshrl.u32 %v4102, 7
      %v4104 = vsub.s32 %v4101, %v4103
      %v4105 = vrot.slane %v3909, %v4104
      %v4107 = vunpack.c.l.s4 1983009808
      %v4108 = vunpack.c.0.s8 %v4107
      %v4109 = vlaneseq
      %v4110 = vshrl.u32 %v4109, 7
      %v4111 = vsub.s32 %v4108, %v4110
      %v4112 = vrot.slane %v4098, %v4111
      %v4113 = vcombine.high %v4105, %v4105
      %v4115 = vlaneseq
      %v4116 = vshrl.u32 %v4115, 7
      %v4117 = vsub.s32 0, %v4116
      %v4118 = vrot.slane %v2891, %v4117
      %v4120 = vcombine.low %v3929, %v3937
      %v4121 = vcombine.low %v3936, %v3945
      %v4123 = vunpack.c.l.s4 1983009808
      %v4124 = vunpack.c.0.s8 %v4123
      %v4125 = vlaneseq
      %v4126 = vshrl.u32 %v4125, 7
      %v4127 = vsub.s32 %v4124, %v4126
      %v4128 = vrot.slane %v4120, %v4127
      %v4130 = vunpack.c.l.s4 1983009808
      %v4131 = vunpack.c.0.s8 %v4130
      %v4132 = vlaneseq
      %v4133 = vshrl.u32 %v4132, 7
      %v4134 = vsub.s32 %v4131, %v4133
      %v4135 = vrot.slane %v4121, %v4134
      %v4136 = vcombine.low %v4128, %v4135
      %v4137 = vcombine.low %v3953, %v3952
      %v4138 = vcombine.low %v3961, %v3969
      %v4140 = vunpack.c.l.s4 1983009808
      %v4141 = vunpack.c.0.s8 %v4140
      %v4142 = vlaneseq
      %v4143 = vshrl.u32 %v4142, 7
      %v4144 = vsub.s32 %v4141, %v4143
      %v4145 = vrot.slane %v4137, %v4144
      %v4147 = vunpack.c.l.s4 1983009808
      %v4148 = vunpack.c.0.s8 %v4147
      %v4149 = vlaneseq
      %v4150 = vshrl.u32 %v4149, 7
      %v4151 = vsub.s32 %v4148, %v4150
      %v4152 = vrot.slane %v4138, %v4151
      %v4153 = vcombine.low %v4145, %v4152
      %v4154 = vcombine.low %v3968, %v3977
      %v4155 = vcombine.low %v3985, %v3984
      %v4157 = vunpack.c.l.s4 1983009808
      %v4158 = vunpack.c.0.s8 %v4157
      %v4159 = vlaneseq
      %v4160 = vshrl.u32 %v4159, 7
      %v4161 = vsub.s32 %v4158, %v4160
      %v4162 = vrot.slane %v4154, %v4161
      %v4164 = vunpack.c.l.s4 1983009808
      %v4165 = vunpack.c.0.s8 %v4164
      %v4166 = vlaneseq
      %v4167 = vshrl.u32 %v4166, 7
      %v4168 = vsub.s32 %v4165, %v4167
      %v4169 = vrot.slane %v4155, %v4168
      %v4170 = vcombine.low %v4162, %v4169
      %v4171 = vcombine.low %v3993, %v4001
      %v4172 = vcombine.low %v4000, %v4009
      %v4174 = vunpack.c.l.s4 1983009808
      %v4175 = vunpack.c.0.s8 %v4174
      %v4176 = vlaneseq
      %v4177 = vshrl.u32 %v4176, 7
      %v4178 = vsub.s32 %v4175, %v4177
      %v4179 = vrot.slane %v4171, %v4178
      %v4181 = vunpack.c.l.s4 1983009808
      %v4182 = vunpack.c.0.s8 %v4181
      %v4183 = vlaneseq
      %v4184 = vshrl.u32 %v4183, 7
      %v4185 = vsub.s32 %v4182, %v4184
      %v4186 = vrot.slane %v4172, %v4185
      %v4187 = vcombine.low %v4179, %v4186
      %v4188 = vcombine.low %v4017, %v4016
      %v4189 = vcombine.low %v4025, %v4033
      %v4191 = vunpack.c.l.s4 1983009808
      %v4192 = vunpack.c.0.s8 %v4191
      %v4193 = vlaneseq
      %v4194 = vshrl.u32 %v4193, 7
      %v4195 = vsub.s32 %v4192, %v4194
      %v4196 = vrot.slane %v4188, %v4195
      %v4198 = vunpack.c.l.s4 1983009808
      %v4199 = vunpack.c.0.s8 %v4198
      %v4200 = vlaneseq
      %v4201 = vshrl.u32 %v4200, 7
      %v4202 = vsub.s32 %v4199, %v4201
      %v4203 = vrot.slane %v4189, %v4202
      %v4204 = vcombine.low %v4196, %v4203
      %v4205 = vcombine.low %v4032, %v4041
      %v4206 = vcombine.low %v4049, %v4048
      %v4208 = vunpack.c.l.s4 1983009808
      %v4209 = vunpack.c.0.s8 %v4208
      %v4210 = vlaneseq
      %v4211 = vshrl.u32 %v4210, 7
      %v4212 = vsub.s32 %v4209, %v4211
      %v4213 = vrot.slane %v4205, %v4212
      %v4215 = vunpack.c.l.s4 1983009808
      %v4216 = vunpack.c.0.s8 %v4215
      %v4217 = vlaneseq
      %v4218 = vshrl.u32 %v4217, 7
      %v4219 = vsub.s32 %v4216, %v4218
      %v4220 = vrot.slane %v4206, %v4219
      %v4221 = vcombine.low %v4213, %v4220
      %v4222 = vcombine.low %v4057, %v4065
      %v4223 = vcombine.low %v4064, %v4073
      %v4225 = vunpack.c.l.s4 1983009808
      %v4226 = vunpack.c.0.s8 %v4225
      %v4227 = vlaneseq
      %v4228 = vshrl.u32 %v4227, 7
      %v4229 = vsub.s32 %v4226, %v4228
      %v4230 = vrot.slane %v4222, %v4229
      %v4232 = vunpack.c.l.s4 1983009808
      %v4233 = vunpack.c.0.s8 %v4232
      %v4234 = vlaneseq
      %v4235 = vshrl.u32 %v4234, 7
      %v4236 = vsub.s32 %v4233, %v4235
      %v4237 = vrot.slane %v4223, %v4236
      %v4238 = vcombine.low %v4230, %v4237
      %v4239 = vcombine.low %v4081, %v4080
      %v4240 = vcombine.low %v4089, %v4097
      %v4242 = vunpack.c.l.s4 1983009808
      %v4243 = vunpack.c.0.s8 %v4242
      %v4244 = vlaneseq
      %v4245 = vshrl.u32 %v4244, 7
      %v4246 = vsub.s32 %v4243, %v4245
      %v4247 = vrot.slane %v4239, %v4246
      %v4249 = vunpack.c.l.s4 1983009808
      %v4250 = vunpack.c.0.s8 %v4249
      %v4251 = vlaneseq
      %v4252 = vshrl.u32 %v4251, 7
      %v4253 = vsub.s32 %v4250, %v4252
      %v4254 = vrot.slane %v4240, %v4253
      %v4255 = vcombine.low %v4247, %v4254
      %v4256 = vcombine.low %v4096, %v4105
      %v4257 = vcombine.low %v4113, %v4112
      %v4259 = vunpack.c.l.s4 1983009808
      %v4260 = vunpack.c.0.s8 %v4259
      %v4261 = vlaneseq
      %v4262 = vshrl.u32 %v4261, 7
      %v4263 = vsub.s32 %v4260, %v4262
      %v4264 = vrot.slane %v4256, %v4263
      %v4266 = vunpack.c.l.s4 1983009808
      %v4267 = vunpack.c.0.s8 %v4266
      %v4268 = vlaneseq
      %v4269 = vshrl.u32 %v4268, 7
      %v4270 = vsub.s32 %v4267, %v4269
      %v4271 = vrot.slane %v4257, %v4270
      %v4272 = vcombine.low %v4264, %v4271
      %v4282 = vunpack.c.l.b16 %v2882
      %v4283 = vunpack.c.l.b16 %v2883
      %v4284 = vunpack.c.l.b16 %v2884
      %v4285 = vunpack.c.l.b16 %v2885
      %v4286 = vunpack.c.l.b16 %v2886
      %v4287 = vunpack.c.l.b16 %v2887
      %v4288 = vunpack.c.l.b16 %v2888
      %v4289 = vunpack.c.l.b16 %v2889
      %v4290 = vunpack.c.l.b16 %v2890
      %v4291 = vpack.c.b16 %v4283, %v4282
      %v4292 = vpack.c.b16 %v4285, %v4284
      %v4293 = vpack.c.b16 %v4287, %v4286
      %v4294 = vpack.c.b16 %v4289, %v4288
      %v4295 = vpack.c.b16 %v4290, %v4290
      %vm4300 = vcmask 588800
      %v4302 = vsel %vm4300, %v4136, 0
      %v4305 = vsel %vm4300, %v4153, 0
      %v4308 = vsel %vm4300, %v4170, 0
      %v4311 = vsel %vm4300, %v4187, 0
      %v4314 = vsel %vm4300, %v4204, 0
      %v4317 = vsel %vm4300, %v4221, 0
      %v4320 = vsel %vm4300, %v4238, 0
      %v4323 = vsel %vm4300, %v4255, 0
      %v4326 = vsel %vm4300, %v4272, 0
      %vm4328 = vcmask 1043456
      %v4330 = vsel %vm4328, %v4295, 0
      %4332 = vmatprep.subr.bf16.mxu0 0
      %4333 = vmatpush1.bf16.msra.mxu0 %v4291
      %4334 = vmatprep.subr.bf16.mxu0 0
      %4335 = vmatpush1.bf16.msra.mxu0 %v4292
      %4336 = vmatprep.subr.bf16.mxu0 0
      %4337 = vmatpush1.bf16.msra.mxu0 %v4293
      %4338 = vmatprep.subr.bf16.mxu0 0
      %4339 = vmatpush1.bf16.msra.mxu0 %v4294
      %4340 = vmatprep.subr.bf16.mxu0 0
      %4341 = vmatpush1.bf16.msra.mxu0 %v4330
      %4342 = vmatprep.subr.bf16.mxu0 0
      %4343 = vmatpush1.bf16.msra.mxu0 0
      %4344 = vmatprep.subr.bf16.mxu0 0
      %4345 = vmatpush1.bf16.msra.mxu0 0
      %4346 = vmatprep.subr.bf16.mxu0 0
      %4347 = vmatpush1.bf16.msra.mxu0 0
      %4348 = vmatprep.subr.bf16.mxu0 0
      %4349 = vmatpush1.bf16.msra.mxu0 0
      %4350 = vmatprep.subr.bf16.mxu0 0
      %4351 = vmatpush1.bf16.msra.mxu0 0
      %4352 = vmatprep.subr.bf16.mxu0 0
      %4353 = vmatpush1.bf16.msra.mxu0 0
      %4354 = vmatprep.subr.bf16.mxu0 0
      %4355 = vmatpush1.bf16.msra.mxu0 0
      %4356 = vmatprep.subr.bf16.mxu0 0
      %4357 = vmatpush1.bf16.msra.mxu0 0
      %4358 = vmatprep.subr.bf16.mxu0 0
      %4359 = vmatpush1.bf16.msra.mxu0 0
      %4360 = vmatprep.subr.bf16.mxu0 0
      %4361 = vmatpush1.bf16.msra.mxu0 0
      %4362 = vmatprep.subr.bf16.mxu0 0
      %4363 = vmatpush1.bf16.msra.mxu0 0
      %4364 = vmatprep.mubr.bf16.mxu0 0
      %4365 = vmatmul.mubr.bf16.gmra.mrb[0].mxu0 %v4302
      %v4366 = vpop.f32.mrb[0].mxu0
      %v4367 = vadd.f32 %v4118, %v4366
      %v4368 = vpop.f32.mrb[0].mxu0
      %v4369 = vpop.f32.mrb[0].mxu0
      %v4370 = vadd.f32 %v4118, %v4369
      %v4371 = vpop.f32.mrb[0].mxu0
      %4372 = vmatprep.mubr.bf16.mxu0 0
      %4373 = vmatmul.mubr.bf16.gmra.mrb[0].mxu0 %v4305
      %v4374 = vpop.f32.mrb[0].mxu0
      %v4375 = vadd.f32 %v4118, %v4374
      %v4376 = vpop.f32.mrb[0].mxu0
      %v4377 = vpop.f32.mrb[0].mxu0
      %v4378 = vadd.f32 %v4118, %v4377
      %v4379 = vpop.f32.mrb[0].mxu0
      %4380 = vmatprep.mubr.bf16.mxu0 0
      %4381 = vmatmul.mubr.bf16.gmra.mrb[0].mxu0 %v4308
      %v4382 = vpop.f32.mrb[0].mxu0
      %v4383 = vadd.f32 %v4118, %v4382
      %v4384 = vpop.f32.mrb[0].mxu0
      %v4385 = vpop.f32.mrb[0].mxu0
      %v4386 = vadd.f32 %v4118, %v4385
      %v4387 = vpop.f32.mrb[0].mxu0
      %4388 = vmatprep.mubr.bf16.mxu0 0
      %4389 = vmatmul.mubr.bf16.gmra.mrb[0].mxu0 %v4311
      %v4390 = vpop.f32.mrb[0].mxu0
      %v4391 = vadd.f32 %v4118, %v4390
      %v4392 = vpop.f32.mrb[0].mxu0
      %v4393 = vpop.f32.mrb[0].mxu0
      %v4394 = vadd.f32 %v4118, %v4393
      %v4395 = vpop.f32.mrb[0].mxu0
      %4396 = vmatprep.mubr.bf16.mxu0 0
      %4397 = vmatmul.mubr.bf16.gmra.mrb[0].mxu0 %v4314
      %v4398 = vpop.f32.mrb[0].mxu0
      %v4399 = vadd.f32 %v4118, %v4398
      %v4400 = vpop.f32.mrb[0].mxu0
      %v4401 = vpop.f32.mrb[0].mxu0
      %v4402 = vadd.f32 %v4118, %v4401
      %v4403 = vpop.f32.mrb[0].mxu0
      %4404 = vmatprep.mubr.bf16.mxu0 0
      %4405 = vmatmul.mubr.bf16.gmra.mrb[0].mxu0 %v4317
      %v4406 = vpop.f32.mrb[0].mxu0
      %v4407 = vadd.f32 %v4118, %v4406
      %v4408 = vpop.f32.mrb[0].mxu0
      %v4409 = vpop.f32.mrb[0].mxu0
      %v4410 = vadd.f32 %v4118, %v4409
      %v4411 = vpop.f32.mrb[0].mxu0
      %4412 = vmatprep.mubr.bf16.mxu0 0
      %4413 = vmatmul.mubr.bf16.gmra.mrb[0].mxu0 %v4320
      %v4414 = vpop.f32.mrb[0].mxu0
      %v4415 = vadd.f32 %v4118, %v4414
      %v4416 = vpop.f32.mrb[0].mxu0
      %v4417 = vpop.f32.mrb[0].mxu0
      %v4418 = vadd.f32 %v4118, %v4417
      %v4419 = vpop.f32.mrb[0].mxu0
      %4420 = vmatprep.mubr.bf16.mxu0 0
      %4421 = vmatmul.mubr.bf16.gmra.mrb[0].mxu0 %v4323
      %v4422 = vpop.f32.mrb[0].mxu0
      %v4423 = vadd.f32 %v4118, %v4422
      %v4424 = vpop.f32.mrb[0].mxu0
      %v4425 = vpop.f32.mrb[0].mxu0
      %v4426 = vadd.f32 %v4118, %v4425
      %v4427 = vpop.f32.mrb[0].mxu0
      %4428 = vmatprep.mubr.bf16.mxu0 0
      %4429 = vmatmul.mubr.bf16.gmra.mrb[0].mxu0 %v4326
      %v4430 = vpop.f32.mrb[0].mxu0
      %v4431 = vadd.f32 %v4118, %v4430
      %v4432 = vpop.f32.mrb[0].mxu0
      %v4433 = vpop.f32.mrb[0].mxu0
      %v4434 = vadd.f32 %v4118, %v4433
      %v4435 = vpop.f32.mrb[0].mxu0
      %4436 = vdwg.mxu0
      %v4437 = vmax.f32 %v4367, 0.0
      %v4438 = vmax.f32 %v4370, 0.0
      %v4439 = vmax.f32 %v4375, 0.0
      %v4440 = vmax.f32 %v4378, 0.0
      %v4441 = vmax.f32 %v4383, 0.0
      %v4442 = vmax.f32 %v4386, 0.0
      %v4443 = vmax.f32 %v4391, 0.0
      %v4444 = vmax.f32 %v4394, 0.0
      %v4445 = vmax.f32 %v4399, 0.0
      %v4446 = vmax.f32 %v4402, 0.0
      %v4447 = vmax.f32 %v4407, 0.0
      %v4448 = vmax.f32 %v4410, 0.0
      %v4449 = vmax.f32 %v4415, 0.0
      %v4450 = vmax.f32 %v4418, 0.0
      %v4451 = vmax.f32 %v4423, 0.0
      %v4452 = vmax.f32 %v4426, 0.0
      %v4453 = vmax.f32 %v4431, 0.0
      %v4454 = vmax.f32 %v4434, 0.0
      %v4473 = vcombine.high %v4437, %v4437
      %v4475 = vunpack.c.l.s4 1983009808
      %v4476 = vunpack.c.0.s8 %v4475
      %v4477 = vlaneseq
      %v4478 = vshrl.u32 %v4477, 7
      %v4479 = vsub.s32 %v4476, %v4478
      %v4480 = vrot.slane %v4437, %v4479
      %v4482 = vunpack.c.l.s4 1983009808
      %v4483 = vunpack.c.0.s8 %v4482
      %v4484 = vlaneseq
      %v4485 = vshrl.u32 %v4484, 7
      %v4486 = vsub.s32 %v4483, %v4485
      %v4487 = vrot.slane %v4473, %v4486
      %v4488 = vcombine.high %v4480, %v4480
      %v4489 = vcombine.high %v4487, %v4487
      %v4490 = vcombine.high %v4438, %v4438
      %v4492 = vunpack.c.l.s4 1983009808
      %v4493 = vunpack.c.0.s8 %v4492
      %v4494 = vlaneseq
      %v4495 = vshrl.u32 %v4494, 7
      %v4496 = vsub.s32 %v4493, %v4495
      %v4497 = vrot.slane %v4438, %v4496
      %v4499 = vunpack.c.l.s4 1983009808
      %v4500 = vunpack.c.0.s8 %v4499
      %v4501 = vlaneseq
      %v4502 = vshrl.u32 %v4501, 7
      %v4503 = vsub.s32 %v4500, %v4502
      %v4504 = vrot.slane %v4490, %v4503
      %v4505 = vcombine.high %v4497, %v4497
      %v4506 = vcombine.high %v4504, %v4504
      %v4507 = vcombine.high %v4439, %v4439
      %v4509 = vunpack.c.l.s4 1983009808
      %v4510 = vunpack.c.0.s8 %v4509
      %v4511 = vlaneseq
      %v4512 = vshrl.u32 %v4511, 7
      %v4513 = vsub.s32 %v4510, %v4512
      %v4514 = vrot.slane %v4439, %v4513
      %v4516 = vunpack.c.l.s4 1983009808
      %v4517 = vunpack.c.0.s8 %v4516
      %v4518 = vlaneseq
      %v4519 = vshrl.u32 %v4518, 7
      %v4520 = vsub.s32 %v4517, %v4519
      %v4521 = vrot.slane %v4507, %v4520
      %v4522 = vcombine.high %v4514, %v4514
      %v4523 = vcombine.high %v4521, %v4521
      %v4524 = vcombine.high %v4440, %v4440
      %v4526 = vunpack.c.l.s4 1983009808
      %v4527 = vunpack.c.0.s8 %v4526
      %v4528 = vlaneseq
      %v4529 = vshrl.u32 %v4528, 7
      %v4530 = vsub.s32 %v4527, %v4529
      %v4531 = vrot.slane %v4440, %v4530
      %v4533 = vunpack.c.l.s4 1983009808
      %v4534 = vunpack.c.0.s8 %v4533
      %v4535 = vlaneseq
      %v4536 = vshrl.u32 %v4535, 7
      %v4537 = vsub.s32 %v4534, %v4536
      %v4538 = vrot.slane %v4524, %v4537
      %v4539 = vcombine.high %v4531, %v4531
      %v4540 = vcombine.high %v4538, %v4538
      %v4541 = vcombine.high %v4441, %v4441
      %v4543 = vunpack.c.l.s4 1983009808
      %v4544 = vunpack.c.0.s8 %v4543
      %v4545 = vlaneseq
      %v4546 = vshrl.u32 %v4545, 7
      %v4547 = vsub.s32 %v4544, %v4546
      %v4548 = vrot.slane %v4441, %v4547
      %v4550 = vunpack.c.l.s4 1983009808
      %v4551 = vunpack.c.0.s8 %v4550
      %v4552 = vlaneseq
      %v4553 = vshrl.u32 %v4552, 7
      %v4554 = vsub.s32 %v4551, %v4553
      %v4555 = vrot.slane %v4541, %v4554
      %v4556 = vcombine.high %v4548, %v4548
      %v4557 = vcombine.high %v4555, %v4555
      %v4558 = vcombine.high %v4442, %v4442
      %v4560 = vunpack.c.l.s4 1983009808
      %v4561 = vunpack.c.0.s8 %v4560
      %v4562 = vlaneseq
      %v4563 = vshrl.u32 %v4562, 7
      %v4564 = vsub.s32 %v4561, %v4563
      %v4565 = vrot.slane %v4442, %v4564
      %v4567 = vunpack.c.l.s4 1983009808
      %v4568 = vunpack.c.0.s8 %v4567
      %v4569 = vlaneseq
      %v4570 = vshrl.u32 %v4569, 7
      %v4571 = vsub.s32 %v4568, %v4570
      %v4572 = vrot.slane %v4558, %v4571
      %v4573 = vcombine.high %v4565, %v4565
      %v4574 = vcombine.high %v4572, %v4572
      %v4575 = vcombine.high %v4443, %v4443
      %v4577 = vunpack.c.l.s4 1983009808
      %v4578 = vunpack.c.0.s8 %v4577
      %v4579 = vlaneseq
      %v4580 = vshrl.u32 %v4579, 7
      %v4581 = vsub.s32 %v4578, %v4580
      %v4582 = vrot.slane %v4443, %v4581
      %v4584 = vunpack.c.l.s4 1983009808
      %v4585 = vunpack.c.0.s8 %v4584
      %v4586 = vlaneseq
      %v4587 = vshrl.u32 %v4586, 7
      %v4588 = vsub.s32 %v4585, %v4587
      %v4589 = vrot.slane %v4575, %v4588
      %v4590 = vcombine.high %v4582, %v4582
      %v4591 = vcombine.high %v4589, %v4589
      %v4592 = vcombine.high %v4444, %v4444
      %v4594 = vunpack.c.l.s4 1983009808
      %v4595 = vunpack.c.0.s8 %v4594
      %v4596 = vlaneseq
      %v4597 = vshrl.u32 %v4596, 7
      %v4598 = vsub.s32 %v4595, %v4597
      %v4599 = vrot.slane %v4444, %v4598
      %v4601 = vunpack.c.l.s4 1983009808
      %v4602 = vunpack.c.0.s8 %v4601
      %v4603 = vlaneseq
      %v4604 = vshrl.u32 %v4603, 7
      %v4605 = vsub.s32 %v4602, %v4604
      %v4606 = vrot.slane %v4592, %v4605
      %v4607 = vcombine.high %v4599, %v4599
      %v4608 = vcombine.high %v4606, %v4606
      %v4609 = vcombine.high %v4445, %v4445
      %v4611 = vunpack.c.l.s4 1983009808
      %v4612 = vunpack.c.0.s8 %v4611
      %v4613 = vlaneseq
      %v4614 = vshrl.u32 %v4613, 7
      %v4615 = vsub.s32 %v4612, %v4614
      %v4616 = vrot.slane %v4445, %v4615
      %v4618 = vunpack.c.l.s4 1983009808
      %v4619 = vunpack.c.0.s8 %v4618
      %v4620 = vlaneseq
      %v4621 = vshrl.u32 %v4620, 7
      %v4622 = vsub.s32 %v4619, %v4621
      %v4623 = vrot.slane %v4609, %v4622
      %v4624 = vcombine.high %v4616, %v4616
      %v4625 = vcombine.high %v4623, %v4623
      %v4626 = vcombine.high %v4446, %v4446
      %v4628 = vunpack.c.l.s4 1983009808
      %v4629 = vunpack.c.0.s8 %v4628
      %v4630 = vlaneseq
      %v4631 = vshrl.u32 %v4630, 7
      %v4632 = vsub.s32 %v4629, %v4631
      %v4633 = vrot.slane %v4446, %v4632
      %v4635 = vunpack.c.l.s4 1983009808
      %v4636 = vunpack.c.0.s8 %v4635
      %v4637 = vlaneseq
      %v4638 = vshrl.u32 %v4637, 7
      %v4639 = vsub.s32 %v4636, %v4638
      %v4640 = vrot.slane %v4626, %v4639
      %v4641 = vcombine.high %v4633, %v4633
      %v4642 = vcombine.high %v4640, %v4640
      %v4643 = vcombine.high %v4447, %v4447
      %v4645 = vunpack.c.l.s4 1983009808
      %v4646 = vunpack.c.0.s8 %v4645
      %v4647 = vlaneseq
      %v4648 = vshrl.u32 %v4647, 7
      %v4649 = vsub.s32 %v4646, %v4648
      %v4650 = vrot.slane %v4447, %v4649
      %v4652 = vunpack.c.l.s4 1983009808
      %v4653 = vunpack.c.0.s8 %v4652
      %v4654 = vlaneseq
      %v4655 = vshrl.u32 %v4654, 7
      %v4656 = vsub.s32 %v4653, %v4655
      %v4657 = vrot.slane %v4643, %v4656
      %v4658 = vcombine.high %v4650, %v4650
      %v4659 = vcombine.high %v4657, %v4657
      %v4660 = vcombine.high %v4448, %v4448
      %v4662 = vunpack.c.l.s4 1983009808
      %v4663 = vunpack.c.0.s8 %v4662
      %v4664 = vlaneseq
      %v4665 = vshrl.u32 %v4664, 7
      %v4666 = vsub.s32 %v4663, %v4665
      %v4667 = vrot.slane %v4448, %v4666
      %v4669 = vunpack.c.l.s4 1983009808
      %v4670 = vunpack.c.0.s8 %v4669
      %v4671 = vlaneseq
      %v4672 = vshrl.u32 %v4671, 7
      %v4673 = vsub.s32 %v4670, %v4672
      %v4674 = vrot.slane %v4660, %v4673
      %v4675 = vcombine.high %v4667, %v4667
      %v4676 = vcombine.high %v4674, %v4674
      %v4677 = vcombine.high %v4449, %v4449
      %v4679 = vunpack.c.l.s4 1983009808
      %v4680 = vunpack.c.0.s8 %v4679
      %v4681 = vlaneseq
      %v4682 = vshrl.u32 %v4681, 7
      %v4683 = vsub.s32 %v4680, %v4682
      %v4684 = vrot.slane %v4449, %v4683
      %v4686 = vunpack.c.l.s4 1983009808
      %v4687 = vunpack.c.0.s8 %v4686
      %v4688 = vlaneseq
      %v4689 = vshrl.u32 %v4688, 7
      %v4690 = vsub.s32 %v4687, %v4689
      %v4691 = vrot.slane %v4677, %v4690
      %v4692 = vcombine.high %v4684, %v4684
      %v4693 = vcombine.high %v4691, %v4691
      %v4694 = vcombine.high %v4450, %v4450
      %v4696 = vunpack.c.l.s4 1983009808
      %v4697 = vunpack.c.0.s8 %v4696
      %v4698 = vlaneseq
      %v4699 = vshrl.u32 %v4698, 7
      %v4700 = vsub.s32 %v4697, %v4699
      %v4701 = vrot.slane %v4450, %v4700
      %v4703 = vunpack.c.l.s4 1983009808
      %v4704 = vunpack.c.0.s8 %v4703
      %v4705 = vlaneseq
      %v4706 = vshrl.u32 %v4705, 7
      %v4707 = vsub.s32 %v4704, %v4706
      %v4708 = vrot.slane %v4694, %v4707
      %v4709 = vcombine.high %v4701, %v4701
      %v4710 = vcombine.high %v4708, %v4708
      %v4711 = vcombine.high %v4451, %v4451
      %v4713 = vunpack.c.l.s4 1983009808
      %v4714 = vunpack.c.0.s8 %v4713
      %v4715 = vlaneseq
      %v4716 = vshrl.u32 %v4715, 7
      %v4717 = vsub.s32 %v4714, %v4716
      %v4718 = vrot.slane %v4451, %v4717
      %v4720 = vunpack.c.l.s4 1983009808
      %v4721 = vunpack.c.0.s8 %v4720
      %v4722 = vlaneseq
      %v4723 = vshrl.u32 %v4722, 7
      %v4724 = vsub.s32 %v4721, %v4723
      %v4725 = vrot.slane %v4711, %v4724
      %v4726 = vcombine.high %v4718, %v4718
      %v4727 = vcombine.high %v4725, %v4725
      %v4728 = vcombine.high %v4452, %v4452
      %v4730 = vunpack.c.l.s4 1983009808
      %v4731 = vunpack.c.0.s8 %v4730
      %v4732 = vlaneseq
      %v4733 = vshrl.u32 %v4732, 7
      %v4734 = vsub.s32 %v4731, %v4733
      %v4735 = vrot.slane %v4452, %v4734
      %v4737 = vunpack.c.l.s4 1983009808
      %v4738 = vunpack.c.0.s8 %v4737
      %v4739 = vlaneseq
      %v4740 = vshrl.u32 %v4739, 7
      %v4741 = vsub.s32 %v4738, %v4740
      %v4742 = vrot.slane %v4728, %v4741
      %v4743 = vcombine.high %v4735, %v4735
      %v4744 = vcombine.high %v4742, %v4742
      %v4745 = vcombine.high %v4453, %v4453
      %v4747 = vunpack.c.l.s4 1983009808
      %v4748 = vunpack.c.0.s8 %v4747
      %v4749 = vlaneseq
      %v4750 = vshrl.u32 %v4749, 7
      %v4751 = vsub.s32 %v4748, %v4750
      %v4752 = vrot.slane %v4453, %v4751
      %v4754 = vunpack.c.l.s4 1983009808
      %v4755 = vunpack.c.0.s8 %v4754
      %v4756 = vlaneseq
      %v4757 = vshrl.u32 %v4756, 7
      %v4758 = vsub.s32 %v4755, %v4757
      %v4759 = vrot.slane %v4745, %v4758
      %v4760 = vcombine.high %v4752, %v4752
      %v4761 = vcombine.high %v4759, %v4759
      %v4762 = vcombine.high %v4454, %v4454
      %v4764 = vunpack.c.l.s4 1983009808
      %v4765 = vunpack.c.0.s8 %v4764
      %v4766 = vlaneseq
      %v4767 = vshrl.u32 %v4766, 7
      %v4768 = vsub.s32 %v4765, %v4767
      %v4769 = vrot.slane %v4454, %v4768
      %v4771 = vunpack.c.l.s4 1983009808
      %v4772 = vunpack.c.0.s8 %v4771
      %v4773 = vlaneseq
      %v4774 = vshrl.u32 %v4773, 7
      %v4775 = vsub.s32 %v4772, %v4774
      %v4776 = vrot.slane %v4762, %v4775
      %v4777 = vcombine.high %v4769, %v4769
      %v4778 = vcombine.high %v4776, %v4776
      %vm4851 = vcmask 58368
      %v4852 = vsel %vm4851, %v4480, -inf
      %v4853 = vsel %vm4851, %v4504, -inf
      %v4854 = vmax.f32 %v4852, %v4853
      %v4855 = vrot.slane %v4854, 4
      %v4856 = vmax.f32 %v4854, %v4855
      %v4857 = vrot.slane %v4856, 2
      %v4858 = vmax.f32 %v4856, %v4857
      %v4859 = vrot.slane %v4858, 1
      %v4860 = vmax.f32 %v4858, %v4859
      %v4861 = vsel %vm4851, %v4488, -inf
      %v4862 = vsel %vm4851, %v4506, -inf
      %v4863 = vmax.f32 %v4861, %v4862
      %v4864 = vrot.slane %v4863, 4
      %v4865 = vmax.f32 %v4863, %v4864
      %v4866 = vrot.slane %v4865, 2
      %v4867 = vmax.f32 %v4865, %v4866
      %v4868 = vrot.slane %v4867, 1
      %v4869 = vmax.f32 %v4867, %v4868
      %v4870 = vsel %vm4851, %v4487, -inf
      %v4871 = vsel %vm4851, %v4514, -inf
      %v4872 = vmax.f32 %v4870, %v4871
      %v4873 = vrot.slane %v4872, 4
      %v4874 = vmax.f32 %v4872, %v4873
      %v4875 = vrot.slane %v4874, 2
      %v4876 = vmax.f32 %v4874, %v4875
      %v4877 = vrot.slane %v4876, 1
      %v4878 = vmax.f32 %v4876, %v4877
      %v4879 = vsel %vm4851, %v4489, -inf
      %v4880 = vsel %vm4851, %v4522, -inf
      %v4881 = vmax.f32 %v4879, %v4880
      %v4882 = vrot.slane %v4881, 4
      %v4883 = vmax.f32 %v4881, %v4882
      %v4884 = vrot.slane %v4883, 2
      %v4885 = vmax.f32 %v4883, %v4884
      %v4886 = vrot.slane %v4885, 1
      %v4887 = vmax.f32 %v4885, %v4886
      %v4888 = vsel %vm4851, %v4497, -inf
      %v4889 = vsel %vm4851, %v4521, -inf
      %v4890 = vmax.f32 %v4888, %v4889
      %v4891 = vrot.slane %v4890, 4
      %v4892 = vmax.f32 %v4890, %v4891
      %v4893 = vrot.slane %v4892, 2
      %v4894 = vmax.f32 %v4892, %v4893
      %v4895 = vrot.slane %v4894, 1
      %v4896 = vmax.f32 %v4894, %v4895
      %v4897 = vsel %vm4851, %v4505, -inf
      %v4898 = vsel %vm4851, %v4523, -inf
      %v4899 = vmax.f32 %v4897, %v4898
      %v4900 = vrot.slane %v4899, 4
      %v4901 = vmax.f32 %v4899, %v4900
      %v4902 = vrot.slane %v4901, 2
      %v4903 = vmax.f32 %v4901, %v4902
      %v4904 = vrot.slane %v4903, 1
      %v4905 = vmax.f32 %v4903, %v4904
      %v4906 = vsel %vm4851, %v4531, -inf
      %v4907 = vsel %vm4851, %v4555, -inf
      %v4908 = vmax.f32 %v4906, %v4907
      %v4909 = vrot.slane %v4908, 4
      %v4910 = vmax.f32 %v4908, %v4909
      %v4911 = vrot.slane %v4910, 2
      %v4912 = vmax.f32 %v4910, %v4911
      %v4913 = vrot.slane %v4912, 1
      %v4914 = vmax.f32 %v4912, %v4913
      %v4915 = vsel %vm4851, %v4539, -inf
      %v4916 = vsel %vm4851, %v4557, -inf
      %v4917 = vmax.f32 %v4915, %v4916
      %v4918 = vrot.slane %v4917, 4
      %v4919 = vmax.f32 %v4917, %v4918
      %v4920 = vrot.slane %v4919, 2
      %v4921 = vmax.f32 %v4919, %v4920
      %v4922 = vrot.slane %v4921, 1
      %v4923 = vmax.f32 %v4921, %v4922
      %v4924 = vsel %vm4851, %v4538, -inf
      %v4925 = vsel %vm4851, %v4565, -inf
      %v4926 = vmax.f32 %v4924, %v4925
      %v4927 = vrot.slane %v4926, 4
      %v4928 = vmax.f32 %v4926, %v4927
      %v4929 = vrot.slane %v4928, 2
      %v4930 = vmax.f32 %v4928, %v4929
      %v4931 = vrot.slane %v4930, 1
      %v4932 = vmax.f32 %v4930, %v4931
      %v4933 = vsel %vm4851, %v4540, -inf
      %v4934 = vsel %vm4851, %v4573, -inf
      %v4935 = vmax.f32 %v4933, %v4934
      %v4936 = vrot.slane %v4935, 4
      %v4937 = vmax.f32 %v4935, %v4936
      %v4938 = vrot.slane %v4937, 2
      %v4939 = vmax.f32 %v4937, %v4938
      %v4940 = vrot.slane %v4939, 1
      %v4941 = vmax.f32 %v4939, %v4940
      %v4942 = vsel %vm4851, %v4548, -inf
      %v4943 = vsel %vm4851, %v4572, -inf
      %v4944 = vmax.f32 %v4942, %v4943
      %v4945 = vrot.slane %v4944, 4
      %v4946 = vmax.f32 %v4944, %v4945
      %v4947 = vrot.slane %v4946, 2
      %v4948 = vmax.f32 %v4946, %v4947
      %v4949 = vrot.slane %v4948, 1
      %v4950 = vmax.f32 %v4948, %v4949
      %v4951 = vsel %vm4851, %v4556, -inf
      %v4952 = vsel %vm4851, %v4574, -inf
      %v4953 = vmax.f32 %v4951, %v4952
      %v4954 = vrot.slane %v4953, 4
      %v4955 = vmax.f32 %v4953, %v4954
      %v4956 = vrot.slane %v4955, 2
      %v4957 = vmax.f32 %v4955, %v4956
      %v4958 = vrot.slane %v4957, 1
      %v4959 = vmax.f32 %v4957, %v4958
      %v4960 = vsel %vm4851, %v4582, -inf
      %v4961 = vsel %vm4851, %v4606, -inf
      %v4962 = vmax.f32 %v4960, %v4961
      %v4963 = vrot.slane %v4962, 4
      %v4964 = vmax.f32 %v4962, %v4963
      %v4965 = vrot.slane %v4964, 2
      %v4966 = vmax.f32 %v4964, %v4965
      %v4967 = vrot.slane %v4966, 1
      %v4968 = vmax.f32 %v4966, %v4967
      %v4969 = vsel %vm4851, %v4590, -inf
      %v4970 = vsel %vm4851, %v4608, -inf
      %v4971 = vmax.f32 %v4969, %v4970
      %v4972 = vrot.slane %v4971, 4
      %v4973 = vmax.f32 %v4971, %v4972
      %v4974 = vrot.slane %v4973, 2
      %v4975 = vmax.f32 %v4973, %v4974
      %v4976 = vrot.slane %v4975, 1
      %v4977 = vmax.f32 %v4975, %v4976
      %v4978 = vsel %vm4851, %v4589, -inf
      %v4979 = vsel %vm4851, %v4616, -inf
      %v4980 = vmax.f32 %v4978, %v4979
      %v4981 = vrot.slane %v4980, 4
      %v4982 = vmax.f32 %v4980, %v4981
      %v4983 = vrot.slane %v4982, 2
      %v4984 = vmax.f32 %v4982, %v4983
      %v4985 = vrot.slane %v4984, 1
      %v4986 = vmax.f32 %v4984, %v4985
      %v4987 = vsel %vm4851, %v4591, -inf
      %v4988 = vsel %vm4851, %v4624, -inf
      %v4989 = vmax.f32 %v4987, %v4988
      %v4990 = vrot.slane %v4989, 4
      %v4991 = vmax.f32 %v4989, %v4990
      %v4992 = vrot.slane %v4991, 2
      %v4993 = vmax.f32 %v4991, %v4992
      %v4994 = vrot.slane %v4993, 1
      %v4995 = vmax.f32 %v4993, %v4994
      %v4996 = vsel %vm4851, %v4599, -inf
      %v4997 = vsel %vm4851, %v4623, -inf
      %v4998 = vmax.f32 %v4996, %v4997
      %v4999 = vrot.slane %v4998, 4
      %v5000 = vmax.f32 %v4998, %v4999
      %v5001 = vrot.slane %v5000, 2
      %v5002 = vmax.f32 %v5000, %v5001
      %v5003 = vrot.slane %v5002, 1
      %v5004 = vmax.f32 %v5002, %v5003
      %v5005 = vsel %vm4851, %v4607, -inf
      %v5006 = vsel %vm4851, %v4625, -inf
      %v5007 = vmax.f32 %v5005, %v5006
      %v5008 = vrot.slane %v5007, 4
      %v5009 = vmax.f32 %v5007, %v5008
      %v5010 = vrot.slane %v5009, 2
      %v5011 = vmax.f32 %v5009, %v5010
      %v5012 = vrot.slane %v5011, 1
      %v5013 = vmax.f32 %v5011, %v5012
      %v5014 = vsel %vm4851, %v4633, -inf
      %v5015 = vsel %vm4851, %v4657, -inf
      %v5016 = vmax.f32 %v5014, %v5015
      %v5017 = vrot.slane %v5016, 4
      %v5018 = vmax.f32 %v5016, %v5017
      %v5019 = vrot.slane %v5018, 2
      %v5020 = vmax.f32 %v5018, %v5019
      %v5021 = vrot.slane %v5020, 1
      %v5022 = vmax.f32 %v5020, %v5021
      %v5023 = vsel %vm4851, %v4641, -inf
      %v5024 = vsel %vm4851, %v4659, -inf
      %v5025 = vmax.f32 %v5023, %v5024
      %v5026 = vrot.slane %v5025, 4
      %v5027 = vmax.f32 %v5025, %v5026
      %v5028 = vrot.slane %v5027, 2
      %v5029 = vmax.f32 %v5027, %v5028
      %v5030 = vrot.slane %v5029, 1
      %v5031 = vmax.f32 %v5029, %v5030
      %v5032 = vsel %vm4851, %v4640, -inf
      %v5033 = vsel %vm4851, %v4667, -inf
      %v5034 = vmax.f32 %v5032, %v5033
      %v5035 = vrot.slane %v5034, 4
      %v5036 = vmax.f32 %v5034, %v5035
      %v5037 = vrot.slane %v5036, 2
      %v5038 = vmax.f32 %v5036, %v5037
      %v5039 = vrot.slane %v5038, 1
      %v5040 = vmax.f32 %v5038, %v5039
      %v5041 = vsel %vm4851, %v4642, -inf
      %v5042 = vsel %vm4851, %v4675, -inf
      %v5043 = vmax.f32 %v5041, %v5042
      %v5044 = vrot.slane %v5043, 4
      %v5045 = vmax.f32 %v5043, %v5044
      %v5046 = vrot.slane %v5045, 2
      %v5047 = vmax.f32 %v5045, %v5046
      %v5048 = vrot.slane %v5047, 1
      %v5049 = vmax.f32 %v5047, %v5048
      %v5050 = vsel %vm4851, %v4650, -inf
      %v5051 = vsel %vm4851, %v4674, -inf
      %v5052 = vmax.f32 %v5050, %v5051
      %v5053 = vrot.slane %v5052, 4
      %v5054 = vmax.f32 %v5052, %v5053
      %v5055 = vrot.slane %v5054, 2
      %v5056 = vmax.f32 %v5054, %v5055
      %v5057 = vrot.slane %v5056, 1
      %v5058 = vmax.f32 %v5056, %v5057
      %v5059 = vsel %vm4851, %v4658, -inf
      %v5060 = vsel %vm4851, %v4676, -inf
      %v5061 = vmax.f32 %v5059, %v5060
      %v5062 = vrot.slane %v5061, 4
      %v5063 = vmax.f32 %v5061, %v5062
      %v5064 = vrot.slane %v5063, 2
      %v5065 = vmax.f32 %v5063, %v5064
      %v5066 = vrot.slane %v5065, 1
      %v5067 = vmax.f32 %v5065, %v5066
      %v5068 = vsel %vm4851, %v4684, -inf
      %v5069 = vsel %vm4851, %v4708, -inf
      %v5070 = vmax.f32 %v5068, %v5069
      %v5071 = vrot.slane %v5070, 4
      %v5072 = vmax.f32 %v5070, %v5071
      %v5073 = vrot.slane %v5072, 2
      %v5074 = vmax.f32 %v5072, %v5073
      %v5075 = vrot.slane %v5074, 1
      %v5076 = vmax.f32 %v5074, %v5075
      %v5077 = vsel %vm4851, %v4692, -inf
      %v5078 = vsel %vm4851, %v4710, -inf
      %v5079 = vmax.f32 %v5077, %v5078
      %v5080 = vrot.slane %v5079, 4
      %v5081 = vmax.f32 %v5079, %v5080
      %v5082 = vrot.slane %v5081, 2
      %v5083 = vmax.f32 %v5081, %v5082
      %v5084 = vrot.slane %v5083, 1
      %v5085 = vmax.f32 %v5083, %v5084
      %v5086 = vsel %vm4851, %v4691, -inf
      %v5087 = vsel %vm4851, %v4718, -inf
      %v5088 = vmax.f32 %v5086, %v5087
      %v5089 = vrot.slane %v5088, 4
      %v5090 = vmax.f32 %v5088, %v5089
      %v5091 = vrot.slane %v5090, 2
      %v5092 = vmax.f32 %v5090, %v5091
      %v5093 = vrot.slane %v5092, 1
      %v5094 = vmax.f32 %v5092, %v5093
      %v5095 = vsel %vm4851, %v4693, -inf
      %v5096 = vsel %vm4851, %v4726, -inf
      %v5097 = vmax.f32 %v5095, %v5096
      %v5098 = vrot.slane %v5097, 4
      %v5099 = vmax.f32 %v5097, %v5098
      %v5100 = vrot.slane %v5099, 2
      %v5101 = vmax.f32 %v5099, %v5100
      %v5102 = vrot.slane %v5101, 1
      %v5103 = vmax.f32 %v5101, %v5102
      %v5104 = vsel %vm4851, %v4701, -inf
      %v5105 = vsel %vm4851, %v4725, -inf
      %v5106 = vmax.f32 %v5104, %v5105
      %v5107 = vrot.slane %v5106, 4
      %v5108 = vmax.f32 %v5106, %v5107
      %v5109 = vrot.slane %v5108, 2
      %v5110 = vmax.f32 %v5108, %v5109
      %v5111 = vrot.slane %v5110, 1
      %v5112 = vmax.f32 %v5110, %v5111
      %v5113 = vsel %vm4851, %v4709, -inf
      %v5114 = vsel %vm4851, %v4727, -inf
      %v5115 = vmax.f32 %v5113, %v5114
      %v5116 = vrot.slane %v5115, 4
      %v5117 = vmax.f32 %v5115, %v5116
      %v5118 = vrot.slane %v5117, 2
      %v5119 = vmax.f32 %v5117, %v5118
      %v5120 = vrot.slane %v5119, 1
      %v5121 = vmax.f32 %v5119, %v5120
      %v5122 = vsel %vm4851, %v4735, -inf
      %v5123 = vsel %vm4851, %v4759, -inf
      %v5124 = vmax.f32 %v5122, %v5123
      %v5125 = vrot.slane %v5124, 4
      %v5126 = vmax.f32 %v5124, %v5125
      %v5127 = vrot.slane %v5126, 2
      %v5128 = vmax.f32 %v5126, %v5127
      %v5129 = vrot.slane %v5128, 1
      %v5130 = vmax.f32 %v5128, %v5129
      %v5131 = vsel %vm4851, %v4743, -inf
      %v5132 = vsel %vm4851, %v4761, -inf
      %v5133 = vmax.f32 %v5131, %v5132
      %v5134 = vrot.slane %v5133, 4
      %v5135 = vmax.f32 %v5133, %v5134
      %v5136 = vrot.slane %v5135, 2
      %v5137 = vmax.f32 %v5135, %v5136
      %v5138 = vrot.slane %v5137, 1
      %v5139 = vmax.f32 %v5137, %v5138
      %v5140 = vsel %vm4851, %v4742, -inf
      %v5141 = vsel %vm4851, %v4769, -inf
      %v5142 = vmax.f32 %v5140, %v5141
      %v5143 = vrot.slane %v5142, 4
      %v5144 = vmax.f32 %v5142, %v5143
      %v5145 = vrot.slane %v5144, 2
      %v5146 = vmax.f32 %v5144, %v5145
      %v5147 = vrot.slane %v5146, 1
      %v5148 = vmax.f32 %v5146, %v5147
      %v5149 = vsel %vm4851, %v4744, -inf
      %v5150 = vsel %vm4851, %v4777, -inf
      %v5151 = vmax.f32 %v5149, %v5150
      %v5152 = vrot.slane %v5151, 4
      %v5153 = vmax.f32 %v5151, %v5152
      %v5154 = vrot.slane %v5153, 2
      %v5155 = vmax.f32 %v5153, %v5154
      %v5156 = vrot.slane %v5155, 1
      %v5157 = vmax.f32 %v5155, %v5156
      %v5158 = vsel %vm4851, %v4752, -inf
      %v5159 = vsel %vm4851, %v4776, -inf
      %v5160 = vmax.f32 %v5158, %v5159
      %v5161 = vrot.slane %v5160, 4
      %v5162 = vmax.f32 %v5160, %v5161
      %v5163 = vrot.slane %v5162, 2
      %v5164 = vmax.f32 %v5162, %v5163
      %v5165 = vrot.slane %v5164, 1
      %v5166 = vmax.f32 %v5164, %v5165
      %v5167 = vsel %vm4851, %v4760, -inf
      %v5168 = vsel %vm4851, %v4778, -inf
      %v5169 = vmax.f32 %v5167, %v5168
      %v5170 = vrot.slane %v5169, 4
      %v5171 = vmax.f32 %v5169, %v5170
      %v5172 = vrot.slane %v5171, 2
      %v5173 = vmax.f32 %v5171, %v5172
      %v5174 = vrot.slane %v5173, 1
      %v5175 = vmax.f32 %v5173, %v5174
      %vm5212 = vcmask 1041409
      %v5213 = vsel %vm5212, %v4869, %v4860
      %vm5214 = vcmask 1042434
      %v5215 = vsel %vm5214, %v4878, %v5213
      %vm5216 = vcmask 1043459
      %v5217 = vsel %vm5216, %v4887, %v5215
      %vm5218 = vcmask 1044484
      %v5219 = vsel %vm5218, %v4896, %v5217
      %vm5220 = vcmask 1045509
      %v5221 = vsel %vm5220, %v4905, %v5219
      %v5222 = vsel %vm5212, %v4923, %v4914
      %v5223 = vsel %vm5214, %v4932, %v5222
      %v5224 = vsel %vm5216, %v4941, %v5223
      %v5225 = vsel %vm5218, %v4950, %v5224
      %v5226 = vsel %vm5220, %v4959, %v5225
      %v5227 = vsel %vm5212, %v4977, %v4968
      %v5228 = vsel %vm5214, %v4986, %v5227
      %v5229 = vsel %vm5216, %v4995, %v5228
      %v5230 = vsel %vm5218, %v5004, %v5229
      %v5231 = vsel %vm5220, %v5013, %v5230
      %v5232 = vsel %vm5212, %v5031, %v5022
      %v5233 = vsel %vm5214, %v5040, %v5232
      %v5234 = vsel %vm5216, %v5049, %v5233
      %v5235 = vsel %vm5218, %v5058, %v5234
      %v5236 = vsel %vm5220, %v5067, %v5235
      %v5237 = vsel %vm5212, %v5085, %v5076
      %v5238 = vsel %vm5214, %v5094, %v5237
      %v5239 = vsel %vm5216, %v5103, %v5238
      %v5240 = vsel %vm5218, %v5112, %v5239
      %v5241 = vsel %vm5220, %v5121, %v5240
      %v5242 = vsel %vm5212, %v5139, %v5130
      %v5243 = vsel %vm5214, %v5148, %v5242
      %v5244 = vsel %vm5216, %v5157, %v5243
      %v5245 = vsel %vm5218, %v5166, %v5244
      %v5246 = vsel %vm5220, %v5175, %v5245
      %v5253 = vcombine.low %v5221, %v5231
      %v5254 = vcombine.high %v5221, %v5231
      %v5256 = vunpack.c.l.s4 1983009808
      %v5257 = vunpack.c.0.s8 %v5256
      %v5258 = vlaneseq
      %v5259 = vshrl.u32 %v5258, 7
      %v5260 = vsub.s32 %v5257, %v5259
      %v5261 = vrot.slane %v5253, %v5260
      %v5263 = vunpack.c.l.s4 1983009808
      %v5264 = vunpack.c.0.s8 %v5263
      %v5265 = vlaneseq
      %v5266 = vshrl.u32 %v5265, 7
      %v5267 = vsub.s32 %v5264, %v5266
      %v5268 = vrot.slane %v5254, %v5267
      %v5269 = vcombine.low %v5226, %v5236
      %v5270 = vcombine.high %v5226, %v5236
      %v5272 = vunpack.c.l.s4 1983009808
      %v5273 = vunpack.c.0.s8 %v5272
      %v5274 = vlaneseq
      %v5275 = vshrl.u32 %v5274, 7
      %v5276 = vsub.s32 %v5273, %v5275
      %v5277 = vrot.slane %v5269, %v5276
      %v5279 = vunpack.c.l.s4 1983009808
      %v5280 = vunpack.c.0.s8 %v5279
      %v5281 = vlaneseq
      %v5282 = vshrl.u32 %v5281, 7
      %v5283 = vsub.s32 %v5280, %v5282
      %v5284 = vrot.slane %v5270, %v5283
      %v5286 = vunpack.c.l.s4 1983009808
      %v5287 = vunpack.c.0.s8 %v5286
      %v5288 = vlaneseq
      %v5289 = vshrl.u32 %v5288, 7
      %v5290 = vsub.s32 %v5287, %v5289
      %v5291 = vrot.slane %v5241, %v5290
      %v5292 = vcombine.high %v5241, 0.0
      %v5294 = vunpack.c.l.s4 1983009808
      %v5295 = vunpack.c.0.s8 %v5294
      %v5296 = vlaneseq
      %v5297 = vshrl.u32 %v5296, 7
      %v5298 = vsub.s32 %v5295, %v5297
      %v5299 = vrot.slane %v5246, %v5298
      %v5300 = vcombine.high %v5246, 0.0
      %v5301 = vcombine.low %v5261, %v5277
      %v5302 = vcombine.high %v5261, %v5277
      %v5304 = vunpack.c.l.s4 1934713408
      %v5305 = vunpack.c.0.s8 %v5304
      %v5306 = vlaneseq
      %v5307 = vshrl.u32 %v5306, 7
      %v5308 = vsub.s32 %v5305, %v5307
      %v5309 = vrot.slane %v5301, %v5308
      %v5311 = vunpack.c.l.s4 1934713408
      %v5312 = vunpack.c.0.s8 %v5311
      %v5313 = vlaneseq
      %v5314 = vshrl.u32 %v5313, 7
      %v5315 = vsub.s32 %v5312, %v5314
      %v5316 = vrot.slane %v5302, %v5315
      %v5317 = vcombine.low %v5268, %v5284
      %v5319 = vunpack.c.l.s4 1934713408
      %v5320 = vunpack.c.0.s8 %v5319
      %v5321 = vlaneseq
      %v5322 = vshrl.u32 %v5321, 7
      %v5323 = vsub.s32 %v5320, %v5322
      %v5324 = vrot.slane %v5317, %v5323
      %v5325 = vcombine.low %v5291, %v5299
      %v5326 = vcombine.high %v5291, %v5299
      %v5328 = vunpack.c.l.s4 1934713408
      %v5329 = vunpack.c.0.s8 %v5328
      %v5330 = vlaneseq
      %v5331 = vshrl.u32 %v5330, 7
      %v5332 = vsub.s32 %v5329, %v5331
      %v5333 = vrot.slane %v5325, %v5332
      %v5335 = vunpack.c.l.s4 1934713408
      %v5336 = vunpack.c.0.s8 %v5335
      %v5337 = vlaneseq
      %v5338 = vshrl.u32 %v5337, 7
      %v5339 = vsub.s32 %v5336, %v5338
      %v5340 = vrot.slane %v5326, %v5339
      %v5341 = vcombine.low %v5292, %v5300
      %v5343 = vunpack.c.l.s4 1934713408
      %v5344 = vunpack.c.0.s8 %v5343
      %v5345 = vlaneseq
      %v5346 = vshrl.u32 %v5345, 7
      %v5347 = vsub.s32 %v5344, %v5346
      %v5348 = vrot.slane %v5341, %v5347
      %v5349 = vcombine.low %v5309, %v5333
      %v5350 = vcombine.high %v5309, %v5333
      %v5351 = vcombine.low %v5316, %v5340
      %v5352 = vcombine.high %v5316, %v5340
      %v5353 = vcombine.low %v5324, %v5348
      %v5354 = vcombine.high %v5324, %v5348
      %5356 = vrot.lane.b32.xlu0 %v5350, 8
      %v5357 = vpop.permute.xlu0 %5356
      %5360 = vrot.lane.b32.xlu0 %v5351, 16
      %v5361 = vpop.permute.xlu0 %5360
      %5364 = vrot.lane.b32.xlu0 %v5352, 24
      %v5365 = vpop.permute.xlu0 %5364
      %5368 = vrot.lane.b32.xlu0 %v5353, 32
      %v5369 = vpop.permute.xlu0 %5368
      %5372 = vrot.lane.b32.xlu0 %v5354, 40
      %v5373 = vpop.permute.xlu0 %5372
      %v5375 = vsel %vm723, %v5349, %v5357
      %v5376 = vsel %vm781, %v5375, %v5361
      %v5377 = vsel %vm839, %v5376, %v5365
      %v5378 = vsel %vm897, %v5377, %v5369
      %v5379 = vsel %vm3810, %v5378, %v5373
      %vm5380 = vcmask 390144
      %5381 = vst.msk [vmem:[%s222] sm:$0x3f] %vm5380, %v5379
      %p5382 = scmp.lt.s32.totalorder %s16, 1
      %s5383 = scalar_select %p5382, %s16, 1
      %s5384 = smul.addr %s5383, 8
      %s5385 = scalar_lea.vmem %s5, %s5384
      // Predicated region
      $region41: #{contracting_block.1} parent=39 // pred_check
        %p5386 = pneg %p144
      $region42: #{contracting_block.1} parent=39 // pred_check_branch
        %5388 = sbr.rel (%p5386) target = $region44
      $region43: #{contracting_block.1} parent=39 // pred_region
        _
      $region44: #{contracting_block.1} parent=39 // pred_fallthru
        _
    $region40: #{contracting_block.1} parent=5 // pred_fallthru
      _
    %p5389 = scmp.le.s32.totalorder 2, %s11
    // Predicated region
    $region45: #{contracting_block.1} parent=5 // pred_check
      %p5390 = pneg %p5389
    $region46: #{contracting_block.1} parent=5 // pred_check_branch
      %5392 = sbr.rel (%p5390) target = $region48
    $region47: #{contracting_block.1} parent=5 // pred_region
      %s5393 = ssub.s32 %s11, 2
      // Predicated region
      $region49: #{contracting_block.1} parent=47 // pred_check
        %p5394 = pneg %p150
      $region50: #{contracting_block.1} parent=47 // pred_check_branch
        %5396 = sbr.rel (%p5394) target = $region52
      $region51: #{contracting_block.1} parent=47 // pred_region
        %p5397 = scmp.lt.s32.totalorder %s17, 1
        %s5398 = scalar_select %p5397, %s17, 1
        %s5399 = smul.addr %s5398, 8
        %s5400 = scalar_lea.vmem %s5, %s5399
      $region52: #{contracting_block.1} parent=47 // pred_fallthru
        _
    $region48: #{contracting_block.1} parent=5 // pred_fallthru
      _
  $region6: #{contracting_block.1} parent=0 // loop_footer
    %s15 = sadd.s32 1, %s11
  $region7: #{contracting_block.1} parent=0 // loop_footer_branch
    %10 = sbr.rel target = $region3
  $region8: #{contracting_block.1} parent=0 // loop_exit
    _

</llo_original>
